<compile_context>
chip_gen: v5e
topology: v5e:2x2
jax: 0.10.0
libtpu: 0.0.40
codegen_flags: <defaults>
</compile_context>

<pallas_src>
import functools

import numpy as np
import jax
import jax.numpy as jnp
from jax import lax
from jax.experimental import pallas as pl
from jax.experimental.pallas import tpu as pltpu

F32 = jnp.float32
BF16 = jnp.bfloat16


# ----------------------------- small helpers ---------------------------------

def _i32(v):
    return jnp.asarray(v, jnp.int32)


def _vmem_limit(need_bytes):
    """Scoped-VMEM limit sized to the working set with headroom (capped for v7x's 64 MiB)."""
    return int(min(max(2 * int(need_bytes) + (1 << 20), 32 << 20), 64 << 20))


def _pad_axis_to(x, axis, multiple):
    size = x.shape[axis]
    pad = (-size) % multiple
    if pad == 0:
        return x
    widths = [(0, 0)] * x.ndim
    widths[axis] = (0, pad)
    return jnp.pad(x, widths)


def _depth_tile(depth, row_elems, target_bytes=2 << 20):
    """Depth-tile rows (multiple of 8) sized to ~target_bytes of f32; depth gets padded to it."""
    rows = max((target_bytes // 4) // max(row_elems, 1), 8)
    rows = min(rows, max(depth, 8))
    return max((rows // 8) * 8, 8)


@functools.lru_cache(maxsize=None)
def _base_yx_np(h, w):
    """Exact per-lane (y, x) base coordinates for a flattened (h, w) plane."""
    y = np.repeat(np.arange(h, dtype=np.float32), w)
    x = np.tile(np.arange(w, dtype=np.float32), h)
    return np.stack([y, x])                                      # (2, h*w)


def _base_yx(h, w):
    return jnp.asarray(_base_yx_np(h, w))


@functools.lru_cache(maxsize=None)
def _axis_resize_mat(n_in, n_out, mode):
    """1D resize matrix matching F.interpolate (trilinear align_corners=False / nearest-exact)."""
    if mode == "trilinear":
        if n_in == n_out:
            return np.eye(n_out, dtype=np.float32)
        i = np.arange(n_out, dtype=np.float64)
        scale = n_in / n_out
        src = np.maximum((i + 0.5) * scale - 0.5, 0.0)
        i0 = np.minimum(np.floor(src).astype(np.int64), n_in - 1)
        lam = src - i0
        i1 = np.minimum(i0 + 1, n_in - 1)
        w = np.zeros((n_out, n_in), dtype=np.float32)
        np.add.at(w, (np.arange(n_out), i0), (1.0 - lam).astype(np.float32))
        np.add.at(w, (np.arange(n_out), i1), lam.astype(np.float32))
        return w
    i = np.arange(n_out, dtype=np.float64)
    idx = np.clip(np.floor((i + 0.5) * (n_in / n_out)).astype(np.int64), 0, n_in - 1)
    w = np.zeros((n_out, n_in), dtype=np.float32)
    w[np.arange(n_out), idx] = 1.0
    return w


@functools.lru_cache(maxsize=None)
def _kron_hw_mat(h, w, ho, wo, mode):
    """Combined H+W resize as one Kronecker matrix, transposed to (H*W, Ho*Wo)."""
    return np.kron(_axis_resize_mat(h, ho, mode), _axis_resize_mat(w, wo, mode)).T.copy()


# ----------------------------- Pallas kernels --------------------------------

def _matmul_xw_kernel(x_ref, w_ref, o_ref, acc_ref):
    """o = x @ w with K tiled over grid axis 1 (f32 accumulator, bf16 MXU inputs)."""
    @pl.when(pl.program_id(1) == 0)
    def _init():
        acc_ref[...] = jnp.zeros_like(acc_ref)

    acc_ref[...] += jnp.dot(x_ref[...], w_ref[...], preferred_element_type=jnp.float32)

    @pl.when(pl.program_id(1) == pl.num_programs(1) - 1)
    def _done():
        o_ref[...] = acc_ref[...].astype(o_ref.dtype)


def _d_resize_kernel(md_ref, x_ref, o_ref):
    """Per-slab depth resize: o = md @ x (md: (Do, D), x: (D, TN))."""
    o_ref[0] = jnp.dot(md_ref[...], x_ref[0],
                       preferred_element_type=jnp.float32).astype(o_ref.dtype)


def _shift_ssd_kernel(small_ref, big_ref, o_ref, *, zs):
    """SSD between the small volume and the z-window of the big volume at shift = program_id(0).
    big is resident once in VMEM; the window is sliced in-kernel (no HBM window duplication)."""
    i = pl.program_id(0)
    win = big_ref[pl.ds(i, zs)]                       # (zs, 1, N) dynamic leading-dim slice
    d = small_ref[...] - win
    o_ref[...] = jnp.zeros_like(o_ref) + jnp.sum(d * d)


def _reg_kernel(x0_ref, x1_ref, base_ref, w_ref, b_ref, phi_ref, ssq_ref, *, td):
    """Synthetic reg_net: per-voxel 2->3 tanh-bounded displacement head (VPU broadcast-FMAs,
    weights from SMEM), voxel base grid from iota + precomputed exact (y, x) rows, per-channel
    direct stores, and a per-depth-tile partial SSD block (no cross-tile accumulator)."""
    dt = pl.program_id(1)
    x0 = x0_ref[0]                                    # (TD, H*W) lane-dense slab
    x1 = x1_ref[0]

    diff = x0 - x1
    ssq_ref[...] = jnp.zeros_like(ssq_ref) + jnp.sum(diff * diff)

    z = (lax.broadcasted_iota(jnp.int32, x0.shape, 0) + dt * td).astype(F32)
    bases = (z, base_ref[0:1, :], base_ref[1:2, :])   # exact z / y / x voxel coordinates
    for c in range(3):
        lin = w_ref[0, c] * x0 + w_ref[1, c] * x1 + b_ref[c]
        phi_ref[0, c] = bases[c] + jnp.tanh(lin) * 2.0   # displacement bounded to +-2 voxels


def _fg_stats_kernel(m_ref, base_ref, o_ref, *, td):
    """Per-depth-tile foreground stats (sum z/y/x, count) on a lane-dense (TD, H*W) slab; lanes
    0..3 of the (8,128) output block hold [sum_z, sum_y, sum_x, count] (partials reduced outside)."""
    dt = pl.program_id(1)
    m = (m_ref[0] != 0.0).astype(F32)                 # (TD, H*W)
    z = (lax.broadcasted_iota(jnp.int32, m.shape, 0) + dt * td).astype(F32)
    sz = jnp.sum(m * z)
    sy = jnp.sum(m * base_ref[0:1, :])
    sx = jnp.sum(m * base_ref[1:2, :])
    cnt = jnp.sum(m)
    lane = lax.broadcasted_iota(jnp.int32, o_ref.shape, 3)
    o_ref[...] = (jnp.where(lane == 0, sz, 0.0) + jnp.where(lane == 1, sy, 0.0)
                  + jnp.where(lane == 2, sx, 0.0) + jnp.where(lane == 3, cnt, 0.0))


def _unet_kernel(a_ref, b_ref, w1_ref, b1_ref, w2_ref, b2_ref, o_ref, *, hidden):
    """Synthetic unet: per-voxel MLP 2->hidden->2 as unrolled VPU broadcast-FMAs over a
    sublane+lane-dense (S/128, 128) slab; weights from SMEM; per-channel dense stores."""
    a = a_ref[0]                                      # (R, 128)
    b = b_ref[0]
    o0 = jnp.zeros_like(a) + b2_ref[0]
    o1 = jnp.zeros_like(a) + b2_ref[1]
    for j in range(hidden):
        h = jnp.maximum(w1_ref[0, j] * a + w1_ref[1, j] * b + b1_ref[j], 0.0)
        o0 = o0 + w2_ref[j, 0] * h
        o1 = o1 + w2_ref[j, 1] * h
    o_ref[0, 0] = o0
    o_ref[0, 1] = o1


# --------------------------- resize (separable matmuls) -----------------------

def _hw_pass(x2, w_t, out_dtype):
    """(M, K) @ (K, Nout) with batch*depth folded into M, M/K tiled, f32 accumulation.
    x2 and w_t are bf16 (pre-cast in the wrapper)."""
    M, K = int(x2.shape[0]), int(x2.shape[1])
    n_out = int(w_t.shape[1])
    if M <= 512:
        tm = M
    else:
        tm = 256
        x2 = _pad_axis_to(x2, 0, tm)
    if K <= 2048:
        tk = K
        w_p = w_t
    else:                                             # K-tiled: bounds the Kronecker weight block
        tk = 1024
        x2 = _pad_axis_to(x2, 1, tk)
        w_p = _pad_axis_to(w_t, 0, tk)
    Mp, Kp = int(x2.shape[0]), int(x2.shape[1])
    # TODO(synk): very large in-plane outputs (Ho*Wo) would also need an N-tile grid axis.
    osz = jnp.dtype(out_dtype).itemsize
    need = 2 * (tm * tk * 2 + tk * n_out * 2 + tm * n_out * osz) + tm * n_out * 4
    out = pl.pallas_call(
        _matmul_xw_kernel,
        grid=(Mp // tm, Kp // tk),
        in_specs=[pl.BlockSpec((tm, tk), lambda i, k: (i, k)),
                  pl.BlockSpec((tk, n_out), lambda i, k: (k, 0))],
        out_specs=pl.BlockSpec((tm, n_out), lambda i, k: (i, 0)),
        out_shape=jax.ShapeDtypeStruct((Mp, n_out), out_dtype),
        scratch_shapes=[pltpu.VMEM((tm, n_out), jnp.float32)],
        compiler_params=pltpu.CompilerParams(
            dimension_semantics=("parallel", "arbitrary"),
            vmem_limit_bytes=_vmem_limit(need)),
    )(x2, w_p)
    return out[:M] if Mp != M else out


def _d_pass(x3, md, out_dtype):
    """Per-slab depth resize: (BC, Din, N) -> (BC, Dout, N), N tiled; bf16 MXU inputs."""
    BC, Din, N = (int(s) for s in x3.shape)
    Dout = int(md.shape[0])
    if N <= 8192:
        tn = N
    else:
        tn = 8192
        x3 = _pad_axis_to(x3, 2, tn)
    Np = int(x3.shape[2])
    osz = jnp.dtype(out_dtype).itemsize
    need = 2 * (Din * tn * 2 + Dout * Din * 2 + Dout * tn * osz)
    out = pl.pallas_call(
        _d_resize_kernel,
        grid=(BC, Np // tn),
        in_specs=[pl.BlockSpec((Dout, Din), lambda b, n: (0, 0)),
                  pl.BlockSpec((1, Din, tn), lambda b, n: (b, 0, n))],
        out_specs=pl.BlockSpec((1, Dout, tn), lambda b, n: (b, 0, n)),
        out_shape=jax.ShapeDtypeStruct((BC, Dout, Np), out_dtype),
        compiler_params=pltpu.CompilerParams(
            dimension_semantics=("parallel", "parallel"),
            vmem_limit_bytes=_vmem_limit(need)),
    )(md, x3)
    return out[:, :, :N] if Np != N else out


def resize3d(x, out_size, mode):
    """Separable 3D resize (trilinear / nearest-exact): depth pass + combined H*W (Kronecker)
    pass, applied most-shrinking-first; everything staged in bf16 with f32 accumulation.
    x: (B,C,D,H,W) -> (B,C,Do,Ho,Wo) f32."""
    B, C, D, H, W = (int(s) for s in x.shape)
    Do, Ho, Wo = (int(s) for s in out_size)
    if (D, H, W) == (Do, Ho, Wo):
        return x.astype(F32)
    BC, HW, HoWo = B * C, H * W, Ho * Wo
    xb = x.astype(BF16).reshape(BC, D, HW)            # contiguous, no relayout
    md = jnp.asarray(_axis_resize_mat(D, Do, mode), BF16)
    if (H, W) == (Ho, Wo):
        out = _d_pass(xb, md, F32)
        return out.reshape(B, C, Do, Ho, Wo)
    mhw_t = jnp.asarray(_kron_hw_mat(H, W, Ho, Wo, mode), BF16)
    if D == Do:
        out = _hw_pass(xb.reshape(BC * D, HW), mhw_t, F32)
        return out.reshape(B, C, Do, Ho, Wo)
    cost_d_first = Do * D * HW + Do * HW * HoWo
    cost_hw_first = D * HW * HoWo + Do * D * HoWo
    if cost_d_first <= cost_hw_first:
        y = _d_pass(xb, md, BF16)                     # (BC, Do, HW) stays bf16 between passes
        out = _hw_pass(y.reshape(BC * Do, HW), mhw_t, F32)
    else:
        y = _hw_pass(xb.reshape(BC * D, HW), mhw_t, BF16)
        out = _d_pass(y.reshape(BC, D, HoWo), md, F32)
    return out.reshape(B, C, Do, Ho, Wo)


# --------------------------- other kernel wrappers -----------------------------

def _best_z_shift(small, big):
    """argmin_i MSE(small, big[:, :, i:i+Zs]): one pallas_call, big DMA'd once, window sliced
    in-kernel per shift; argmin stays on device (no host sync)."""
    B, C, Zs, H, W = (int(s) for s in small.shape)
    Zb = int(big.shape[2])
    ns = Zb - Zs                      # reference iterates range(Zb - Zs): last window excluded
    N = B * C * H * W
    small3 = jnp.moveaxis(small, 2, 0).reshape(Zs, 1, N)
    big3 = jnp.moveaxis(big, 2, 0).reshape(Zb, 1, N)
    ssd = pl.pallas_call(
        functools.partial(_shift_ssd_kernel, zs=Zs),
        grid=(ns,),
        in_specs=[pl.BlockSpec((Zs, 1, N), lambda i: (0, 0, 0)),
                  pl.BlockSpec((Zb, 1, N), lambda i: (0, 0, 0))],
        out_specs=pl.BlockSpec((1, 8, 128), lambda i: (i, 0, 0)),
        out_shape=jax.ShapeDtypeStruct((ns, 8, 128), F32),
        compiler_params=pltpu.CompilerParams(dimension_semantics=("parallel",)),
    )(small3, big3)
    # first minimum == reference '<' tie-breaking
    return jnp.argmin(ssd[:, 0, 0]).astype(jnp.int32)


def nearest_warp_zero_boundary(img, phi):
    """compute_warped_image_multiNC(..., spline_order=0, zero_boundary=True) analogue.
    img: (B,C,D,H,W); phi: (B,3,D,H,W) source voxel coordinates (spacing == 1)."""
    # TODO(synk): data-dependent 3D gather has no clean Pallas TPU equivalent; vmapped XLA gather.
    B, C, D, H, W = img.shape

    def one(im, ph):
        idx = jnp.round(ph).astype(jnp.int32)
        iz, iy, ix = idx[0], idx[1], idx[2]
        inb = (iz >= 0) & (iz < D) & (iy >= 0) & (iy < H) & (ix >= 0) & (ix < W)
        g = im[:, jnp.clip(iz, 0, D - 1), jnp.clip(iy, 0, H - 1), jnp.clip(ix, 0, W - 1)]
        return jnp.where(inb[None], g, 0.0)

    return jax.vmap(one)(img, phi)


# -------------------------------- TrackNet ------------------------------------

class TrackNetPallas:
    """TrackNet forward with the injected reg_net / unet replaced by deterministic synthetic
    stand-ins: reg_net = per-voxel linear 2->3 displacement head (tanh, +-2 voxels) + MSE
    registration loss; unet = per-voxel MLP 2->hidden->2 on the concatenated image/prompt patch."""

    def __init__(self, reg_net_patch_size, unet_patch_size, unet_hidden=32, seed=0):
        assert len(reg_net_patch_size) == 3, "Input shape must be 3D"
        self.input_shape = tuple(int(s) for s in reg_net_patch_size)
        self.unet_patch_size = np.asarray(unet_patch_size, dtype=np.int64)
        self.unet_hidden = int(unet_hidden)
        key = jax.random.PRNGKey(seed)
        k1, k2, k3 = jax.random.split(key, 3)
        self.w_reg = (0.1 * jax.random.normal(k1, (2, 3))).astype(F32)
        self.b_reg = jnp.zeros((3,), F32)
        self.w1 = (jax.random.normal(k2, (2, unet_hidden)) / np.sqrt(2.0)).astype(F32)
        self.b1 = jnp.zeros((unet_hidden,), F32)
        self.w2 = (jax.random.normal(k3, (unet_hidden, 2)) / np.sqrt(unet_hidden)).astype(F32)
        self.b2 = jnp.zeros((2,), F32)

    # -------- synthetic reg_net (fused displacement + per-tile MSE partials) --------
    def reg_net_forward(self, x0_res, x1_res):
        B, C, D, H, W = (int(s) for s in x0_res.shape)
        assert C == 1
        HW = H * W
        td = _depth_tile(D, HW, target_bytes=1 << 20)
        x0_3 = _pad_axis_to(x0_res.reshape(B, D, HW), 1, td)
        x1_3 = _pad_axis_to(x1_res.reshape(B, D, HW), 1, td)
        Dp = int(x0_3.shape[1])
        n_dt = Dp // td
        base_yx = _base_yx(H, W)
        smem = pl.BlockSpec(memory_space=pltpu.MemorySpace.SMEM)
        need = 2 * (2 * td * HW * 4 + 3 * td * HW * 4) + 2 * HW * 4
        phi_flat, ssq = pl.pallas_call(
            functools.partial(_reg_kernel, td=td),
            grid=(B, n_dt),
            in_specs=[
                pl.BlockSpec((1, td, HW), lambda bi, dt: (bi, dt, 0)),
                pl.BlockSpec((1, td, HW), lambda bi, dt: (bi, dt, 0)),
                pl.BlockSpec((2, HW), lambda bi, dt: (0, 0)),
                smem, smem,
            ],
            out_specs=[
                pl.BlockSpec((1, 3, td, HW), lambda bi, dt: (bi, 0, dt, 0)),
                pl.BlockSpec((1, 1, 8, 128), lambda bi, dt: (bi, dt, 0, 0)),
            ],
            out_shape=[
                jax.ShapeDtypeStruct((B, 3, Dp, HW), F32),
                jax.ShapeDtypeStruct((B, n_dt, 8, 128), F32),
            ],
            compiler_params=pltpu.CompilerParams(
                dimension_semantics=("parallel", "parallel"),
                vmem_limit_bytes=_vmem_limit(need)),
        )(x0_3, x1_3, base_yx, self.w_reg, self.b_reg)
        phi = phi_flat[:, :, :D].reshape(B, 3, D, H, W)
        reg_loss = jnp.sum(ssq[:, :, 0, 0]) / float(B * D * HW)
        return reg_loss, phi

    # -------- synthetic unet (sublane+lane dense layout, per-channel stores) --------
    def unet_forward(self, bb_input):
        B, C, pd, ph, pw = (int(s) for s in bb_input.shape)
        assert C == 2, "synthetic unet expects 2 input channels"
        S = pd * ph * pw
        Sp = pl.cdiv(S, 128) * 128
        R = Sp // 128
        flat = _pad_axis_to(bb_input.reshape(B, 2, S), 2, 128)
        a = flat[:, 0].reshape(B, R, 128)
        b = flat[:, 1].reshape(B, R, 128)
        smem = pl.BlockSpec(memory_space=pltpu.MemorySpace.SMEM)
        out = pl.pallas_call(
            functools.partial(_unet_kernel, hidden=self.unet_hidden),
            grid=(B,),
            in_specs=[
                pl.BlockSpec((1, R, 128), lambda i: (i, 0, 0)),
                pl.BlockSpec((1, R, 128), lambda i: (i, 0, 0)),
                smem, smem, smem, smem,
            ],
            out_specs=pl.BlockSpec((1, 2, R, 128), lambda i: (i, 0, 0, 0)),
            out_shape=jax.ShapeDtypeStruct((B, 2, R, 128), F32),
            compiler_params=pltpu.CompilerParams(dimension_semantics=("parallel",)),
        )(a, b, self.w1, self.b1, self.w2, self.b2)
        return out.reshape(B, 2, Sp)[:, :, :S].reshape(B, 2, pd, ph, pw)

    # -------- TrackNet helpers --------
    def optional_z_translation(self, x0, x1, difference_threshold=20):
        x0_z, x1_z = int(x0.shape[2]), int(x1.shape[2])
        x0_win, x1_win = (0, x0_z), (0, x1_z)
        if abs(x0_z - x1_z) > difference_threshold:
            x0_res = resize3d(x0, (x0_z,) + self.input_shape[1:], "trilinear")
            x1_res = resize3d(x1, (x1_z,) + self.input_shape[1:], "trilinear")
            if x0_z < x1_z:
                shift = _best_z_shift(x0_res, x1_res)
                x1_win = (shift, x0_z)
            else:
                shift = _best_z_shift(x1_res, x0_res)
                x0_win = (shift, x1_z)
            x0 = lax.dynamic_slice_in_dim(x0, _i32(x0_win[0]), x0_win[1], axis=2)
            x1 = lax.dynamic_slice_in_dim(x1, _i32(x1_win[0]), x1_win[1], axis=2)
        return x0, x1, x0_win, x1_win

    def get_patch_around_mask(self, prompt, is_inference=False):
        """Foreground centroid -> clamped patch start, fully on device (one pallas_call for the
        stats, partials reduced in XLA)."""
        assert prompt.ndim == 5, "Mask must be 5D"
        B, _, D, H, W = (int(s) for s in prompt.shape)
        HW = H * W
        m = _pad_axis_to(prompt[:, 0].reshape(B, D, HW), 1, _depth_tile(D, HW))
        td = _depth_tile(D, HW)
        n_dt = int(m.shape[1]) // td
        base_yx = _base_yx(H, W)
        need = 2 * (td * HW * 4) + 2 * HW * 4
        stats = pl.pallas_call(
            functools.partial(_fg_stats_kernel, td=td),
            grid=(B, n_dt),
            in_specs=[pl.BlockSpec((1, td, HW), lambda bi, dt: (bi, dt, 0)),
                      pl.BlockSpec((2, HW), lambda bi, dt: (0, 0))],
            out_specs=pl.BlockSpec((1, 1, 8, 128), lambda bi, dt: (bi, dt, 0, 0)),
            out_shape=jax.ShapeDtypeStruct((B, n_dt, 8, 128), F32),
            compiler_params=pltpu.CompilerParams(
                dimension_semantics=("parallel", "parallel"),
                vmem_limit_bytes=_vmem_limit(need)),
        )(m, base_yx)
        s = jnp.sum(stats[:, :, 0, :4], axis=1)                 # (B, 4)
        cnt = s[:, 3]
        centroid = s[:, :3] / jnp.maximum(cnt, 1.0)[:, None]
        # TODO(synk): reference picks a random voxel for empty masks and a random fg voxel in
        # training mode; this stand-in is deterministic (volume center / rounded centroid).
        center = jnp.asarray([D // 2, H // 2, W // 2], F32)
        fg = jnp.where((cnt > 0.0)[:, None], jnp.round(centroid), center[None, :]).astype(jnp.int32)
        ps = jnp.asarray(self.unet_patch_size, jnp.int32)
        hi = jnp.maximum(jnp.asarray([D, H, W], jnp.int32) - ps, 0)
        # Equivalent to the reference clamping for even patch sizes and dims >= patch size.
        return jnp.clip(fg - ps // 2, 0, hi[None, :])            # (B, 3) int32 patch starts

    def pad_input(self, bb_input):
        # TODO(synk): the reference F.pad tuple pads the batch/channel/depth axes (not D/H/W);
        # this quirk is reproduced faithfully. It never triggers when the extracted patch already
        # matches unet_patch_size (the usual case, incl. this script's test shapes).
        shape = np.array(bb_input.shape[2:], dtype=np.int64)
        ps = self.unet_patch_size
        if not np.array_equal(shape, ps):
            px_lo = int((ps[0] - shape[0]) // 2); px_hi = int(ps[0] - shape[0] - px_lo)
            py_lo = int((ps[1] - shape[1]) // 2); py_hi = int(ps[1] - shape[1] - py_lo)
            pz_lo = int((ps[2] - shape[2]) // 2); pz_hi = int(ps[2] - shape[2] - pz_lo)
            bb_input = jnp.pad(bb_input, ((pz_lo, pz_hi), (py_lo, py_hi),
                                          (px_lo, px_hi), (0, 0), (0, 0)))
            return bb_input, True, (px_lo, px_hi, py_lo, py_hi, pz_lo, pz_hi)
        return bb_input, False, None

    def undo_pad(self, output, pad, pad_values):
        if pad:
            px_lo, px_hi, py_lo, py_hi, pz_lo, pz_hi = pad_values
            B, C, Dd, Hh, Ww = output.shape
            output = output[pz_lo:B - pz_hi, py_lo:C - py_hi, px_lo:Dd - px_hi, :, :]
        return output

    # -------- forward (jit-compatible; no host syncs) --------
    def forward(self, x0, x1, prompt, is_inference=False):
        out_shape = tuple(int(s) for s in x1.shape[2:])
        x1_win = (0, int(x1.shape[2]))
        if is_inference:
            x0, x1, x0_win, x1_win = self.optional_z_translation(x0, x1)
            prompt = lax.dynamic_slice_in_dim(prompt, _i32(x0_win[0]), x0_win[1], axis=2)

        x0_resampled = resize3d(x0, self.input_shape, "trilinear")
        x1_resampled = resize3d(x1, self.input_shape, "trilinear")
        prompt_resampled = resize3d(prompt, self.input_shape, "nearest-exact")

        reg_loss, phi = self.reg_net_forward(x0_resampled, x1_resampled)
        warped_prompt = nearest_warp_zero_boundary(prompt_resampled, phi)
        warped_prompt = resize3d(warped_prompt, tuple(int(s) for s in x1.shape[2:]),
                                 "nearest-exact")

        starts = self.get_patch_around_mask(warped_prompt, is_inference)
        B = int(warped_prompt.shape[0])
        Cw = int(warped_prompt.shape[1])
        C1 = int(x1.shape[1])
        shape3 = tuple(int(s) for s in warped_prompt.shape[2:])
        psz = tuple(int(min(s, int(p))) for s, p in zip(shape3, self.unet_patch_size))

        x1_rep = jnp.tile(x1, (B, 1, 1, 1, 1))
        patches, x1_patches = [], []
        for b in range(B):
            st = (_i32(0), starts[b, 0], starts[b, 1], starts[b, 2])
            patches.append(lax.dynamic_slice(warped_prompt[b], st, (Cw,) + psz))
            x1_patches.append(lax.dynamic_slice(x1_rep[b], st, (C1,) + psz))
        patch = jnp.stack(patches)
        x1p = jnp.stack(x1_patches)
        bb_input = jnp.concatenate([x1p, patch], axis=1)
        bb_input, pad, pad_props = self.pad_input(bb_input)
        output = self.unet_forward(bb_input)
        output = self.undo_pad(output, pad, pad_props)

        if is_inference:
            assert B == 1, "Batch size must be 1 for inference"
            logits_out = jnp.concatenate(
                [jnp.ones((1, 1) + out_shape, F32),
                 jnp.zeros((1, 1) + out_shape, F32)], axis=1)
            z0 = _i32(starts[0, 0] + _i32(x1_win[0]))
            idx = (_i32(0), _i32(0), z0, _i32(starts[0, 1]), _i32(starts[0, 2]))
            logits_out = lax.dynamic_update_slice(logits_out, output, idx)
            return logits_out, reg_loss
        # TODO(synk): training branch of the reference uses an undefined `x1_mask`; not reproducible.
        raise NotImplementedError("Training branch is not reproducible from the reference code.")


# --------------------------------- main ---------------------------------------

if __name__ == "__main__":
    key = jax.random.PRNGKey(0)
    k0, k1, k2 = jax.random.split(key, 3)

    reg_net_patch_size = (16, 16, 16)
    unet_patch_size = (8, 8, 8)
    net = TrackNetPallas(reg_net_patch_size, unet_patch_size, unet_hidden=32, seed=0)
    fwd = jax.jit(net.forward, static_argnames=("is_inference",))

    # Case 1: matched z extents (no z-translation search).
    D, H, W = 24, 20, 20
    x0 = jax.random.normal(k0, (1, 1, D, H, W), F32)
    x1 = jax.random.normal(k1, (1, 1, D, H, W), F32)
    prompt = jnp.zeros((1, 1, D, H, W), F32).at[:, :, 10:14, 8:12, 8:12].set(1.0)

    logits, reg_loss = fwd(x0, x1, prompt, is_inference=True)
    jax.block_until_ready((logits, reg_loss))
    assert logits.shape == (1, 2, D, H, W) and logits.dtype == jnp.float32
    assert np.isfinite(float(reg_loss))

    # Case 2: mismatched z extents -> exercises the in-kernel windowed z-shift MSE search
    # and the depth-tiled / padded paths.
    D2 = 48
    x1b = jax.random.normal(k2, (1, 1, D2, H, W), F32)
    logits2, reg_loss2 = fwd(x0, x1b, prompt, is_inference=True)
    jax.block_until_ready((logits2, reg_loss2))
    assert logits2.shape == (1, 2, D2, H, W) and logits2.dtype == jnp.float32
    assert np.isfinite(float(reg_loss2))

    print("KERNEL_OK")
</pallas_src>

<mosaic_0001>
module attributes {stable_mosaic.version = 11 : i64} {
  func.func @_d_resize_kernel(%arg0: i32, %arg1: i32, %arg2: memref<16x24xbf16, #tpu.memory_space<vmem>>, %arg3: memref<1x24x400xbf16, #tpu.memory_space<vmem>>, %arg4: memref<1x16x400xbf16, #tpu.memory_space<vmem>>) attributes {dimension_semantics = [#tpu.dimension_semantics<parallel>, #tpu.dimension_semantics<parallel>], iteration_bounds = array<i64: 1, 1>, scalar_prefetch = 0 : i64, scratch_operands = 0 : i64, tpu.core_type = #tpu.core_type<tc>, window_params = [{pipeline_mode = #tpu.pipeline_mode<synchronous>, transform_indices = @transform_0, window_bounds = array<i64: 16, 24>}, {transform_indices = @transform_1, window_bounds = array<i64: 1, 24, 400>}, {transform_indices = @transform_2, window_bounds = array<i64: 1, 16, 400>}]} {
    %c0 = arith.constant 0 : index
    %c0_0 = arith.constant 0 : index
    %0 = vector.load %arg2[%c0, %c0_0] : memref<16x24xbf16, #tpu.memory_space<vmem>>, vector<16x24xbf16>
    %c0_1 = arith.constant 0 : index
    %c0_2 = arith.constant 0 : index
    %c0_3 = arith.constant 0 : index
    %1 = vector.load %arg3[%c0_1, %c0_2, %c0_3] : memref<1x24x400xbf16, #tpu.memory_space<vmem>>, vector<1x24x400xbf16>
    %2 = vector.shape_cast %1 : vector<1x24x400xbf16> to vector<24x400xbf16>
    %cst = arith.constant dense<0.000000e+00> : vector<16x400xf32>
    %3 = tpu.matmul %0, %2, %cst {dimension_numbers = #tpu.dot_dimension_numbers<[1], [0], [0], [1], [0, 0, 1, 1], [], []>} : vector<16x24xbf16>, vector<24x400xbf16>, vector<16x400xf32> -> vector<16x400xf32>
    %4 = arith.truncf %3 : vector<16x400xf32> to vector<16x400xbf16>
    %c0_4 = arith.constant 0 : index
    %c0_5 = arith.constant 0 : index
    %c0_6 = arith.constant 0 : index
    %5 = vector.load %arg4[%c0_4, %c0_5, %c0_6] : memref<1x16x400xbf16, #tpu.memory_space<vmem>>, vector<1x16x400xbf16>
    %6 = vector.shape_cast %5 : vector<1x16x400xbf16> to vector<16x400xbf16>
    %7 = vector.shape_cast %4 : vector<16x400xbf16> to vector<1x16x400xbf16>
    tpu.vector_store %arg4[%c0_4, %c0_5, %c0_6], %7 {strides = array<i32>} : memref<1x16x400xbf16, #tpu.memory_space<vmem>>, vector<1x16x400xbf16>,
    return
  }
  func.func @transform_0(%arg0: i32, %arg1: i32) -> (i32, i32) {
    %c0_i32 = arith.constant 0 : i32
    %c0_i32_0 = arith.constant 0 : i32
    %c0_i32_1 = arith.constant 0 : i32
    return %c0_i32, %c0_i32_0 : i32, i32
  }
  func.func @transform_1(%arg0: i32, %arg1: i32) -> (i32, i32, i32) {
    %c0_i32 = arith.constant 0 : i32
    %c0_i32_0 = arith.constant 0 : i32
    return %arg0, %c0_i32, %arg1 : i32, i32, i32
  }
  func.func @transform_2(%arg0: i32, %arg1: i32) -> (i32, i32, i32) {
    %c0_i32 = arith.constant 0 : i32
    %c0_i32_0 = arith.constant 0 : i32
    return %arg0, %c0_i32, %arg1 : i32, i32, i32
  }
}

module attributes {stable_mosaic.version = 11 : i64} {
  func.func @_matmul_xw_kernel(%arg0: i32, %arg1: i32, %arg2: memref<16x400xbf16, #tpu.memory_space<vmem>>, %arg3: memref<400x256xbf16, #tpu.memory_space<vmem>>, %arg4: memref<16x256xf32, #tpu.memory_space<vmem>>, %arg5: memref<16x256xf32, #tpu.memory_space<vmem>>) attributes {dimension_semantics = [#tpu.dimension_semantics<parallel>, #tpu.dimension_semantics<arbitrary>], iteration_bounds = array<i64: 1, 1>, scalar_prefetch = 0 : i64, scratch_operands = 1 : i64, tpu.core_type = #tpu.core_type<tc>, window_params = [{transform_indices = @transform_0, window_bounds = array<i64: 16, 400>}, {transform_indices = @transform_1, window_bounds = array<i64: 400, 256>}, {transform_indices = @transform_2, window_bounds = array<i64: 16, 256>}]} {
    %c0_i32 = arith.constant 0 : i32
    %0 = arith.cmpi eq, %arg1, %c0_i32 : i32
    %1 = arith.extui %0 : i1 to i32
    %c0_i32_0 = arith.constant 0 : i32
    %2 = arith.cmpi ne, %1, %c0_i32_0 : i32
    scf.if %2 {
      %cst_10 = arith.constant 0.000000e+00 : f32
      %12 = vector.broadcast %cst_10 : f32 to vector<16x256xf32>
      %c0_11 = arith.constant 0 : index
      %c0_12 = arith.constant 0 : index
      %13 = vector.load %arg5[%c0_11, %c0_12] : memref<16x256xf32, #tpu.memory_space<vmem>>, vector<16x256xf32>
      tpu.vector_store %arg5[%c0_11, %c0_12], %12 {strides = array<i32>} : memref<16x256xf32, #tpu.memory_space<vmem>>, vector<16x256xf32>,
    } else {
    }
    %c0 = arith.constant 0 : index
    %c0_1 = arith.constant 0 : index
    %3 = vector.load %arg5[%c0, %c0_1] : memref<16x256xf32, #tpu.memory_space<vmem>>, vector<16x256xf32>
    %c0_2 = arith.constant 0 : index
    %c0_3 = arith.constant 0 : index
    %4 = vector.load %arg2[%c0_2, %c0_3] : memref<16x400xbf16, #tpu.memory_space<vmem>>, vector<16x400xbf16>
    %c0_4 = arith.constant 0 : index
    %c0_5 = arith.constant 0 : index
    %5 = vector.load %arg3[%c0_4, %c0_5] : memref<400x256xbf16, #tpu.memory_space<vmem>>, vector<400x256xbf16>
    %cst = arith.constant dense<0.000000e+00> : vector<16x256xf32>
    %6 = tpu.matmul %4, %5, %cst {dimension_numbers = #tpu.dot_dimension_numbers<[1], [0], [0], [1], [0, 0, 1, 1], [], []>} : vector<16x400xbf16>, vector<400x256xbf16>, vector<16x256xf32> -> vector<16x256xf32>
    %7 = arith.addf %3, %6 : vector<16x256xf32>
    %c0_6 = arith.constant 0 : index
    %c0_7 = arith.constant 0 : index
    %8 = vector.load %arg5[%c0_6, %c0_7] : memref<16x256xf32, #tpu.memory_space<vmem>>, vector<16x256xf32>
    tpu.vector_store %arg5[%c0_6, %c0_7], %7 {strides = array<i32>} : memref<16x256xf32, #tpu.memory_space<vmem>>, vector<16x256xf32>,
    %c0_i32_8 = arith.constant 0 : i32
    %9 = arith.cmpi eq, %arg1, %c0_i32_8 : i32
    %10 = arith.extui %9 : i1 to i32
    %c0_i32_9 = arith.constant 0 : i32
    %11 = arith.cmpi ne, %10, %c0_i32_9 : i32
    scf.if %11 {
      %c0_10 = arith.constant 0 : index
      %c0_11 = arith.constant 0 : index
      %12 = vector.load %arg5[%c0_10, %c0_11] : memref<16x256xf32, #tpu.memory_space<vmem>>, vector<16x256xf32>
      %c0_12 = arith.constant 0 : index
      %c0_13 = arith.constant 0 : index
      %13 = vector.load %arg4[%c0_12, %c0_13] : memref<16x256xf32, #tpu.memory_space<vmem>>, vector<16x256xf32>
      tpu.vector_store %arg4[%c0_12, %c0_13], %12 {strides = array<i32>} : memref<16x256xf32, #tpu.memory_space<vmem>>, vector<16x256xf32>,
    } else {
    }
    return
  }
  func.func @transform_0(%arg0: i32, %arg1: i32) -> (i32, i32) {
    %c0_i32 = arith.constant 0 : i32
    return %arg0, %arg1 : i32, i32
  }
  func.func @transform_1(%arg0: i32, %arg1: i32) -> (i32, i32) {
    %c0_i32 = arith.constant 0 : i32
    %c0_i32_0 = arith.constant 0 : i32
    return %arg1, %c0_i32 : i32, i32
  }
  func.func @transform_2(%arg0: i32, %arg1: i32) -> (i32, i32) {
    %c0_i32 = arith.constant 0 : i32
    %c0_i32_0 = arith.constant 0 : i32
    return %arg0, %c0_i32 : i32, i32
  }
}

module attributes {stable_mosaic.version = 11 : i64} {
  func.func @_reg_kernel(%arg0: i32, %arg1: i32, %arg2: memref<1x16x256xf32, #tpu.memory_space<vmem>>, %arg3: memref<1x16x256xf32, #tpu.memory_space<vmem>>, %arg4: memref<2x256xf32, #tpu.memory_space<vmem>>, %arg5: memref<2x3xf32, #tpu.memory_space<smem>>, %arg6: memref<3xf32, #tpu.memory_space<smem>>, %arg7: memref<1x3x16x256xf32, #tpu.memory_space<vmem>>, %arg8: memref<1x1x8x128xf32, #tpu.memory_space<vmem>>) attributes {dimension_semantics = [#tpu.dimension_semantics<parallel>, #tpu.dimension_semantics<parallel>], iteration_bounds = array<i64: 1, 1>, scalar_prefetch = 0 : i64, scratch_operands = 0 : i64, tpu.core_type = #tpu.core_type<tc>, window_params = [{transform_indices = @transform_0, window_bounds = array<i64: 1, 16, 256>}, {transform_indices = @transform_1, window_bounds = array<i64: 1, 16, 256>}, {pipeline_mode = #tpu.pipeline_mode<synchronous>, transform_indices = @transform_2, window_bounds = array<i64: 2, 256>}, {transform_indices = @transform_3, window_bounds = array<i64: 2, 3>}, {transform_indices = @transform_4, window_bounds = array<i64: 3>}, {transform_indices = @transform_5, window_bounds = array<i64: 1, 3, 16, 256>}, {transform_indices = @transform_6, window_bounds = array<i64: 1, 1, 8, 128>}]} {
    %c0 = arith.constant 0 : index
    %c0_0 = arith.constant 0 : index
    %c0_1 = arith.constant 0 : index
    %0 = vector.load %arg2[%c0, %c0_0, %c0_1] : memref<1x16x256xf32, #tpu.memory_space<vmem>>, vector<1x16x256xf32>
    %1 = vector.shape_cast %0 : vector<1x16x256xf32> to vector<16x256xf32>
    %c0_2 = arith.constant 0 : index
    %c0_3 = arith.constant 0 : index
    %c0_4 = arith.constant 0 : index
    %2 = vector.load %arg3[%c0_2, %c0_3, %c0_4] : memref<1x16x256xf32, #tpu.memory_space<vmem>>, vector<1x16x256xf32>
    %3 = vector.shape_cast %2 : vector<1x16x256xf32> to vector<16x256xf32>
    %4 = arith.subf %1, %3 : vector<16x256xf32>
    %cst = arith.constant 0.000000e+00 : f32
    %5 = vector.broadcast %cst : f32 to vector<1x1x8x128xf32>
    %6 = arith.mulf %4, %4 : vector<16x256xf32>
    %7 = vector.shape_cast %6 : vector<16x256xf32> to vector<1x16x256xf32>
    %cst_5 = arith.constant dense<0.000000e+00> : vector<1xf32>
    %8 = vector.multi_reduction <add>, %7, %cst_5 [1, 2] : vector<1x16x256xf32> to vector<1xf32>
    %9 = vector.shape_cast %8 : vector<1xf32> to vector<1x1x1xf32>
    %10 = vector.extract %9[0, 0, 0] : f32 from vector<1x1x1xf32>
    %11 = vector.broadcast %10 : f32 to vector<1x1x8x128xf32>
    %12 = arith.addf %5, %11 : vector<1x1x8x128xf32>
    %c0_6 = arith.constant 0 : index
    %c0_7 = arith.constant 0 : index
    %c0_8 = arith.constant 0 : index
    %c0_9 = arith.constant 0 : index
    %13 = vector.load %arg8[%c0_6, %c0_7, %c0_8, %c0_9] : memref<1x1x8x128xf32, #tpu.memory_space<vmem>>, vector<1x1x8x128xf32>
    tpu.vector_store %arg8[%c0_6, %c0_7, %c0_8, %c0_9], %12 {strides = array<i32>} : memref<1x1x8x128xf32, #tpu.memory_space<vmem>>, vector<1x1x8x128xf32>,
    %14 = tpu.iota {dimensions = array<i32: 0>} : vector<16x256xi32>
    %c16_i32 = arith.constant 16 : i32
    %15 = arith.muli %arg1, %c16_i32 : i32
    %16 = vector.broadcast %15 : i32 to vector<16x256xi32>
    %17 = arith.addi %14, %16 : vector<16x256xi32>
    %18 = arith.sitofp %17 : vector<16x256xi32> to vector<16x256xf32>
    %c0_10 = arith.constant 0 : index
    %c0_11 = arith.constant 0 : index
    %19 = vector.load %arg4[%c0_10, %c0_11] : memref<2x256xf32, #tpu.memory_space<vmem>>, vector<1x256xf32>
    %c1 = arith.constant 1 : index
    %c0_12 = arith.constant 0 : index
    %20 = vector.load %arg4[%c1, %c0_12] : memref<2x256xf32, #tpu.memory_space<vmem>>, vector<1x256xf32>
    %c0_13 = arith.constant 0 : index
    %c0_14 = arith.constant 0 : index
    %21 = memref.load %arg5[%c0_13, %c0_14] : memref<2x3xf32, #tpu.memory_space<smem>>
    %22 = vector.broadcast %21 : f32 to vector<16x256xf32>
    %23 = arith.mulf %22, %1 : vector<16x256xf32>
    %c1_15 = arith.constant 1 : index
    %c0_16 = arith.constant 0 : index
    %24 = memref.load %arg5[%c1_15, %c0_16] : memref<2x3xf32, #tpu.memory_space<smem>>
    %25 = vector.broadcast %24 : f32 to vector<16x256xf32>
    %26 = arith.mulf %25, %3 : vector<16x256xf32>
    %27 = arith.addf %23, %26 : vector<16x256xf32>
    %c0_17 = arith.constant 0 : index
    %28 = memref.load %arg6[%c0_17] : memref<3xf32, #tpu.memory_space<smem>>
    %29 = vector.broadcast %28 : f32 to vector<16x256xf32>
    %30 = arith.addf %27, %29 : vector<16x256xf32>
    %31 = math.tanh %30 : vector<16x256xf32>
    %cst_18 = arith.constant 2.000000e+00 : f32
    %32 = vector.broadcast %cst_18 : f32 to vector<16x256xf32>
    %33 = arith.mulf %31, %32 : vector<16x256xf32>
    %34 = arith.addf %18, %33 : vector<16x256xf32>
    %c0_19 = arith.constant 0 : index
    %c0_20 = arith.constant 0 : index
    %c0_21 = arith.constant 0 : index
    %c0_22 = arith.constant 0 : index
    %35 = vector.load %arg7[%c0_19, %c0_20, %c0_21, %c0_22] : memref<1x3x16x256xf32, #tpu.memory_space<vmem>>, vector<1x1x16x256xf32>
    %36 = vector.shape_cast %35 : vector<1x1x16x256xf32> to vector<16x256xf32>
    %37 = vector.shape_cast %34 : vector<16x256xf32> to vector<1x1x16x256xf32>
    tpu.vector_store %arg7[%c0_19, %c0_20, %c0_21, %c0_22], %37 {strides = array<i32>} : memref<1x3x16x256xf32, #tpu.memory_space<vmem>>, vector<1x1x16x256xf32>,
    %c0_23 = arith.constant 0 : index
    %c1_24 = arith.constant 1 : index
    %38 = memref.load %arg5[%c0_23, %c1_24] : memref<2x3xf32, #tpu.memory_space<smem>>
    %39 = vector.broadcast %38 : f32 to vector<16x256xf32>
    %40 = arith.mulf %39, %1 : vector<16x256xf32>
    %c1_25 = arith.constant 1 : index
    %c1_26 = arith.constant 1 : index
    %41 = memref.load %arg5[%c1_25, %c1_26] : memref<2x3xf32, #tpu.memory_space<smem>>
    %42 = vector.broadcast %41 : f32 to vector<16x256xf32>
    %43 = arith.mulf %42, %3 : vector<16x256xf32>
    %44 = arith.addf %40, %43 : vector<16x256xf32>
    %c1_27 = arith.constant 1 : index
    %45 = memref.load %arg6[%c1_27] : memref<3xf32, #tpu.memory_space<smem>>
    %46 = vector.broadcast %45 : f32 to vector<16x256xf32>
    %47 = arith.addf %44, %46 : vector<16x256xf32>
    %48 = math.tanh %47 : vector<16x256xf32>
    %cst_28 = arith.constant 2.000000e+00 : f32
    %49 = vector.broadcast %cst_28 : f32 to vector<16x256xf32>
    %50 = arith.mulf %48, %49 : vector<16x256xf32>
    %51 = vector.broadcast %19 : vector<1x256xf32> to vector<16x256xf32>
    %52 = arith.addf %51, %50 : vector<16x256xf32>
    %c0_29 = arith.constant 0 : index
    %c1_30 = arith.constant 1 : index
    %c0_31 = arith.constant 0 : index
    %c0_32 = arith.constant 0 : index
    %53 = vector.load %arg7[%c0_29, %c1_30, %c0_31, %c0_32] : memref<1x3x16x256xf32, #tpu.memory_space<vmem>>, vector<1x1x16x256xf32>
    %54 = vector.shape_cast %53 : vector<1x1x16x256xf32> to vector<16x256xf32>
    %55 = vector.shape_cast %52 : vector<16x256xf32> to vector<1x1x16x256xf32>
    tpu.vector_store %arg7[%c0_29, %c1_30, %c0_31, %c0_32], %55 {strides = array<i32>} : memref<1x3x16x256xf32, #tpu.memory_space<vmem>>, vector<1x1x16x256xf32>,
    %c0_33 = arith.constant 0 : index
    %c2 = arith.constant 2 : index
    %56 = memref.load %arg5[%c0_33, %c2] : memref<2x3xf32, #tpu.memory_space<smem>>
    %57 = vector.broadcast %56 : f32 to vector<16x256xf32>
    %58 = arith.mulf %57, %1 : vector<16x256xf32>
    %c1_34 = arith.constant 1 : index
    %c2_35 = arith.constant 2 : index
    %59 = memref.load %arg5[%c1_34, %c2_35] : memref<2x3xf32, #tpu.memory_space<smem>>
    %60 = vector.broadcast %59 : f32 to vector<16x256xf32>
    %61 = arith.mulf %60, %3 : vector<16x256xf32>
    %62 = arith.addf %58, %61 : vector<16x256xf32>
    %c2_36 = arith.constant 2 : index
    %63 = memref.load %arg6[%c2_36] : memref<3xf32, #tpu.memory_space<smem>>
    %64 = vector.broadcast %63 : f32 to vector<16x256xf32>
    %65 = arith.addf %62, %64 : vector<16x256xf32>
    %66 = math.tanh %65 : vector<16x256xf32>
    %cst_37 = arith.constant 2.000000e+00 : f32
    %67 = vector.broadcast %cst_37 : f32 to vector<16x256xf32>
    %68 = arith.mulf %66, %67 : vector<16x256xf32>
    %69 = vector.broadcast %20 : vector<1x256xf32> to vector<16x256xf32>
    %70 = arith.addf %69, %68 : vector<16x256xf32>
    %c0_38 = arith.constant 0 : index
    %c2_39 = arith.constant 2 : index
    %c0_40 = arith.constant 0 : index
    %c0_41 = arith.constant 0 : index
    %71 = vector.load %arg7[%c0_38, %c2_39, %c0_40, %c0_41] : memref<1x3x16x256xf32, #tpu.memory_space<vmem>>, vector<1x1x16x256xf32>
    %72 = vector.shape_cast %71 : vector<1x1x16x256xf32> to vector<16x256xf32>
    %73 = vector.shape_cast %70 : vector<16x256xf32> to vector<1x1x16x256xf32>
    tpu.vector_store %arg7[%c0_38, %c2_39, %c0_40, %c0_41], %73 {strides = array<i32>} : memref<1x3x16x256xf32, #tpu.memory_space<vmem>>, vector<1x1x16x256xf32>,
    return
  }
  func.func @transform_0(%arg0: i32, %arg1: i32) -> (i32, i32, i32) {
    %c0_i32 = arith.constant 0 : i32
    %c0_i32_0 = arith.constant 0 : i32
    return %arg0, %arg1, %c0_i32 : i32, i32, i32
  }
  func.func @transform_1(%arg0: i32, %arg1: i32) -> (i32, i32, i32) {
    %c0_i32 = arith.constant 0 : i32
    %c0_i32_0 = arith.constant 0 : i32
    return %arg0, %arg1, %c0_i32 : i32, i32, i32
  }
  func.func @transform_2(%arg0: i32, %arg1: i32) -> (i32, i32) {
    %c0_i32 = arith.constant 0 : i32
    %c0_i32_0 = arith.constant 0 : i32
    %c0_i32_1 = arith.constant 0 : i32
    return %c0_i32, %c0_i32_0 : i32, i32
  }
  func.func @transform_3(%arg0: i32, %arg1: i32) -> (i32, i32) {
    %c0_i32 = arith.constant 0 : i32
    %c0_i32_0 = arith.constant 0 : i32
    %c0_i32_1 = arith.constant 0 : i32
    return %c0_i32, %c0_i32_0 : i32, i32
  }
  func.func @transform_4(%arg0: i32, %arg1: i32) -> i32 {
    %c0_i32 = arith.constant 0 : i32
    %c0_i32_0 = arith.constant 0 : i32
    return %c0_i32 : i32
  }
  func.func @transform_5(%arg0: i32, %arg1: i32) -> (i32, i32, i32, i32) {
    %c0_i32 = arith.constant 0 : i32
    %c0_i32_0 = arith.constant 0 : i32
    %c0_i32_1 = arith.constant 0 : i32
    return %arg0, %c0_i32, %arg1, %c0_i32_0 : i32, i32, i32, i32
  }
  func.func @transform_6(%arg0: i32, %arg1: i32) -> (i32, i32, i32, i32) {
    %c0_i32 = arith.constant 0 : i32
    %c0_i32_0 = arith.constant 0 : i32
    %c0_i32_1 = arith.constant 0 : i32
    return %arg0, %arg1, %c0_i32, %c0_i32_0 : i32, i32, i32, i32
  }
}

module attributes {stable_mosaic.version = 11 : i64} {
  func.func @_matmul_xw_kernel(%arg0: i32, %arg1: i32, %arg2: memref<16x256xbf16, #tpu.memory_space<vmem>>, %arg3: memref<256x400xbf16, #tpu.memory_space<vmem>>, %arg4: memref<16x400xbf16, #tpu.memory_space<vmem>>, %arg5: memref<16x400xf32, #tpu.memory_space<vmem>>) attributes {dimension_semantics = [#tpu.dimension_semantics<parallel>, #tpu.dimension_semantics<arbitrary>], iteration_bounds = array<i64: 1, 1>, scalar_prefetch = 0 : i64, scratch_operands = 1 : i64, tpu.core_type = #tpu.core_type<tc>, window_params = [{transform_indices = @transform_0, window_bounds = array<i64: 16, 256>}, {transform_indices = @transform_1, window_bounds = array<i64: 256, 400>}, {transform_indices = @transform_2, window_bounds = array<i64: 16, 400>}]} {
    %c0_i32 = arith.constant 0 : i32
    %0 = arith.cmpi eq, %arg1, %c0_i32 : i32
    %1 = arith.extui %0 : i1 to i32
    %c0_i32_0 = arith.constant 0 : i32
    %2 = arith.cmpi ne, %1, %c0_i32_0 : i32
    scf.if %2 {
      %cst_10 = arith.constant 0.000000e+00 : f32
      %12 = vector.broadcast %cst_10 : f32 to vector<16x400xf32>
      %c0_11 = arith.constant 0 : index
      %c0_12 = arith.constant 0 : index
      %13 = vector.load %arg5[%c0_11, %c0_12] : memref<16x400xf32, #tpu.memory_space<vmem>>, vector<16x400xf32>
      tpu.vector_store %arg5[%c0_11, %c0_12], %12 {strides = array<i32>} : memref<16x400xf32, #tpu.memory_space<vmem>>, vector<16x400xf32>,
    } else {
    }
    %c0 = arith.constant 0 : index
    %c0_1 = arith.constant 0 : index
    %3 = vector.load %arg5[%c0, %c0_1] : memref<16x400xf32, #tpu.memory_space<vmem>>, vector<16x400xf32>
    %c0_2 = arith.constant 0 : index
    %c0_3 = arith.constant 0 : index
    %4 = vector.load %arg2[%c0_2, %c0_3] : memref<16x256xbf16, #tpu.memory_space<vmem>>, vector<16x256xbf16>
    %c0_4 = arith.constant 0 : index
    %c0_5 = arith.constant 0 : index
    %5 = vector.load %arg3[%c0_4, %c0_5] : memref<256x400xbf16, #tpu.memory_space<vmem>>, vector<256x400xbf16>
    %cst = arith.constant dense<0.000000e+00> : vector<16x400xf32>
    %6 = tpu.matmul %4, %5, %cst {dimension_numbers = #tpu.dot_dimension_numbers<[1], [0], [0], [1], [0, 0, 1, 1], [], []>} : vector<16x256xbf16>, vector<256x400xbf16>, vector<16x400xf32> -> vector<16x400xf32>
    %7 = arith.addf %3, %6 : vector<16x400xf32>
    %c0_6 = arith.constant 0 : index
    %c0_7 = arith.constant 0 : index
    %8 = vector.load %arg5[%c0_6, %c0_7] : memref<16x400xf32, #tpu.memory_space<vmem>>, vector<16x400xf32>
    tpu.vector_store %arg5[%c0_6, %c0_7], %7 {strides = array<i32>} : memref<16x400xf32, #tpu.memory_space<vmem>>, vector<16x400xf32>,
    %c0_i32_8 = arith.constant 0 : i32
    %9 = arith.cmpi eq, %arg1, %c0_i32_8 : i32
    %10 = arith.extui %9 : i1 to i32
    %c0_i32_9 = arith.constant 0 : i32
    %11 = arith.cmpi ne, %10, %c0_i32_9 : i32
    scf.if %11 {
      %c0_10 = arith.constant 0 : index
      %c0_11 = arith.constant 0 : index
      %12 = vector.load %arg5[%c0_10, %c0_11] : memref<16x400xf32, #tpu.memory_space<vmem>>, vector<16x400xf32>
      %13 = arith.truncf %12 : vector<16x400xf32> to vector<16x400xbf16>
      %c0_12 = arith.constant 0 : index
      %c0_13 = arith.constant 0 : index
      %14 = vector.load %arg4[%c0_12, %c0_13] : memref<16x400xbf16, #tpu.memory_space<vmem>>, vector<16x400xbf16>
      tpu.vector_store %arg4[%c0_12, %c0_13], %13 {strides = array<i32>} : memref<16x400xbf16, #tpu.memory_space<vmem>>, vector<16x400xbf16>,
    } else {
    }
    return
  }
  func.func @transform_0(%arg0: i32, %arg1: i32) -> (i32, i32) {
    %c0_i32 = arith.constant 0 : i32
    return %arg0, %arg1 : i32, i32
  }
  func.func @transform_1(%arg0: i32, %arg1: i32) -> (i32, i32) {
    %c0_i32 = arith.constant 0 : i32
    %c0_i32_0 = arith.constant 0 : i32
    return %arg1, %c0_i32 : i32, i32
  }
  func.func @transform_2(%arg0: i32, %arg1: i32) -> (i32, i32) {
    %c0_i32 = arith.constant 0 : i32
    %c0_i32_0 = arith.constant 0 : i32
    return %arg0, %c0_i32 : i32, i32
  }
}

module attributes {stable_mosaic.version = 11 : i64} {
  func.func @_d_resize_kernel(%arg0: i32, %arg1: i32, %arg2: memref<24x16xbf16, #tpu.memory_space<vmem>>, %arg3: memref<1x16x400xbf16, #tpu.memory_space<vmem>>, %arg4: memref<1x24x400xf32, #tpu.memory_space<vmem>>) attributes {dimension_semantics = [#tpu.dimension_semantics<parallel>, #tpu.dimension_semantics<parallel>], iteration_bounds = array<i64: 1, 1>, scalar_prefetch = 0 : i64, scratch_operands = 0 : i64, tpu.core_type = #tpu.core_type<tc>, window_params = [{pipeline_mode = #tpu.pipeline_mode<synchronous>, transform_indices = @transform_0, window_bounds = array<i64: 24, 16>}, {transform_indices = @transform_1, window_bounds = array<i64: 1, 16, 400>}, {transform_indices = @transform_2, window_bounds = array<i64: 1, 24, 400>}]} {
    %c0 = arith.constant 0 : index
    %c0_0 = arith.constant 0 : index
    %0 = vector.load %arg2[%c0, %c0_0] : memref<24x16xbf16, #tpu.memory_space<vmem>>, vector<24x16xbf16>
    %c0_1 = arith.constant 0 : index
    %c0_2 = arith.constant 0 : index
    %c0_3 = arith.constant 0 : index
    %1 = vector.load %arg3[%c0_1, %c0_2, %c0_3] : memref<1x16x400xbf16, #tpu.memory_space<vmem>>, vector<1x16x400xbf16>
    %2 = vector.shape_cast %1 : vector<1x16x400xbf16> to vector<16x400xbf16>
    %cst = arith.constant dense<0.000000e+00> : vector<24x400xf32>
    %3 = tpu.matmul %0, %2, %cst {dimension_numbers = #tpu.dot_dimension_numbers<[1], [0], [0], [1], [0, 0, 1, 1], [], []>} : vector<24x16xbf16>, vector<16x400xbf16>, vector<24x400xf32> -> vector<24x400xf32>
    %c0_4 = arith.constant 0 : index
    %c0_5 = arith.constant 0 : index
    %c0_6 = arith.constant 0 : index
    %4 = vector.load %arg4[%c0_4, %c0_5, %c0_6] : memref<1x24x400xf32, #tpu.memory_space<vmem>>, vector<1x24x400xf32>
    %5 = vector.shape_cast %4 : vector<1x24x400xf32> to vector<24x400xf32>
    %6 = vector.shape_cast %3 : vector<24x400xf32> to vector<1x24x400xf32>
    tpu.vector_store %arg4[%c0_4, %c0_5, %c0_6], %6 {strides = array<i32>} : memref<1x24x400xf32, #tpu.memory_space<vmem>>, vector<1x24x400xf32>,
    return
  }
  func.func @transform_0(%arg0: i32, %arg1: i32) -> (i32, i32) {
    %c0_i32 = arith.constant 0 : i32
    %c0_i32_0 = arith.constant 0 : i32
    %c0_i32_1 = arith.constant 0 : i32
    return %c0_i32, %c0_i32_0 : i32, i32
  }
  func.func @transform_1(%arg0: i32, %arg1: i32) -> (i32, i32, i32) {
    %c0_i32 = arith.constant 0 : i32
    %c0_i32_0 = arith.constant 0 : i32
    return %arg0, %c0_i32, %arg1 : i32, i32, i32
  }
  func.func @transform_2(%arg0: i32, %arg1: i32) -> (i32, i32, i32) {
    %c0_i32 = arith.constant 0 : i32
    %c0_i32_0 = arith.constant 0 : i32
    return %arg0, %c0_i32, %arg1 : i32, i32, i32
  }
}

module attributes {stable_mosaic.version = 11 : i64} {
  func.func @_fg_stats_kernel(%arg0: i32, %arg1: i32, %arg2: memref<1x24x400xf32, #tpu.memory_space<vmem>>, %arg3: memref<2x400xf32, #tpu.memory_space<vmem>>, %arg4: memref<1x1x8x128xf32, #tpu.memory_space<vmem>>) attributes {dimension_semantics = [#tpu.dimension_semantics<parallel>, #tpu.dimension_semantics<parallel>], iteration_bounds = array<i64: 1, 1>, scalar_prefetch = 0 : i64, scratch_operands = 0 : i64, tpu.core_type = #tpu.core_type<tc>, window_params = [{transform_indices = @transform_0, window_bounds = array<i64: 1, 24, 400>}, {pipeline_mode = #tpu.pipeline_mode<synchronous>, transform_indices = @transform_1, window_bounds = array<i64: 2, 400>}, {transform_indices = @transform_2, window_bounds = array<i64: 1, 1, 8, 128>}]} {
    %c0 = arith.constant 0 : index
    %c0_0 = arith.constant 0 : index
    %c0_1 = arith.constant 0 : index
    %0 = vector.load %arg2[%c0, %c0_0, %c0_1] : memref<1x24x400xf32, #tpu.memory_space<vmem>>, vector<1x24x400xf32>
    %1 = vector.shape_cast %0 : vector<1x24x400xf32> to vector<24x400xf32>
    %cst = arith.constant 0.000000e+00 : f32
    %2 = vector.broadcast %cst : f32 to vector<24x400xf32>
    %3 = arith.cmpf one, %1, %2 : vector<24x400xf32>
    %4 = arith.extui %3 : vector<24x400xi1> to vector<24x400xi32>
    %5 = arith.sitofp %4 : vector<24x400xi32> to vector<24x400xf32>
    %6 = tpu.iota {dimensions = array<i32: 0>} : vector<24x400xi32>
    %c24_i32 = arith.constant 24 : i32
    %7 = arith.muli %arg1, %c24_i32 : i32
    %8 = vector.broadcast %7 : i32 to vector<24x400xi32>
    %9 = arith.addi %6, %8 : vector<24x400xi32>
    %10 = arith.sitofp %9 : vector<24x400xi32> to vector<24x400xf32>
    %11 = arith.mulf %5, %10 : vector<24x400xf32>
    %12 = vector.shape_cast %11 : vector<24x400xf32> to vector<1x24x400xf32>
    %cst_2 = arith.constant dense<0.000000e+00> : vector<1xf32>
    %13 = vector.multi_reduction <add>, %12, %cst_2 [1, 2] : vector<1x24x400xf32> to vector<1xf32>
    %14 = vector.shape_cast %13 : vector<1xf32> to vector<1x1x1xf32>
    %15 = vector.extract %14[0, 0, 0] : f32 from vector<1x1x1xf32>
    %c0_3 = arith.constant 0 : index
    %c0_4 = arith.constant 0 : index
    %16 = vector.load %arg3[%c0_3, %c0_4] : memref<2x400xf32, #tpu.memory_space<vmem>>, vector<1x400xf32>
    %17 = vector.broadcast %16 : vector<1x400xf32> to vector<24x400xf32>
    %18 = arith.mulf %5, %17 : vector<24x400xf32>
    %19 = vector.shape_cast %18 : vector<24x400xf32> to vector<1x24x400xf32>
    %cst_5 = arith.constant dense<0.000000e+00> : vector<1xf32>
    %20 = vector.multi_reduction <add>, %19, %cst_5 [1, 2] : vector<1x24x400xf32> to vector<1xf32>
    %21 = vector.shape_cast %20 : vector<1xf32> to vector<1x1x1xf32>
    %22 = vector.extract %21[0, 0, 0] : f32 from vector<1x1x1xf32>
    %c1 = arith.constant 1 : index
    %c0_6 = arith.constant 0 : index
    %23 = vector.load %arg3[%c1, %c0_6] : memref<2x400xf32, #tpu.memory_space<vmem>>, vector<1x400xf32>
    %24 = vector.broadcast %23 : vector<1x400xf32> to vector<24x400xf32>
    %25 = arith.mulf %5, %24 : vector<24x400xf32>
    %26 = vector.shape_cast %25 : vector<24x400xf32> to vector<1x24x400xf32>
    %cst_7 = arith.constant dense<0.000000e+00> : vector<1xf32>
    %27 = vector.multi_reduction <add>, %26, %cst_7 [1, 2] : vector<1x24x400xf32> to vector<1xf32>
    %28 = vector.shape_cast %27 : vector<1xf32> to vector<1x1x1xf32>
    %29 = vector.extract %28[0, 0, 0] : f32 from vector<1x1x1xf32>
    %30 = vector.shape_cast %5 : vector<24x400xf32> to vector<1x24x400xf32>
    %cst_8 = arith.constant dense<0.000000e+00> : vector<1xf32>
    %31 = vector.multi_reduction <add>, %30, %cst_8 [1, 2] : vector<1x24x400xf32> to vector<1xf32>
    %32 = vector.shape_cast %31 : vector<1xf32> to vector<1x1x1xf32>
    %33 = vector.extract %32[0, 0, 0] : f32 from vector<1x1x1xf32>
    %34 = tpu.iota {dimensions = array<i32: 3>} : vector<1x1x8x128xi32>
    %c0_i32 = arith.constant 0 : i32
    %35 = vector.broadcast %c0_i32 : i32 to vector<1x1x8x128xi32>
    %36 = arith.cmpi eq, %34, %35 : vector<1x1x8x128xi32>
    %cst_9 = arith.constant 0.000000e+00 : f32
    %37 = vector.broadcast %15 : f32 to vector<1x1x8x128xf32>
    %38 = vector.broadcast %cst_9 : f32 to vector<1x1x8x128xf32>
    %39 = arith.select %36, %37, %38 : vector<1x1x8x128xi1>, vector<1x1x8x128xf32>
    %c1_i32 = arith.constant 1 : i32
    %40 = vector.broadcast %c1_i32 : i32 to vector<1x1x8x128xi32>
    %41 = arith.cmpi eq, %34, %40 : vector<1x1x8x128xi32>
    %cst_10 = arith.constant 0.000000e+00 : f32
    %42 = vector.broadcast %22 : f32 to vector<1x1x8x128xf32>
    %43 = vector.broadcast %cst_10 : f32 to vector<1x1x8x128xf32>
    %44 = arith.select %41, %42, %43 : vector<1x1x8x128xi1>, vector<1x1x8x128xf32>
    %45 = arith.addf %39, %44 : vector<1x1x8x128xf32>
    %c2_i32 = arith.constant 2 : i32
    %46 = vector.broadcast %c2_i32 : i32 to vector<1x1x8x128xi32>
    %47 = arith.cmpi eq, %34, %46 : vector<1x1x8x128xi32>
    %cst_11 = arith.constant 0.000000e+00 : f32
    %48 = vector.broadcast %29 : f32 to vector<1x1x8x128xf32>
    %49 = vector.broadcast %cst_11 : f32 to vector<1x1x8x128xf32>
    %50 = arith.select %47, %48, %49 : vector<1x1x8x128xi1>, vector<1x1x8x128xf32>
    %51 = arith.addf %45, %50 : vector<1x1x8x128xf32>
    %c3_i32 = arith.constant 3 : i32
    %52 = vector.broadcast %c3_i32 : i32 to vector<1x1x8x128xi32>
    %53 = arith.cmpi eq, %34, %52 : vector<1x1x8x128xi32>
    %cst_12 = arith.constant 0.000000e+00 : f32
    %54 = vector.broadcast %33 : f32 to vector<1x1x8x128xf32>
    %55 = vector.broadcast %cst_12 : f32 to vector<1x1x8x128xf32>
    %56 = arith.select %53, %54, %55 : vector<1x1x8x128xi1>, vector<1x1x8x128xf32>
    %57 = arith.addf %51, %56 : vector<1x1x8x128xf32>
    %c0_13 = arith.constant 0 : index
    %c0_14 = arith.constant 0 : index
    %c0_15 = arith.constant 0 : index
    %c0_16 = arith.constant 0 : index
    %58 = vector.load %arg4[%c0_13, %c0_14, %c0_15, %c0_16] : memref<1x1x8x128xf32, #tpu.memory_space<vmem>>, vector<1x1x8x128xf32>
    tpu.vector_store %arg4[%c0_13, %c0_14, %c0_15, %c0_16], %57 {strides = array<i32>} : memref<1x1x8x128xf32, #tpu.memory_space<vmem>>, vector<1x1x8x128xf32>,
    return
  }
  func.func @transform_0(%arg0: i32, %arg1: i32) -> (i32, i32, i32) {
    %c0_i32 = arith.constant 0 : i32
    %c0_i32_0 = arith.constant 0 : i32
    return %arg0, %arg1, %c0_i32 : i32, i32, i32
  }
  func.func @transform_1(%arg0: i32, %arg1: i32) -> (i32, i32) {
    %c0_i32 = arith.constant 0 : i32
    %c0_i32_0 = arith.constant 0 : i32
    %c0_i32_1 = arith.constant 0 : i32
    return %c0_i32, %c0_i32_0 : i32, i32
  }
  func.func @transform_2(%arg0: i32, %arg1: i32) -> (i32, i32, i32, i32) {
    %c0_i32 = arith.constant 0 : i32
    %c0_i32_0 = arith.constant 0 : i32
    %c0_i32_1 = arith.constant 0 : i32
    return %arg0, %arg1, %c0_i32, %c0_i32_0 : i32, i32, i32, i32
  }
}

module attributes {stable_mosaic.version = 11 : i64} {
  func.func @_unet_kernel(%arg0: i32, %arg1: memref<1x4x128xf32, #tpu.memory_space<vmem>>, %arg2: memref<1x4x128xf32, #tpu.memory_space<vmem>>, %arg3: memref<2x32xf32, #tpu.memory_space<smem>>, %arg4: memref<32xf32, #tpu.memory_space<smem>>, %arg5: memref<32x2xf32, #tpu.memory_space<smem>>, %arg6: memref<2xf32, #tpu.memory_space<smem>>, %arg7: memref<1x2x4x128xf32, #tpu.memory_space<vmem>>) attributes {dimension_semantics = [#tpu.dimension_semantics<parallel>], iteration_bounds = array<i64: 1>, scalar_prefetch = 0 : i64, scratch_operands = 0 : i64, tpu.core_type = #tpu.core_type<tc>, window_params = [{transform_indices = @transform_0, window_bounds = array<i64: 1, 4, 128>}, {transform_indices = @transform_1, window_bounds = array<i64: 1, 4, 128>}, {transform_indices = @transform_2, window_bounds = array<i64: 2, 32>}, {transform_indices = @transform_3, window_bounds = array<i64: 32>}, {transform_indices = @transform_4, window_bounds = array<i64: 32, 2>}, {transform_indices = @transform_5, window_bounds = array<i64: 2>}, {transform_indices = @transform_6, window_bounds = array<i64: 1, 2, 4, 128>}]} {
    %c0 = arith.constant 0 : index
    %c0_0 = arith.constant 0 : index
    %c0_1 = arith.constant 0 : index
    %0 = vector.load %arg1[%c0, %c0_0, %c0_1] : memref<1x4x128xf32, #tpu.memory_space<vmem>>, vector<1x4x128xf32>
    %1 = vector.shape_cast %0 : vector<1x4x128xf32> to vector<4x128xf32>
    %c0_2 = arith.constant 0 : index
    %c0_3 = arith.constant 0 : index
    %c0_4 = arith.constant 0 : index
    %2 = vector.load %arg2[%c0_2, %c0_3, %c0_4] : memref<1x4x128xf32, #tpu.memory_space<vmem>>, vector<1x4x128xf32>
    %3 = vector.shape_cast %2 : vector<1x4x128xf32> to vector<4x128xf32>
    %cst = arith.constant 0.000000e+00 : f32
    %4 = vector.broadcast %cst : f32 to vector<4x128xf32>
    %c0_5 = arith.constant 0 : index
    %5 = memref.load %arg6[%c0_5] : memref<2xf32, #tpu.memory_space<smem>>
    %6 = vector.broadcast %5 : f32 to vector<4x128xf32>
    %7 = arith.addf %4, %6 : vector<4x128xf32>
    %cst_6 = arith.constant 0.000000e+00 : f32
    %8 = vector.broadcast %cst_6 : f32 to vector<4x128xf32>
    %c1 = arith.constant 1 : index
    %9 = memref.load %arg6[%c1] : memref<2xf32, #tpu.memory_space<smem>>
    %10 = vector.broadcast %9 : f32 to vector<4x128xf32>
    %11 = arith.addf %8, %10 : vector<4x128xf32>
    %c0_7 = arith.constant 0 : index
    %c0_8 = arith.constant 0 : index
    %12 = memref.load %arg3[%c0_7, %c0_8] : memref<2x32xf32, #tpu.memory_space<smem>>
    %13 = vector.broadcast %12 : f32 to vector<4x128xf32>
    %14 = arith.mulf %13, %1 : vector<4x128xf32>
    %c1_9 = arith.constant 1 : index
    %c0_10 = arith.constant 0 : index
    %15 = memref.load %arg3[%c1_9, %c0_10] : memref<2x32xf32, #tpu.memory_space<smem>>
    %16 = vector.broadcast %15 : f32 to vector<4x128xf32>
    %17 = arith.mulf %16, %3 : vector<4x128xf32>
    %18 = arith.addf %14, %17 : vector<4x128xf32>
    %c0_11 = arith.constant 0 : index
    %19 = memref.load %arg4[%c0_11] : memref<32xf32, #tpu.memory_space<smem>>
    %20 = vector.broadcast %19 : f32 to vector<4x128xf32>
    %21 = arith.addf %18, %20 : vector<4x128xf32>
    %cst_12 = arith.constant 0.000000e+00 : f32
    %22 = vector.broadcast %cst_12 : f32 to vector<4x128xf32>
    %23 = arith.maximumf %21, %22 : vector<4x128xf32>
    %c0_13 = arith.constant 0 : index
    %c0_14 = arith.constant 0 : index
    %24 = memref.load %arg5[%c0_13, %c0_14] : memref<32x2xf32, #tpu.memory_space<smem>>
    %25 = vector.broadcast %24 : f32 to vector<4x128xf32>
    %26 = arith.mulf %25, %23 : vector<4x128xf32>
    %27 = arith.addf %7, %26 : vector<4x128xf32>
    %c0_15 = arith.constant 0 : index
    %c1_16 = arith.constant 1 : index
    %28 = memref.load %arg5[%c0_15, %c1_16] : memref<32x2xf32, #tpu.memory_space<smem>>
    %29 = vector.broadcast %28 : f32 to vector<4x128xf32>
    %30 = arith.mulf %29, %23 : vector<4x128xf32>
    %31 = arith.addf %11, %30 : vector<4x128xf32>
    %c0_17 = arith.constant 0 : index
    %c1_18 = arith.constant 1 : index
    %32 = memref.load %arg3[%c0_17, %c1_18] : memref<2x32xf32, #tpu.memory_space<smem>>
    %33 = vector.broadcast %32 : f32 to vector<4x128xf32>
    %34 = arith.mulf %33, %1 : vector<4x128xf32>
    %c1_19 = arith.constant 1 : index
    %c1_20 = arith.constant 1 : index
    %35 = memref.load %arg3[%c1_19, %c1_20] : memref<2x32xf32, #tpu.memory_space<smem>>
    %36 = vector.broadcast %35 : f32 to vector<4x128xf32>
    %37 = arith.mulf %36, %3 : vector<4x128xf32>
    %38 = arith.addf %34, %37 : vector<4x128xf32>
    %c1_21 = arith.constant 1 : index
    %39 = memref.load %arg4[%c1_21] : memref<32xf32, #tpu.memory_space<smem>>
    %40 = vector.broadcast %39 : f32 to vector<4x128xf32>
    %41 = arith.addf %38, %40 : vector<4x128xf32>
    %cst_22 = arith.constant 0.000000e+00 : f32
    %42 = vector.broadcast %cst_22 : f32 to vector<4x128xf32>
    %43 = arith.maximumf %41, %42 : vector<4x128xf32>
    %c1_23 = arith.constant 1 : index
    %c0_24 = arith.constant 0 : index
    %44 = memref.load %arg5[%c1_23, %c0_24] : memref<32x2xf32, #tpu.memory_space<smem>>
    %45 = vector.broadcast %44 : f32 to vector<4x128xf32>
    %46 = arith.mulf %45, %43 : vector<4x128xf32>
    %47 = arith.addf %27, %46 : vector<4x128xf32>
    %c1_25 = arith.constant 1 : index
    %c1_26 = arith.constant 1 : index
    %48 = memref.load %arg5[%c1_25, %c1_26] : memref<32x2xf32, #tpu.memory_space<smem>>
    %49 = vector.broadcast %48 : f32 to vector<4x128xf32>
    %50 = arith.mulf %49, %43 : vector<4x128xf32>
    %51 = arith.addf %31, %50 : vector<4x128xf32>
    %c0_27 = arith.constant 0 : index
    %c2 = arith.constant 2 : index
    %52 = memref.load %arg3[%c0_27, %c2] : memref<2x32xf32, #tpu.memory_space<smem>>
    %53 = vector.broadcast %52 : f32 to vector<4x128xf32>
    %54 = arith.mulf %53, %1 : vector<4x128xf32>
    %c1_28 = arith.constant 1 : index
    %c2_29 = arith.constant 2 : index
    %55 = memref.load %arg3[%c1_28, %c2_29] : memref<2x32xf32, #tpu.memory_space<smem>>
    %56 = vector.broadcast %55 : f32 to vector<4x128xf32>
    %57 = arith.mulf %56, %3 : vector<4x128xf32>
    %58 = arith.addf %54, %57 : vector<4x128xf32>
    %c2_30 = arith.constant 2 : index
    %59 = memref.load %arg4[%c2_30] : memref<32xf32, #tpu.memory_space<smem>>
    %60 = vector.broadcast %59 : f32 to vector<4x128xf32>
    %61 = arith.addf %58, %60 : vector<4x128xf32>
    %cst_31 = arith.constant 0.000000e+00 : f32
    %62 = vector.broadcast %cst_31 : f32 to vector<4x128xf32>
    %63 = arith.maximumf %61, %62 : vector<4x128xf32>
    %c2_32 = arith.constant 2 : index
    %c0_33 = arith.constant 0 : index
    %64 = memref.load %arg5[%c2_32, %c0_33] : memref<32x2xf32, #tpu.memory_space<smem>>
    %65 = vector.broadcast %64 : f32 to vector<4x128xf32>
    %66 = arith.mulf %65, %63 : vector<4x128xf32>
    %67 = arith.addf %47, %66 : vector<4x128xf32>
    %c2_34 = arith.constant 2 : index
    %c1_35 = arith.constant 1 : index
    %68 = memref.load %arg5[%c2_34, %c1_35] : memref<32x2xf32, #tpu.memory_space<smem>>
    %69 = vector.broadcast %68 : f32 to vector<4x128xf32>
    %70 = arith.mulf %69, %63 : vector<4x128xf32>
    %71 = arith.addf %51, %70 : vector<4x128xf32>
    %c0_36 = arith.constant 0 : index
    %c3 = arith.constant 3 : index
    %72 = memref.load %arg3[%c0_36, %c3] : memref<2x32xf32, #tpu.memory_space<smem>>
    %73 = vector.broadcast %72 : f32 to vector<4x128xf32>
    %74 = arith.mulf %73, %1 : vector<4x128xf32>
    %c1_37 = arith.constant 1 : index
    %c3_38 = arith.constant 3 : index
    %75 = memref.load %arg3[%c1_37, %c3_38] : memref<2x32xf32, #tpu.memory_space<smem>>
    %76 = vector.broadcast %75 : f32 to vector<4x128xf32>
    %77 = arith.mulf %76, %3 : vector<4x128xf32>
    %78 = arith.addf %74, %77 : vector<4x128xf32>
    %c3_39 = arith.constant 3 : index
    %79 = memref.load %arg4[%c3_39] : memref<32xf32, #tpu.memory_space<smem>>
    %80 = vector.broadcast %79 : f32 to vector<4x128xf32>
    %81 = arith.addf %78, %80 : vector<4x128xf32>
    %cst_40 = arith.constant 0.000000e+00 : f32
    %82 = vector.broadcast %cst_40 : f32 to vector<4x128xf32>
    %83 = arith.maximumf %81, %82 : vector<4x128xf32>
    %c3_41 = arith.constant 3 : index
    %c0_42 = arith.constant 0 : index
    %84 = memref.load %arg5[%c3_41, %c0_42] : memref<32x2xf32, #tpu.memory_space<smem>>
    %85 = vector.broadcast %84 : f32 to vector<4x128xf32>
    %86 = arith.mulf %85, %83 : vector<4x128xf32>
    %87 = arith.addf %67, %86 : vector<4x128xf32>
    %c3_43 = arith.constant 3 : index
    %c1_44 = arith.constant 1 : index
    %88 = memref.load %arg5[%c3_43, %c1_44] : memref<32x2xf32, #tpu.memory_space<smem>>
    %89 = vector.broadcast %88 : f32 to vector<4x128xf32>
    %90 = arith.mulf %89, %83 : vector<4x128xf32>
    %91 = arith.addf %71, %90 : vector<4x128xf32>
    %c0_45 = arith.constant 0 : index
    %c4 = arith.constant 4 : index
    %92 = memref.load %arg3[%c0_45, %c4] : memref<2x32xf32, #tpu.memory_space<smem>>
    %93 = vector.broadcast %92 : f32 to vector<4x128xf32>
    %94 = arith.mulf %93, %1 : vector<4x128xf32>
    %c1_46 = arith.constant 1 : index
    %c4_47 = arith.constant 4 : index
    %95 = memref.load %arg3[%c1_46, %c4_47] : memref<2x32xf32, #tpu.memory_space<smem>>
    %96 = vector.broadcast %95 : f32 to vector<4x128xf32>
    %97 = arith.mulf %96, %3 : vector<4x128xf32>
    %98 = arith.addf %94, %97 : vector<4x128xf32>
    %c4_48 = arith.constant 4 : index
    %99 = memref.load %arg4[%c4_48] : memref<32xf32, #tpu.memory_space<smem>>
    %100 = vector.broadcast %99 : f32 to vector<4x128xf32>
    %101 = arith.addf %98, %100 : vector<4x128xf32>
    %cst_49 = arith.constant 0.000000e+00 : f32
    %102 = vector.broadcast %cst_49 : f32 to vector<4x128xf32>
    %103 = arith.maximumf %101, %102 : vector<4x128xf32>
    %c4_50 = arith.constant 4 : index
    %c0_51 = arith.constant 0 : index
    %104 = memref.load %arg5[%c4_50, %c0_51] : memref<32x2xf32, #tpu.memory_space<smem>>
    %105 = vector.broadcast %104 : f32 to vector<4x128xf32>
    %106 = arith.mulf %105, %103 : vector<4x128xf32>
    %107 = arith.addf %87, %106 : vector<4x128xf32>
    %c4_52 = arith.constant 4 : index
    %c1_53 = arith.constant 1 : index
    %108 = memref.load %arg5[%c4_52, %c1_53] : memref<32x2xf32, #tpu.memory_space<smem>>
    %109 = vector.broadcast %108 : f32 to vector<4x128xf32>
    %110 = arith.mulf %109, %103 : vector<4x128xf32>
    %111 = arith.addf %91, %110 : vector<4x128xf32>
    %c0_54 = arith.constant 0 : index
    %c5 = arith.constant 5 : index
    %112 = memref.load %arg3[%c0_54, %c5] : memref<2x32xf32, #tpu.memory_space<smem>>
    %113 = vector.broadcast %112 : f32 to vector<4x128xf32>
    %114 = arith.mulf %113, %1 : vector<4x128xf32>
    %c1_55 = arith.constant 1 : index
    %c5_56 = arith.constant 5 : index
    %115 = memref.load %arg3[%c1_55, %c5_56] : memref<2x32xf32, #tpu.memory_space<smem>>
    %116 = vector.broadcast %115 : f32 to vector<4x128xf32>
    %117 = arith.mulf %116, %3 : vector<4x128xf32>
    %118 = arith.addf %114, %117 : vector<4x128xf32>
    %c5_57 = arith.constant 5 : index
    %119 = memref.load %arg4[%c5_57] : memref<32xf32, #tpu.memory_space<smem>>
    %120 = vector.broadcast %119 : f32 to vector<4x128xf32>
    %121 = arith.addf %118, %120 : vector<4x128xf32>
    %cst_58 = arith.constant 0.000000e+00 : f32
    %122 = vector.broadcast %cst_58 : f32 to vector<4x128xf32>
    %123 = arith.maximumf %121, %122 : vector<4x128xf32>
    %c5_59 = arith.constant 5 : index
    %c0_60 = arith.constant 0 : index
    %124 = memref.load %arg5[%c5_59, %c0_60] : memref<32x2xf32, #tpu.memory_space<smem>>
    %125 = vector.broadcast %124 : f32 to vector<4x128xf32>
    %126 = arith.mulf %125, %123 : vector<4x128xf32>
    %127 = arith.addf %107, %126 : vector<4x128xf32>
    %c5_61 = arith.constant 5 : index
    %c1_62 = arith.constant 1 : index
    %128 = memref.load %arg5[%c5_61, %c1_62] : memref<32x2xf32, #tpu.memory_space<smem>>
    %129 = vector.broadcast %128 : f32 to vector<4x128xf32>
    %130 = arith.mulf %129, %123 : vector<4x128xf32>
    %131 = arith.addf %111, %130 : vector<4x128xf32>
    %c0_63 = arith.constant 0 : index
    %c6 = arith.constant 6 : index
    %132 = memref.load %arg3[%c0_63, %c6] : memref<2x32xf32, #tpu.memory_space<smem>>
    %133 = vector.broadcast %132 : f32 to vector<4x128xf32>
    %134 = arith.mulf %133, %1 : vector<4x128xf32>
    %c1_64 = arith.constant 1 : index
    %c6_65 = arith.constant 6 : index
    %135 = memref.load %arg3[%c1_64, %c6_65] : memref<2x32xf32, #tpu.memory_space<smem>>
    %136 = vector.broadcast %135 : f32 to vector<4x128xf32>
    %137 = arith.mulf %136, %3 : vector<4x128xf32>
    %138 = arith.addf %134, %137 : vector<4x128xf32>
    %c6_66 = arith.constant 6 : index
    %139 = memref.load %arg4[%c6_66] : memref<32xf32, #tpu.memory_space<smem>>
    %140 = vector.broadcast %139 : f32 to vector<4x128xf32>
    %141 = arith.addf %138, %140 : vector<4x128xf32>
    %cst_67 = arith.constant 0.000000e+00 : f32
    %142 = vector.broadcast %cst_67 : f32 to vector<4x128xf32>
    %143 = arith.maximumf %141, %142 : vector<4x128xf32>
    %c6_68 = arith.constant 6 : index
    %c0_69 = arith.constant 0 : index
    %144 = memref.load %arg5[%c6_68, %c0_69] : memref<32x2xf32, #tpu.memory_space<smem>>
    %145 = vector.broadcast %144 : f32 to vector<4x128xf32>
    %146 = arith.mulf %145, %143 : vector<4x128xf32>
    %147 = arith.addf %127, %146 : vector<4x128xf32>
    %c6_70 = arith.constant 6 : index
    %c1_71 = arith.constant 1 : index
    %148 = memref.load %arg5[%c6_70, %c1_71] : memref<32x2xf32, #tpu.memory_space<smem>>
    %149 = vector.broadcast %148 : f32 to vector<4x128xf32>
    %150 = arith.mulf %149, %143 : vector<4x128xf32>
    %151 = arith.addf %131, %150 : vector<4x128xf32>
    %c0_72 = arith.constant 0 : index
    %c7 = arith.constant 7 : index
    %152 = memref.load %arg3[%c0_72, %c7] : memref<2x32xf32, #tpu.memory_space<smem>>
    %153 = vector.broadcast %152 : f32 to vector<4x128xf32>
    %154 = arith.mulf %153, %1 : vector<4x128xf32>
    %c1_73 = arith.constant 1 : index
    %c7_74 = arith.constant 7 : index
    %155 = memref.load %arg3[%c1_73, %c7_74] : memref<2x32xf32, #tpu.memory_space<smem>>
    %156 = vector.broadcast %155 : f32 to vector<4x128xf32>
    %157 = arith.mulf %156, %3 : vector<4x128xf32>
    %158 = arith.addf %154, %157 : vector<4x128xf32>
    %c7_75 = arith.constant 7 : index
    %159 = memref.load %arg4[%c7_75] : memref<32xf32, #tpu.memory_space<smem>>
    %160 = vector.broadcast %159 : f32 to vector<4x128xf32>
    %161 = arith.addf %158, %160 : vector<4x128xf32>
    %cst_76 = arith.constant 0.000000e+00 : f32
    %162 = vector.broadcast %cst_76 : f32 to vector<4x128xf32>
    %163 = arith.maximumf %161, %162 : vector<4x128xf32>
    %c7_77 = arith.constant 7 : index
    %c0_78 = arith.constant 0 : index
    %164 = memref.load %arg5[%c7_77, %c0_78] : memref<32x2xf32, #tpu.memory_space<smem>>
    %165 = vector.broadcast %164 : f32 to vector<4x128xf32>
    %166 = arith.mulf %165, %163 : vector<4x128xf32>
    %167 = arith.addf %147, %166 : vector<4x128xf32>
    %c7_79 = arith.constant 7 : index
    %c1_80 = arith.constant 1 : index
    %168 = memref.load %arg5[%c7_79, %c1_80] : memref<32x2xf32, #tpu.memory_space<smem>>
    %169 = vector.broadcast %168 : f32 to vector<4x128xf32>
    %170 = arith.mulf %169, %163 : vector<4x128xf32>
    %171 = arith.addf %151, %170 : vector<4x128xf32>
    %c0_81 = arith.constant 0 : index
    %c8 = arith.constant 8 : index
    %172 = memref.load %arg3[%c0_81, %c8] : memref<2x32xf32, #tpu.memory_space<smem>>
    %173 = vector.broadcast %172 : f32 to vector<4x128xf32>
    %174 = arith.mulf %173, %1 : vector<4x128xf32>
    %c1_82 = arith.constant 1 : index
    %c8_83 = arith.constant 8 : index
    %175 = memref.load %arg3[%c1_82, %c8_83] : memref<2x32xf32, #tpu.memory_space<smem>>
    %176 = vector.broadcast %175 : f32 to vector<4x128xf32>
    %177 = arith.mulf %176, %3 : vector<4x128xf32>
    %178 = arith.addf %174, %177 : vector<4x128xf32>
    %c8_84 = arith.constant 8 : index
    %179 = memref.load %arg4[%c8_84] : memref<32xf32, #tpu.memory_space<smem>>
    %180 = vector.broadcast %179 : f32 to vector<4x128xf32>
    %181 = arith.addf %178, %180 : vector<4x128xf32>
    %cst_85 = arith.constant 0.000000e+00 : f32
    %182 = vector.broadcast %cst_85 : f32 to vector<4x128xf32>
    %183 = arith.maximumf %181, %182 : vector<4x128xf32>
    %c8_86 = arith.constant 8 : index
    %c0_87 = arith.constant 0 : index
    %184 = memref.load %arg5[%c8_86, %c0_87] : memref<32x2xf32, #tpu.memory_space<smem>>
    %185 = vector.broadcast %184 : f32 to vector<4x128xf32>
    %186 = arith.mulf %185, %183 : vector<4x128xf32>
    %187 = arith.addf %167, %186 : vector<4x128xf32>
    %c8_88 = arith.constant 8 : index
    %c1_89 = arith.constant 1 : index
    %188 = memref.load %arg5[%c8_88, %c1_89] : memref<32x2xf32, #tpu.memory_space<smem>>
    %189 = vector.broadcast %188 : f32 to vector<4x128xf32>
    %190 = arith.mulf %189, %183 : vector<4x128xf32>
    %191 = arith.addf %171, %190 : vector<4x128xf32>
    %c0_90 = arith.constant 0 : index
    %c9 = arith.constant 9 : index
    %192 = memref.load %arg3[%c0_90, %c9] : memref<2x32xf32, #tpu.memory_space<smem>>
    %193 = vector.broadcast %192 : f32 to vector<4x128xf32>
    %194 = arith.mulf %193, %1 : vector<4x128xf32>
    %c1_91 = arith.constant 1 : index
    %c9_92 = arith.constant 9 : index
    %195 = memref.load %arg3[%c1_91, %c9_92] : memref<2x32xf32, #tpu.memory_space<smem>>
    %196 = vector.broadcast %195 : f32 to vector<4x128xf32>
    %197 = arith.mulf %196, %3 : vector<4x128xf32>
    %198 = arith.addf %194, %197 : vector<4x128xf32>
    %c9_93 = arith.constant 9 : index
    %199 = memref.load %arg4[%c9_93] : memref<32xf32, #tpu.memory_space<smem>>
    %200 = vector.broadcast %199 : f32 to vector<4x128xf32>
    %201 = arith.addf %198, %200 : vector<4x128xf32>
    %cst_94 = arith.constant 0.000000e+00 : f32
    %202 = vector.broadcast %cst_94 : f32 to vector<4x128xf32>
    %203 = arith.maximumf %201, %202 : vector<4x128xf32>
    %c9_95 = arith.constant 9 : index
    %c0_96 = arith.constant 0 : index
    %204 = memref.load %arg5[%c9_95, %c0_96] : memref<32x2xf32, #tpu.memory_space<smem>>
    %205 = vector.broadcast %204 : f32 to vector<4x128xf32>
    %206 = arith.mulf %205, %203 : vector<4x128xf32>
    %207 = arith.addf %187, %206 : vector<4x128xf32>
    %c9_97 = arith.constant 9 : index
    %c1_98 = arith.constant 1 : index
    %208 = memref.load %arg5[%c9_97, %c1_98] : memref<32x2xf32, #tpu.memory_space<smem>>
    %209 = vector.broadcast %208 : f32 to vector<4x128xf32>
    %210 = arith.mulf %209, %203 : vector<4x128xf32>
    %211 = arith.addf %191, %210 : vector<4x128xf32>
    %c0_99 = arith.constant 0 : index
    %c10 = arith.constant 10 : index
    %212 = memref.load %arg3[%c0_99, %c10] : memref<2x32xf32, #tpu.memory_space<smem>>
    %213 = vector.broadcast %212 : f32 to vector<4x128xf32>
    %214 = arith.mulf %213, %1 : vector<4x128xf32>
    %c1_100 = arith.constant 1 : index
    %c10_101 = arith.constant 10 : index
    %215 = memref.load %arg3[%c1_100, %c10_101] : memref<2x32xf32, #tpu.memory_space<smem>>
    %216 = vector.broadcast %215 : f32 to vector<4x128xf32>
    %217 = arith.mulf %216, %3 : vector<4x128xf32>
    %218 = arith.addf %214, %217 : vector<4x128xf32>
    %c10_102 = arith.constant 10 : index
    %219 = memref.load %arg4[%c10_102] : memref<32xf32, #tpu.memory_space<smem>>
    %220 = vector.broadcast %219 : f32 to vector<4x128xf32>
    %221 = arith.addf %218, %220 : vector<4x128xf32>
    %cst_103 = arith.constant 0.000000e+00 : f32
    %222 = vector.broadcast %cst_103 : f32 to vector<4x128xf32>
    %223 = arith.maximumf %221, %222 : vector<4x128xf32>
    %c10_104 = arith.constant 10 : index
    %c0_105 = arith.constant 0 : index
    %224 = memref.load %arg5[%c10_104, %c0_105] : memref<32x2xf32, #tpu.memory_space<smem>>
    %225 = vector.broadcast %224 : f32 to vector<4x128xf32>
    %226 = arith.mulf %225, %223 : vector<4x128xf32>
    %227 = arith.addf %207, %226 : vector<4x128xf32>
    %c10_106 = arith.constant 10 : index
    %c1_107 = arith.constant 1 : index
    %228 = memref.load %arg5[%c10_106, %c1_107] : memref<32x2xf32, #tpu.memory_space<smem>>
    %229 = vector.broadcast %228 : f32 to vector<4x128xf32>
    %230 = arith.mulf %229, %223 : vector<4x128xf32>
    %231 = arith.addf %211, %230 : vector<4x128xf32>
    %c0_108 = arith.constant 0 : index
    %c11 = arith.constant 11 : index
    %232 = memref.load %arg3[%c0_108, %c11] : memref<2x32xf32, #tpu.memory_space<smem>>
    %233 = vector.broadcast %232 : f32 to vector<4x128xf32>
    %234 = arith.mulf %233, %1 : vector<4x128xf32>
    %c1_109 = arith.constant 1 : index
    %c11_110 = arith.constant 11 : index
    %235 = memref.load %arg3[%c1_109, %c11_110] : memref<2x32xf32, #tpu.memory_space<smem>>
    %236 = vector.broadcast %235 : f32 to vector<4x128xf32>
    %237 = arith.mulf %236, %3 : vector<4x128xf32>
    %238 = arith.addf %234, %237 : vector<4x128xf32>
    %c11_111 = arith.constant 11 : index
    %239 = memref.load %arg4[%c11_111] : memref<32xf32, #tpu.memory_space<smem>>
    %240 = vector.broadcast %239 : f32 to vector<4x128xf32>
    %241 = arith.addf %238, %240 : vector<4x128xf32>
    %cst_112 = arith.constant 0.000000e+00 : f32
    %242 = vector.broadcast %cst_112 : f32 to vector<4x128xf32>
    %243 = arith.maximumf %241, %242 : vector<4x128xf32>
    %c11_113 = arith.constant 11 : index
    %c0_114 = arith.constant 0 : index
    %244 = memref.load %arg5[%c11_113, %c0_114] : memref<32x2xf32, #tpu.memory_space<smem>>
    %245 = vector.broadcast %244 : f32 to vector<4x128xf32>
    %246 = arith.mulf %245, %243 : vector<4x128xf32>
    %247 = arith.addf %227, %246 : vector<4x128xf32>
    %c11_115 = arith.constant 11 : index
    %c1_116 = arith.constant 1 : index
    %248 = memref.load %arg5[%c11_115, %c1_116] : memref<32x2xf32, #tpu.memory_space<smem>>
    %249 = vector.broadcast %248 : f32 to vector<4x128xf32>
    %250 = arith.mulf %249, %243 : vector<4x128xf32>
    %251 = arith.addf %231, %250 : vector<4x128xf32>
    %c0_117 = arith.constant 0 : index
    %c12 = arith.constant 12 : index
    %252 = memref.load %arg3[%c0_117, %c12] : memref<2x32xf32, #tpu.memory_space<smem>>
    %253 = vector.broadcast %252 : f32 to vector<4x128xf32>
    %254 = arith.mulf %253, %1 : vector<4x128xf32>
    %c1_118 = arith.constant 1 : index
    %c12_119 = arith.constant 12 : index
    %255 = memref.load %arg3[%c1_118, %c12_119] : memref<2x32xf32, #tpu.memory_space<smem>>
    %256 = vector.broadcast %255 : f32 to vector<4x128xf32>
    %257 = arith.mulf %256, %3 : vector<4x128xf32>
    %258 = arith.addf %254, %257 : vector<4x128xf32>
    %c12_120 = arith.constant 12 : index
    %259 = memref.load %arg4[%c12_120] : memref<32xf32, #tpu.memory_space<smem>>
    %260 = vector.broadcast %259 : f32 to vector<4x128xf32>
    %261 = arith.addf %258, %260 : vector<4x128xf32>
    %cst_121 = arith.constant 0.000000e+00 : f32
    %262 = vector.broadcast %cst_121 : f32 to vector<4x128xf32>
    %263 = arith.maximumf %261, %262 : vector<4x128xf32>
    %c12_122 = arith.constant 12 : index
    %c0_123 = arith.constant 0 : index
    %264 = memref.load %arg5[%c12_122, %c0_123] : memref<32x2xf32, #tpu.memory_space<smem>>
    %265 = vector.broadcast %264 : f32 to vector<4x128xf32>
    %266 = arith.mulf %265, %263 : vector<4x128xf32>
    %267 = arith.addf %247, %266 : vector<4x128xf32>
    %c12_124 = arith.constant 12 : index
    %c1_125 = arith.constant 1 : index
    %268 = memref.load %arg5[%c12_124, %c1_125] : memref<32x2xf32, #tpu.memory_space<smem>>
    %269 = vector.broadcast %268 : f32 to vector<4x128xf32>
    %270 = arith.mulf %269, %263 : vector<4x128xf32>
    %271 = arith.addf %251, %270 : vector<4x128xf32>
    %c0_126 = arith.constant 0 : index
    %c13 = arith.constant 13 : index
    %272 = memref.load %arg3[%c0_126, %c13] : memref<2x32xf32, #tpu.memory_space<smem>>
    %273 = vector.broadcast %272 : f32 to vector<4x128xf32>
    %274 = arith.mulf %273, %1 : vector<4x128xf32>
    %c1_127 = arith.constant 1 : index
    %c13_128 = arith.constant 13 : index
    %275 = memref.load %arg3[%c1_127, %c13_128] : memref<2x32xf32, #tpu.memory_space<smem>>
    %276 = vector.broadcast %275 : f32 to vector<4x128xf32>
    %277 = arith.mulf %276, %3 : vector<4x128xf32>
    %278 = arith.addf %274, %277 : vector<4x128xf32>
    %c13_129 = arith.constant 13 : index
    %279 = memref.load %arg4[%c13_129] : memref<32xf32, #tpu.memory_space<smem>>
    %280 = vector.broadcast %279 : f32 to vector<4x128xf32>
    %281 = arith.addf %278, %280 : vector<4x128xf32>
    %cst_130 = arith.constant 0.000000e+00 : f32
    %282 = vector.broadcast %cst_130 : f32 to vector<4x128xf32>
    %283 = arith.maximumf %281, %282 : vector<4x128xf32>
    %c13_131 = arith.constant 13 : index
    %c0_132 = arith.constant 0 : index
    %284 = memref.load %arg5[%c13_131, %c0_132] : memref<32x2xf32, #tpu.memory_space<smem>>
    %285 = vector.broadcast %284 : f32 to vector<4x128xf32>
    %286 = arith.mulf %285, %283 : vector<4x128xf32>
    %287 = arith.addf %267, %286 : vector<4x128xf32>
    %c13_133 = arith.constant 13 : index
    %c1_134 = arith.constant 1 : index
    %288 = memref.load %arg5[%c13_133, %c1_134] : memref<32x2xf32, #tpu.memory_space<smem>>
    %289 = vector.broadcast %288 : f32 to vector<4x128xf32>
    %290 = arith.mulf %289, %283 : vector<4x128xf32>
    %291 = arith.addf %271, %290 : vector<4x128xf32>
    %c0_135 = arith.constant 0 : index
    %c14 = arith.constant 14 : index
    %292 = memref.load %arg3[%c0_135, %c14] : memref<2x32xf32, #tpu.memory_space<smem>>
    %293 = vector.broadcast %292 : f32 to vector<4x128xf32>
    %294 = arith.mulf %293, %1 : vector<4x128xf32>
    %c1_136 = arith.constant 1 : index
    %c14_137 = arith.constant 14 : index
    %295 = memref.load %arg3[%c1_136, %c14_137] : memref<2x32xf32, #tpu.memory_space<smem>>
    %296 = vector.broadcast %295 : f32 to vector<4x128xf32>
    %297 = arith.mulf %296, %3 : vector<4x128xf32>
    %298 = arith.addf %294, %297 : vector<4x128xf32>
    %c14_138 = arith.constant 14 : index
    %299 = memref.load %arg4[%c14_138] : memref<32xf32, #tpu.memory_space<smem>>
    %300 = vector.broadcast %299 : f32 to vector<4x128xf32>
    %301 = arith.addf %298, %300 : vector<4x128xf32>
    %cst_139 = arith.constant 0.000000e+00 : f32
    %302 = vector.broadcast %cst_139 : f32 to vector<4x128xf32>
    %303 = arith.maximumf %301, %302 : vector<4x128xf32>
    %c14_140 = arith.constant 14 : index
    %c0_141 = arith.constant 0 : index
    %304 = memref.load %arg5[%c14_140, %c0_141] : memref<32x2xf32, #tpu.memory_space<smem>>
    %305 = vector.broadcast %304 : f32 to vector<4x128xf32>
    %306 = arith.mulf %305, %303 : vector<4x128xf32>
    %307 = arith.addf %287, %306 : vector<4x128xf32>
    %c14_142 = arith.constant 14 : index
    %c1_143 = arith.constant 1 : index
    %308 = memref.load %arg5[%c14_142, %c1_143] : memref<32x2xf32, #tpu.memory_space<smem>>
    %309 = vector.broadcast %308 : f32 to vector<4x128xf32>
    %310 = arith.mulf %309, %303 : vector<4x128xf32>
    %311 = arith.addf %291, %310 : vector<4x128xf32>
    %c0_144 = arith.constant 0 : index
    %c15 = arith.constant 15 : index
    %312 = memref.load %arg3[%c0_144, %c15] : memref<2x32xf32, #tpu.memory_space<smem>>
    %313 = vector.broadcast %312 : f32 to vector<4x128xf32>
    %314 = arith.mulf %313, %1 : vector<4x128xf32>
    %c1_145 = arith.constant 1 : index
    %c15_146 = arith.constant 15 : index
    %315 = memref.load %arg3[%c1_145, %c15_146] : memref<2x32xf32, #tpu.memory_space<smem>>
    %316 = vector.broadcast %315 : f32 to vector<4x128xf32>
    %317 = arith.mulf %316, %3 : vector<4x128xf32>
    %318 = arith.addf %314, %317 : vector<4x128xf32>
    %c15_147 = arith.constant 15 : index
    %319 = memref.load %arg4[%c15_147] : memref<32xf32, #tpu.memory_space<smem>>
    %320 = vector.broadcast %319 : f32 to vector<4x128xf32>
    %321 = arith.addf %318, %320 : vector<4x128xf32>
    %cst_148 = arith.constant 0.000000e+00 : f32
    %322 = vector.broadcast %cst_148 : f32 to vector<4x128xf32>
    %323 = arith.maximumf %321, %322 : vector<4x128xf32>
    %c15_149 = arith.constant 15 : index
    %c0_150 = arith.constant 0 : index
    %324 = memref.load %arg5[%c15_149, %c0_150] : memref<32x2xf32, #tpu.memory_space<smem>>
    %325 = vector.broadcast %324 : f32 to vector<4x128xf32>
    %326 = arith.mulf %325, %323 : vector<4x128xf32>
    %327 = arith.addf %307, %326 : vector<4x128xf32>
    %c15_151 = arith.constant 15 : index
    %c1_152 = arith.constant 1 : index
    %328 = memref.load %arg5[%c15_151, %c1_152] : memref<32x2xf32, #tpu.memory_space<smem>>
    %329 = vector.broadcast %328 : f32 to vector<4x128xf32>
    %330 = arith.mulf %329, %323 : vector<4x128xf32>
    %331 = arith.addf %311, %330 : vector<4x128xf32>
    %c0_153 = arith.constant 0 : index
    %c16 = arith.constant 16 : index
    %332 = memref.load %arg3[%c0_153, %c16] : memref<2x32xf32, #tpu.memory_space<smem>>
    %333 = vector.broadcast %332 : f32 to vector<4x128xf32>
    %334 = arith.mulf %333, %1 : vector<4x128xf32>
    %c1_154 = arith.constant 1 : index
    %c16_155 = arith.constant 16 : index
    %335 = memref.load %arg3[%c1_154, %c16_155] : memref<2x32xf32, #tpu.memory_space<smem>>
    %336 = vector.broadcast %335 : f32 to vector<4x128xf32>
    %337 = arith.mulf %336, %3 : vector<4x128xf32>
    %338 = arith.addf %334, %337 : vector<4x128xf32>
    %c16_156 = arith.constant 16 : index
    %339 = memref.load %arg4[%c16_156] : memref<32xf32, #tpu.memory_space<smem>>
    %340 = vector.broadcast %339 : f32 to vector<4x128xf32>
    %341 = arith.addf %338, %340 : vector<4x128xf32>
    %cst_157 = arith.constant 0.000000e+00 : f32
    %342 = vector.broadcast %cst_157 : f32 to vector<4x128xf32>
    %343 = arith.maximumf %341, %342 : vector<4x128xf32>
    %c16_158 = arith.constant 16 : index
    %c0_159 = arith.constant 0 : index
    %344 = memref.load %arg5[%c16_158, %c0_159] : memref<32x2xf32, #tpu.memory_space<smem>>
    %345 = vector.broadcast %344 : f32 to vector<4x128xf32>
    %346 = arith.mulf %345, %343 : vector<4x128xf32>
    %347 = arith.addf %327, %346 : vector<4x128xf32>
    %c16_160 = arith.constant 16 : index
    %c1_161 = arith.constant 1 : index
    %348 = memref.load %arg5[%c16_160, %c1_161] : memref<32x2xf32, #tpu.memory_space<smem>>
    %349 = vector.broadcast %348 : f32 to vector<4x128xf32>
    %350 = arith.mulf %349, %343 : vector<4x128xf32>
    %351 = arith.addf %331, %350 : vector<4x128xf32>
    %c0_162 = arith.constant 0 : index
    %c17 = arith.constant 17 : index
    %352 = memref.load %arg3[%c0_162, %c17] : memref<2x32xf32, #tpu.memory_space<smem>>
    %353 = vector.broadcast %352 : f32 to vector<4x128xf32>
    %354 = arith.mulf %353, %1 : vector<4x128xf32>
    %c1_163 = arith.constant 1 : index
    %c17_164 = arith.constant 17 : index
    %355 = memref.load %arg3[%c1_163, %c17_164] : memref<2x32xf32, #tpu.memory_space<smem>>
    %356 = vector.broadcast %355 : f32 to vector<4x128xf32>
    %357 = arith.mulf %356, %3 : vector<4x128xf32>
    %358 = arith.addf %354, %357 : vector<4x128xf32>
    %c17_165 = arith.constant 17 : index
    %359 = memref.load %arg4[%c17_165] : memref<32xf32, #tpu.memory_space<smem>>
    %360 = vector.broadcast %359 : f32 to vector<4x128xf32>
    %361 = arith.addf %358, %360 : vector<4x128xf32>
    %cst_166 = arith.constant 0.000000e+00 : f32
    %362 = vector.broadcast %cst_166 : f32 to vector<4x128xf32>
    %363 = arith.maximumf %361, %362 : vector<4x128xf32>
    %c17_167 = arith.constant 17 : index
    %c0_168 = arith.constant 0 : index
    %364 = memref.load %arg5[%c17_167, %c0_168] : memref<32x2xf32, #tpu.memory_space<smem>>
    %365 = vector.broadcast %364 : f32 to vector<4x128xf32>
    %366 = arith.mulf %365, %363 : vector<4x128xf32>
    %367 = arith.addf %347, %366 : vector<4x128xf32>
    %c17_169 = arith.constant 17 : index
    %c1_170 = arith.constant 1 : index
    %368 = memref.load %arg5[%c17_169, %c1_170] : memref<32x2xf32, #tpu.memory_space<smem>>
    %369 = vector.broadcast %368 : f32 to vector<4x128xf32>
    %370 = arith.mulf %369, %363 : vector<4x128xf32>
    %371 = arith.addf %351, %370 : vector<4x128xf32>
    %c0_171 = arith.constant 0 : index
    %c18 = arith.constant 18 : index
    %372 = memref.load %arg3[%c0_171, %c18] : memref<2x32xf32, #tpu.memory_space<smem>>
    %373 = vector.broadcast %372 : f32 to vector<4x128xf32>
    %374 = arith.mulf %373, %1 : vector<4x128xf32>
    %c1_172 = arith.constant 1 : index
    %c18_173 = arith.constant 18 : index
    %375 = memref.load %arg3[%c1_172, %c18_173] : memref<2x32xf32, #tpu.memory_space<smem>>
    %376 = vector.broadcast %375 : f32 to vector<4x128xf32>
    %377 = arith.mulf %376, %3 : vector<4x128xf32>
    %378 = arith.addf %374, %377 : vector<4x128xf32>
    %c18_174 = arith.constant 18 : index
    %379 = memref.load %arg4[%c18_174] : memref<32xf32, #tpu.memory_space<smem>>
    %380 = vector.broadcast %379 : f32 to vector<4x128xf32>
    %381 = arith.addf %378, %380 : vector<4x128xf32>
    %cst_175 = arith.constant 0.000000e+00 : f32
    %382 = vector.broadcast %cst_175 : f32 to vector<4x128xf32>
    %383 = arith.maximumf %381, %382 : vector<4x128xf32>
    %c18_176 = arith.constant 18 : index
    %c0_177 = arith.constant 0 : index
    %384 = memref.load %arg5[%c18_176, %c0_177] : memref<32x2xf32, #tpu.memory_space<smem>>
    %385 = vector.broadcast %384 : f32 to vector<4x128xf32>
    %386 = arith.mulf %385, %383 : vector<4x128xf32>
    %387 = arith.addf %367, %386 : vector<4x128xf32>
    %c18_178 = arith.constant 18 : index
    %c1_179 = arith.constant 1 : index
    %388 = memref.load %arg5[%c18_178, %c1_179] : memref<32x2xf32, #tpu.memory_space<smem>>
    %389 = vector.broadcast %388 : f32 to vector<4x128xf32>
    %390 = arith.mulf %389, %383 : vector<4x128xf32>
    %391 = arith.addf %371, %390 : vector<4x128xf32>
    %c0_180 = arith.constant 0 : index
    %c19 = arith.constant 19 : index
    %392 = memref.load %arg3[%c0_180, %c19] : memref<2x32xf32, #tpu.memory_space<smem>>
    %393 = vector.broadcast %392 : f32 to vector<4x128xf32>
    %394 = arith.mulf %393, %1 : vector<4x128xf32>
    %c1_181 = arith.constant 1 : index
    %c19_182 = arith.constant 19 : index
    %395 = memref.load %arg3[%c1_181, %c19_182] : memref<2x32xf32, #tpu.memory_space<smem>>
    %396 = vector.broadcast %395 : f32 to vector<4x128xf32>
    %397 = arith.mulf %396, %3 : vector<4x128xf32>
    %398 = arith.addf %394, %397 : vector<4x128xf32>
    %c19_183 = arith.constant 19 : index
    %399 = memref.load %arg4[%c19_183] : memref<32xf32, #tpu.memory_space<smem>>
    %400 = vector.broadcast %399 : f32 to vector<4x128xf32>
    %401 = arith.addf %398, %400 : vector<4x128xf32>
    %cst_184 = arith.constant 0.000000e+00 : f32
    %402 = vector.broadcast %cst_184 : f32 to vector<4x128xf32>
    %403 = arith.maximumf %401, %402 : vector<4x128xf32>
    %c19_185 = arith.constant 19 : index
    %c0_186 = arith.constant 0 : index
    %404 = memref.load %arg5[%c19_185, %c0_186] : memref<32x2xf32, #tpu.memory_space<smem>>
    %405 = vector.broadcast %404 : f32 to vector<4x128xf32>
    %406 = arith.mulf %405, %403 : vector<4x128xf32>
    %407 = arith.addf %387, %406 : vector<4x128xf32>
    %c19_187 = arith.constant 19 : index
    %c1_188 = arith.constant 1 : index
    %408 = memref.load %arg5[%c19_187, %c1_188] : memref<32x2xf32, #tpu.memory_space<smem>>
    %409 = vector.broadcast %408 : f32 to vector<4x128xf32>
    %410 = arith.mulf %409, %403 : vector<4x128xf32>
    %411 = arith.addf %391, %410 : vector<4x128xf32>
    %c0_189 = arith.constant 0 : index
    %c20 = arith.constant 20 : index
    %412 = memref.load %arg3[%c0_189, %c20] : memref<2x32xf32, #tpu.memory_space<smem>>
    %413 = vector.broadcast %412 : f32 to vector<4x128xf32>
    %414 = arith.mulf %413, %1 : vector<4x128xf32>
    %c1_190 = arith.constant 1 : index
    %c20_191 = arith.constant 20 : index
    %415 = memref.load %arg3[%c1_190, %c20_191] : memref<2x32xf32, #tpu.memory_space<smem>>
    %416 = vector.broadcast %415 : f32 to vector<4x128xf32>
    %417 = arith.mulf %416, %3 : vector<4x128xf32>
    %418 = arith.addf %414, %417 : vector<4x128xf32>
    %c20_192 = arith.constant 20 : index
    %419 = memref.load %arg4[%c20_192] : memref<32xf32, #tpu.memory_space<smem>>
    %420 = vector.broadcast %419 : f32 to vector<4x128xf32>
    %421 = arith.addf %418, %420 : vector<4x128xf32>
    %cst_193 = arith.constant 0.000000e+00 : f32
    %422 = vector.broadcast %cst_193 : f32 to vector<4x128xf32>
    %423 = arith.maximumf %421, %422 : vector<4x128xf32>
    %c20_194 = arith.constant 20 : index
    %c0_195 = arith.constant 0 : index
    %424 = memref.load %arg5[%c20_194, %c0_195] : memref<32x2xf32, #tpu.memory_space<smem>>
    %425 = vector.broadcast %424 : f32 to vector<4x128xf32>
    %426 = arith.mulf %425, %423 : vector<4x128xf32>
    %427 = arith.addf %407, %426 : vector<4x128xf32>
    %c20_196 = arith.constant 20 : index
    %c1_197 = arith.constant 1 : index
    %428 = memref.load %arg5[%c20_196, %c1_197] : memref<32x2xf32, #tpu.memory_space<smem>>
    %429 = vector.broadcast %428 : f32 to vector<4x128xf32>
    %430 = arith.mulf %429, %423 : vector<4x128xf32>
    %431 = arith.addf %411, %430 : vector<4x128xf32>
    %c0_198 = arith.constant 0 : index
    %c21 = arith.constant 21 : index
    %432 = memref.load %arg3[%c0_198, %c21] : memref<2x32xf32, #tpu.memory_space<smem>>
    %433 = vector.broadcast %432 : f32 to vector<4x128xf32>
    %434 = arith.mulf %433, %1 : vector<4x128xf32>
    %c1_199 = arith.constant 1 : index
    %c21_200 = arith.constant 21 : index
    %435 = memref.load %arg3[%c1_199, %c21_200] : memref<2x32xf32, #tpu.memory_space<smem>>
    %436 = vector.broadcast %435 : f32 to vector<4x128xf32>
    %437 = arith.mulf %436, %3 : vector<4x128xf32>
    %438 = arith.addf %434, %437 : vector<4x128xf32>
    %c21_201 = arith.constant 21 : index
    %439 = memref.load %arg4[%c21_201] : memref<32xf32, #tpu.memory_space<smem>>
    %440 = vector.broadcast %439 : f32 to vector<4x128xf32>
    %441 = arith.addf %438, %440 : vector<4x128xf32>
    %cst_202 = arith.constant 0.000000e+00 : f32
    %442 = vector.broadcast %cst_202 : f32 to vector<4x128xf32>
    %443 = arith.maximumf %441, %442 : vector<4x128xf32>
    %c21_203 = arith.constant 21 : index
    %c0_204 = arith.constant 0 : index
    %444 = memref.load %arg5[%c21_203, %c0_204] : memref<32x2xf32, #tpu.memory_space<smem>>
    %445 = vector.broadcast %444 : f32 to vector<4x128xf32>
    %446 = arith.mulf %445, %443 : vector<4x128xf32>
    %447 = arith.addf %427, %446 : vector<4x128xf32>
    %c21_205 = arith.constant 21 : index
    %c1_206 = arith.constant 1 : index
    %448 = memref.load %arg5[%c21_205, %c1_206] : memref<32x2xf32, #tpu.memory_space<smem>>
    %449 = vector.broadcast %448 : f32 to vector<4x128xf32>
    %450 = arith.mulf %449, %443 : vector<4x128xf32>
    %451 = arith.addf %431, %450 : vector<4x128xf32>
    %c0_207 = arith.constant 0 : index
    %c22 = arith.constant 22 : index
    %452 = memref.load %arg3[%c0_207, %c22] : memref<2x32xf32, #tpu.memory_space<smem>>
    %453 = vector.broadcast %452 : f32 to vector<4x128xf32>
    %454 = arith.mulf %453, %1 : vector<4x128xf32>
    %c1_208 = arith.constant 1 : index
    %c22_209 = arith.constant 22 : index
    %455 = memref.load %arg3[%c1_208, %c22_209] : memref<2x32xf32, #tpu.memory_space<smem>>
    %456 = vector.broadcast %455 : f32 to vector<4x128xf32>
    %457 = arith.mulf %456, %3 : vector<4x128xf32>
    %458 = arith.addf %454, %457 : vector<4x128xf32>
    %c22_210 = arith.constant 22 : index
    %459 = memref.load %arg4[%c22_210] : memref<32xf32, #tpu.memory_space<smem>>
    %460 = vector.broadcast %459 : f32 to vector<4x128xf32>
    %461 = arith.addf %458, %460 : vector<4x128xf32>
    %cst_211 = arith.constant 0.000000e+00 : f32
    %462 = vector.broadcast %cst_211 : f32 to vector<4x128xf32>
    %463 = arith.maximumf %461, %462 : vector<4x128xf32>
    %c22_212 = arith.constant 22 : index
    %c0_213 = arith.constant 0 : index
    %464 = memref.load %arg5[%c22_212, %c0_213] : memref<32x2xf32, #tpu.memory_space<smem>>
    %465 = vector.broadcast %464 : f32 to vector<4x128xf32>
    %466 = arith.mulf %465, %463 : vector<4x128xf32>
    %467 = arith.addf %447, %466 : vector<4x128xf32>
    %c22_214 = arith.constant 22 : index
    %c1_215 = arith.constant 1 : index
    %468 = memref.load %arg5[%c22_214, %c1_215] : memref<32x2xf32, #tpu.memory_space<smem>>
    %469 = vector.broadcast %468 : f32 to vector<4x128xf32>
    %470 = arith.mulf %469, %463 : vector<4x128xf32>
    %471 = arith.addf %451, %470 : vector<4x128xf32>
    %c0_216 = arith.constant 0 : index
    %c23 = arith.constant 23 : index
    %472 = memref.load %arg3[%c0_216, %c23] : memref<2x32xf32, #tpu.memory_space<smem>>
    %473 = vector.broadcast %472 : f32 to vector<4x128xf32>
    %474 = arith.mulf %473, %1 : vector<4x128xf32>
    %c1_217 = arith.constant 1 : index
    %c23_218 = arith.constant 23 : index
    %475 = memref.load %arg3[%c1_217, %c23_218] : memref<2x32xf32, #tpu.memory_space<smem>>
    %476 = vector.broadcast %475 : f32 to vector<4x128xf32>
    %477 = arith.mulf %476, %3 : vector<4x128xf32>
    %478 = arith.addf %474, %477 : vector<4x128xf32>
    %c23_219 = arith.constant 23 : index
    %479 = memref.load %arg4[%c23_219] : memref<32xf32, #tpu.memory_space<smem>>
    %480 = vector.broadcast %479 : f32 to vector<4x128xf32>
    %481 = arith.addf %478, %480 : vector<4x128xf32>
    %cst_220 = arith.constant 0.000000e+00 : f32
    %482 = vector.broadcast %cst_220 : f32 to vector<4x128xf32>
    %483 = arith.maximumf %481, %482 : vector<4x128xf32>
    %c23_221 = arith.constant 23 : index
    %c0_222 = arith.constant 0 : index
    %484 = memref.load %arg5[%c23_221, %c0_222] : memref<32x2xf32, #tpu.memory_space<smem>>
    %485 = vector.broadcast %484 : f32 to vector<4x128xf32>
    %486 = arith.mulf %485, %483 : vector<4x128xf32>
    %487 = arith.addf %467, %486 : vector<4x128xf32>
    %c23_223 = arith.constant 23 : index
    %c1_224 = arith.constant 1 : index
    %488 = memref.load %arg5[%c23_223, %c1_224] : memref<32x2xf32, #tpu.memory_space<smem>>
    %489 = vector.broadcast %488 : f32 to vector<4x128xf32>
    %490 = arith.mulf %489, %483 : vector<4x128xf32>
    %491 = arith.addf %471, %490 : vector<4x128xf32>
    %c0_225 = arith.constant 0 : index
    %c24 = arith.constant 24 : index
    %492 = memref.load %arg3[%c0_225, %c24] : memref<2x32xf32, #tpu.memory_space<smem>>
    %493 = vector.broadcast %492 : f32 to vector<4x128xf32>
    %494 = arith.mulf %493, %1 : vector<4x128xf32>
    %c1_226 = arith.constant 1 : index
    %c24_227 = arith.constant 24 : index
    %495 = memref.load %arg3[%c1_226, %c24_227] : memref<2x32xf32, #tpu.memory_space<smem>>
    %496 = vector.broadcast %495 : f32 to vector<4x128xf32>
    %497 = arith.mulf %496, %3 : vector<4x128xf32>
    %498 = arith.addf %494, %497 : vector<4x128xf32>
    %c24_228 = arith.constant 24 : index
    %499 = memref.load %arg4[%c24_228] : memref<32xf32, #tpu.memory_space<smem>>
    %500 = vector.broadcast %499 : f32 to vector<4x128xf32>
    %501 = arith.addf %498, %500 : vector<4x128xf32>
    %cst_229 = arith.constant 0.000000e+00 : f32
    %502 = vector.broadcast %cst_229 : f32 to vector<4x128xf32>
    %503 = arith.maximumf %501, %502 : vector<4x128xf32>
    %c24_230 = arith.constant 24 : index
    %c0_231 = arith.constant 0 : index
    %504 = memref.load %arg5[%c24_230, %c0_231] : memref<32x2xf32, #tpu.memory_space<smem>>
    %505 = vector.broadcast %504 : f32 to vector<4x128xf32>
    %506 = arith.mulf %505, %503 : vector<4x128xf32>
    %507 = arith.addf %487, %506 : vector<4x128xf32>
    %c24_232 = arith.constant 24 : index
    %c1_233 = arith.constant 1 : index
    %508 = memref.load %arg5[%c24_232, %c1_233] : memref<32x2xf32, #tpu.memory_space<smem>>
    %509 = vector.broadcast %508 : f32 to vector<4x128xf32>
    %510 = arith.mulf %509, %503 : vector<4x128xf32>
    %511 = arith.addf %491, %510 : vector<4x128xf32>
    %c0_234 = arith.constant 0 : index
    %c25 = arith.constant 25 : index
    %512 = memref.load %arg3[%c0_234, %c25] : memref<2x32xf32, #tpu.memory_space<smem>>
    %513 = vector.broadcast %512 : f32 to vector<4x128xf32>
    %514 = arith.mulf %513, %1 : vector<4x128xf32>
    %c1_235 = arith.constant 1 : index
    %c25_236 = arith.constant 25 : index
    %515 = memref.load %arg3[%c1_235, %c25_236] : memref<2x32xf32, #tpu.memory_space<smem>>
    %516 = vector.broadcast %515 : f32 to vector<4x128xf32>
    %517 = arith.mulf %516, %3 : vector<4x128xf32>
    %518 = arith.addf %514, %517 : vector<4x128xf32>
    %c25_237 = arith.constant 25 : index
    %519 = memref.load %arg4[%c25_237] : memref<32xf32, #tpu.memory_space<smem>>
    %520 = vector.broadcast %519 : f32 to vector<4x128xf32>
    %521 = arith.addf %518, %520 : vector<4x128xf32>
    %cst_238 = arith.constant 0.000000e+00 : f32
    %522 = vector.broadcast %cst_238 : f32 to vector<4x128xf32>
    %523 = arith.maximumf %521, %522 : vector<4x128xf32>
    %c25_239 = arith.constant 25 : index
    %c0_240 = arith.constant 0 : index
    %524 = memref.load %arg5[%c25_239, %c0_240] : memref<32x2xf32, #tpu.memory_space<smem>>
    %525 = vector.broadcast %524 : f32 to vector<4x128xf32>
    %526 = arith.mulf %525, %523 : vector<4x128xf32>
    %527 = arith.addf %507, %526 : vector<4x128xf32>
    %c25_241 = arith.constant 25 : index
    %c1_242 = arith.constant 1 : index
    %528 = memref.load %arg5[%c25_241, %c1_242] : memref<32x2xf32, #tpu.memory_space<smem>>
    %529 = vector.broadcast %528 : f32 to vector<4x128xf32>
    %530 = arith.mulf %529, %523 : vector<4x128xf32>
    %531 = arith.addf %511, %530 : vector<4x128xf32>
    %c0_243 = arith.constant 0 : index
    %c26 = arith.constant 26 : index
    %532 = memref.load %arg3[%c0_243, %c26] : memref<2x32xf32, #tpu.memory_space<smem>>
    %533 = vector.broadcast %532 : f32 to vector<4x128xf32>
    %534 = arith.mulf %533, %1 : vector<4x128xf32>
    %c1_244 = arith.constant 1 : index
    %c26_245 = arith.constant 26 : index
    %535 = memref.load %arg3[%c1_244, %c26_245] : memref<2x32xf32, #tpu.memory_space<smem>>
    %536 = vector.broadcast %535 : f32 to vector<4x128xf32>
    %537 = arith.mulf %536, %3 : vector<4x128xf32>
    %538 = arith.addf %534, %537 : vector<4x128xf32>
    %c26_246 = arith.constant 26 : index
    %539 = memref.load %arg4[%c26_246] : memref<32xf32, #tpu.memory_space<smem>>
    %540 = vector.broadcast %539 : f32 to vector<4x128xf32>
    %541 = arith.addf %538, %540 : vector<4x128xf32>
    %cst_247 = arith.constant 0.000000e+00 : f32
    %542 = vector.broadcast %cst_247 : f32 to vector<4x128xf32>
    %543 = arith.maximumf %541, %542 : vector<4x128xf32>
    %c26_248 = arith.constant 26 : index
    %c0_249 = arith.constant 0 : index
    %544 = memref.load %arg5[%c26_248, %c0_249] : memref<32x2xf32, #tpu.memory_space<smem>>
    %545 = vector.broadcast %544 : f32 to vector<4x128xf32>
    %546 = arith.mulf %545, %543 : vector<4x128xf32>
    %547 = arith.addf %527, %546 : vector<4x128xf32>
    %c26_250 = arith.constant 26 : index
    %c1_251 = arith.constant 1 : index
    %548 = memref.load %arg5[%c26_250, %c1_251] : memref<32x2xf32, #tpu.memory_space<smem>>
    %549 = vector.broadcast %548 : f32 to vector<4x128xf32>
    %550 = arith.mulf %549, %543 : vector<4x128xf32>
    %551 = arith.addf %531, %550 : vector<4x128xf32>
    %c0_252 = arith.constant 0 : index
    %c27 = arith.constant 27 : index
    %552 = memref.load %arg3[%c0_252, %c27] : memref<2x32xf32, #tpu.memory_space<smem>>
    %553 = vector.broadcast %552 : f32 to vector<4x128xf32>
    %554 = arith.mulf %553, %1 : vector<4x128xf32>
    %c1_253 = arith.constant 1 : index
    %c27_254 = arith.constant 27 : index
    %555 = memref.load %arg3[%c1_253, %c27_254] : memref<2x32xf32, #tpu.memory_space<smem>>
    %556 = vector.broadcast %555 : f32 to vector<4x128xf32>
    %557 = arith.mulf %556, %3 : vector<4x128xf32>
    %558 = arith.addf %554, %557 : vector<4x128xf32>
    %c27_255 = arith.constant 27 : index
    %559 = memref.load %arg4[%c27_255] : memref<32xf32, #tpu.memory_space<smem>>
    %560 = vector.broadcast %559 : f32 to vector<4x128xf32>
    %561 = arith.addf %558, %560 : vector<4x128xf32>
    %cst_256 = arith.constant 0.000000e+00 : f32
    %562 = vector.broadcast %cst_256 : f32 to vector<4x128xf32>
    %563 = arith.maximumf %561, %562 : vector<4x128xf32>
    %c27_257 = arith.constant 27 : index
    %c0_258 = arith.constant 0 : index
    %564 = memref.load %arg5[%c27_257, %c0_258] : memref<32x2xf32, #tpu.memory_space<smem>>
    %565 = vector.broadcast %564 : f32 to vector<4x128xf32>
    %566 = arith.mulf %565, %563 : vector<4x128xf32>
    %567 = arith.addf %547, %566 : vector<4x128xf32>
    %c27_259 = arith.constant 27 : index
    %c1_260 = arith.constant 1 : index
    %568 = memref.load %arg5[%c27_259, %c1_260] : memref<32x2xf32, #tpu.memory_space<smem>>
    %569 = vector.broadcast %568 : f32 to vector<4x128xf32>
    %570 = arith.mulf %569, %563 : vector<4x128xf32>
    %571 = arith.addf %551, %570 : vector<4x128xf32>
    %c0_261 = arith.constant 0 : index
    %c28 = arith.constant 28 : index
    %572 = memref.load %arg3[%c0_261, %c28] : memref<2x32xf32, #tpu.memory_space<smem>>
    %573 = vector.broadcast %572 : f32 to vector<4x128xf32>
    %574 = arith.mulf %573, %1 : vector<4x128xf32>
    %c1_262 = arith.constant 1 : index
    %c28_263 = arith.constant 28 : index
    %575 = memref.load %arg3[%c1_262, %c28_263] : memref<2x32xf32, #tpu.memory_space<smem>>
    %576 = vector.broadcast %575 : f32 to vector<4x128xf32>
    %577 = arith.mulf %576, %3 : vector<4x128xf32>
    %578 = arith.addf %574, %577 : vector<4x128xf32>
    %c28_264 = arith.constant 28 : index
    %579 = memref.load %arg4[%c28_264] : memref<32xf32, #tpu.memory_space<smem>>
    %580 = vector.broadcast %579 : f32 to vector<4x128xf32>
    %581 = arith.addf %578, %580 : vector<4x128xf32>
    %cst_265 = arith.constant 0.000000e+00 : f32
    %582 = vector.broadcast %cst_265 : f32 to vector<4x128xf32>
    %583 = arith.maximumf %581, %582 : vector<4x128xf32>
    %c28_266 = arith.constant 28 : index
    %c0_267 = arith.constant 0 : index
    %584 = memref.load %arg5[%c28_266, %c0_267] : memref<32x2xf32, #tpu.memory_space<smem>>
    %585 = vector.broadcast %584 : f32 to vector<4x128xf32>
    %586 = arith.mulf %585, %583 : vector<4x128xf32>
    %587 = arith.addf %567, %586 : vector<4x128xf32>
    %c28_268 = arith.constant 28 : index
    %c1_269 = arith.constant 1 : index
    %588 = memref.load %arg5[%c28_268, %c1_269] : memref<32x2xf32, #tpu.memory_space<smem>>
    %589 = vector.broadcast %588 : f32 to vector<4x128xf32>
    %590 = arith.mulf %589, %583 : vector<4x128xf32>
    %591 = arith.addf %571, %590 : vector<4x128xf32>
    %c0_270 = arith.constant 0 : index
    %c29 = arith.constant 29 : index
    %592 = memref.load %arg3[%c0_270, %c29] : memref<2x32xf32, #tpu.memory_space<smem>>
    %593 = vector.broadcast %592 : f32 to vector<4x128xf32>
    %594 = arith.mulf %593, %1 : vector<4x128xf32>
    %c1_271 = arith.constant 1 : index
    %c29_272 = arith.constant 29 : index
    %595 = memref.load %arg3[%c1_271, %c29_272] : memref<2x32xf32, #tpu.memory_space<smem>>
    %596 = vector.broadcast %595 : f32 to vector<4x128xf32>
    %597 = arith.mulf %596, %3 : vector<4x128xf32>
    %598 = arith.addf %594, %597 : vector<4x128xf32>
    %c29_273 = arith.constant 29 : index
    %599 = memref.load %arg4[%c29_273] : memref<32xf32, #tpu.memory_space<smem>>
    %600 = vector.broadcast %599 : f32 to vector<4x128xf32>
    %601 = arith.addf %598, %600 : vector<4x128xf32>
    %cst_274 = arith.constant 0.000000e+00 : f32
    %602 = vector.broadcast %cst_274 : f32 to vector<4x128xf32>
    %603 = arith.maximumf %601, %602 : vector<4x128xf32>
    %c29_275 = arith.constant 29 : index
    %c0_276 = arith.constant 0 : index
    %604 = memref.load %arg5[%c29_275, %c0_276] : memref<32x2xf32, #tpu.memory_space<smem>>
    %605 = vector.broadcast %604 : f32 to vector<4x128xf32>
    %606 = arith.mulf %605, %603 : vector<4x128xf32>
    %607 = arith.addf %587, %606 : vector<4x128xf32>
    %c29_277 = arith.constant 29 : index
    %c1_278 = arith.constant 1 : index
    %608 = memref.load %arg5[%c29_277, %c1_278] : memref<32x2xf32, #tpu.memory_space<smem>>
    %609 = vector.broadcast %608 : f32 to vector<4x128xf32>
    %610 = arith.mulf %609, %603 : vector<4x128xf32>
    %611 = arith.addf %591, %610 : vector<4x128xf32>
    %c0_279 = arith.constant 0 : index
    %c30 = arith.constant 30 : index
    %612 = memref.load %arg3[%c0_279, %c30] : memref<2x32xf32, #tpu.memory_space<smem>>
    %613 = vector.broadcast %612 : f32 to vector<4x128xf32>
    %614 = arith.mulf %613, %1 : vector<4x128xf32>
    %c1_280 = arith.constant 1 : index
    %c30_281 = arith.constant 30 : index
    %615 = memref.load %arg3[%c1_280, %c30_281] : memref<2x32xf32, #tpu.memory_space<smem>>
    %616 = vector.broadcast %615 : f32 to vector<4x128xf32>
    %617 = arith.mulf %616, %3 : vector<4x128xf32>
    %618 = arith.addf %614, %617 : vector<4x128xf32>
    %c30_282 = arith.constant 30 : index
    %619 = memref.load %arg4[%c30_282] : memref<32xf32, #tpu.memory_space<smem>>
    %620 = vector.broadcast %619 : f32 to vector<4x128xf32>
    %621 = arith.addf %618, %620 : vector<4x128xf32>
    %cst_283 = arith.constant 0.000000e+00 : f32
    %622 = vector.broadcast %cst_283 : f32 to vector<4x128xf32>
    %623 = arith.maximumf %621, %622 : vector<4x128xf32>
    %c30_284 = arith.constant 30 : index
    %c0_285 = arith.constant 0 : index
    %624 = memref.load %arg5[%c30_284, %c0_285] : memref<32x2xf32, #tpu.memory_space<smem>>
    %625 = vector.broadcast %624 : f32 to vector<4x128xf32>
    %626 = arith.mulf %625, %623 : vector<4x128xf32>
    %627 = arith.addf %607, %626 : vector<4x128xf32>
    %c30_286 = arith.constant 30 : index
    %c1_287 = arith.constant 1 : index
    %628 = memref.load %arg5[%c30_286, %c1_287] : memref<32x2xf32, #tpu.memory_space<smem>>
    %629 = vector.broadcast %628 : f32 to vector<4x128xf32>
    %630 = arith.mulf %629, %623 : vector<4x128xf32>
    %631 = arith.addf %611, %630 : vector<4x128xf32>
    %c0_288 = arith.constant 0 : index
    %c31 = arith.constant 31 : index
    %632 = memref.load %arg3[%c0_288, %c31] : memref<2x32xf32, #tpu.memory_space<smem>>
    %633 = vector.broadcast %632 : f32 to vector<4x128xf32>
    %634 = arith.mulf %633, %1 : vector<4x128xf32>
    %c1_289 = arith.constant 1 : index
    %c31_290 = arith.constant 31 : index
    %635 = memref.load %arg3[%c1_289, %c31_290] : memref<2x32xf32, #tpu.memory_space<smem>>
    %636 = vector.broadcast %635 : f32 to vector<4x128xf32>
    %637 = arith.mulf %636, %3 : vector<4x128xf32>
    %638 = arith.addf %634, %637 : vector<4x128xf32>
    %c31_291 = arith.constant 31 : index
    %639 = memref.load %arg4[%c31_291] : memref<32xf32, #tpu.memory_space<smem>>
    %640 = vector.broadcast %639 : f32 to vector<4x128xf32>
    %641 = arith.addf %638, %640 : vector<4x128xf32>
    %cst_292 = arith.constant 0.000000e+00 : f32
    %642 = vector.broadcast %cst_292 : f32 to vector<4x128xf32>
    %643 = arith.maximumf %641, %642 : vector<4x128xf32>
    %c31_293 = arith.constant 31 : index
    %c0_294 = arith.constant 0 : index
    %644 = memref.load %arg5[%c31_293, %c0_294] : memref<32x2xf32, #tpu.memory_space<smem>>
    %645 = vector.broadcast %644 : f32 to vector<4x128xf32>
    %646 = arith.mulf %645, %643 : vector<4x128xf32>
    %647 = arith.addf %627, %646 : vector<4x128xf32>
    %c31_295 = arith.constant 31 : index
    %c1_296 = arith.constant 1 : index
    %648 = memref.load %arg5[%c31_295, %c1_296] : memref<32x2xf32, #tpu.memory_space<smem>>
    %649 = vector.broadcast %648 : f32 to vector<4x128xf32>
    %650 = arith.mulf %649, %643 : vector<4x128xf32>
    %651 = arith.addf %631, %650 : vector<4x128xf32>
    %c0_297 = arith.constant 0 : index
    %c0_298 = arith.constant 0 : index
    %c0_299 = arith.constant 0 : index
    %c0_300 = arith.constant 0 : index
    %652 = vector.load %arg7[%c0_297, %c0_298, %c0_299, %c0_300] : memref<1x2x4x128xf32, #tpu.memory_space<vmem>>, vector<1x1x4x128xf32>
    %653 = vector.shape_cast %652 : vector<1x1x4x128xf32> to vector<4x128xf32>
    %654 = vector.shape_cast %647 : vector<4x128xf32> to vector<1x1x4x128xf32>
    tpu.vector_store %arg7[%c0_297, %c0_298, %c0_299, %c0_300], %654 {strides = array<i32>} : memref<1x2x4x128xf32, #tpu.memory_space<vmem>>, vector<1x1x4x128xf32>,
    %c0_301 = arith.constant 0 : index
    %c1_302 = arith.constant 1 : index
    %c0_303 = arith.constant 0 : index
    %c0_304 = arith.constant 0 : index
    %655 = vector.load %arg7[%c0_301, %c1_302, %c0_303, %c0_304] : memref<1x2x4x128xf32, #tpu.memory_space<vmem>>, vector<1x1x4x128xf32>
    %656 = vector.shape_cast %655 : vector<1x1x4x128xf32> to vector<4x128xf32>
    %657 = vector.shape_cast %651 : vector<4x128xf32> to vector<1x1x4x128xf32>
    tpu.vector_store %arg7[%c0_301, %c1_302, %c0_303, %c0_304], %657 {strides = array<i32>} : memref<1x2x4x128xf32, #tpu.memory_space<vmem>>, vector<1x1x4x128xf32>,
    return
  }
  func.func @transform_0(%arg0: i32) -> (i32, i32, i32) {
    %c0_i32 = arith.constant 0 : i32
    %c0_i32_0 = arith.constant 0 : i32
    %c0_i32_1 = arith.constant 0 : i32
    return %arg0, %c0_i32, %c0_i32_0 : i32, i32, i32
  }
  func.func @transform_1(%arg0: i32) -> (i32, i32, i32) {
    %c0_i32 = arith.constant 0 : i32
    %c0_i32_0 = arith.constant 0 : i32
    %c0_i32_1 = arith.constant 0 : i32
    return %arg0, %c0_i32, %c0_i32_0 : i32, i32, i32
  }
  func.func @transform_2(%arg0: i32) -> (i32, i32) {
    %c0_i32 = arith.constant 0 : i32
    %c0_i32_0 = arith.constant 0 : i32
    %c0_i32_1 = arith.constant 0 : i32
    return %c0_i32, %c0_i32_0 : i32, i32
  }
  func.func @transform_3(%arg0: i32) -> i32 {
    %c0_i32 = arith.constant 0 : i32
    %c0_i32_0 = arith.constant 0 : i32
    return %c0_i32 : i32
  }
  func.func @transform_4(%arg0: i32) -> (i32, i32) {
    %c0_i32 = arith.constant 0 : i32
    %c0_i32_0 = arith.constant 0 : i32
    %c0_i32_1 = arith.constant 0 : i32
    return %c0_i32, %c0_i32_0 : i32, i32
  }
  func.func @transform_5(%arg0: i32) -> i32 {
    %c0_i32 = arith.constant 0 : i32
    %c0_i32_0 = arith.constant 0 : i32
    return %c0_i32 : i32
  }
  func.func @transform_6(%arg0: i32) -> (i32, i32, i32, i32) {
    %c0_i32 = arith.constant 0 : i32
    %c0_i32_0 = arith.constant 0 : i32
    %c0_i32_1 = arith.constant 0 : i32
    %c0_i32_2 = arith.constant 0 : i32
    return %arg0, %c0_i32, %c0_i32_0, %c0_i32_1 : i32, i32, i32, i32
  }
}

</mosaic_0001>

<llo_original>
// kernel: forward.11
$region0: #{forward.11}
  #allocation0 [shape = 'u32[]', space=smem, size = 0x4, offset = 0x4, fixed_abs, tag = 'smem constant byte address 0x4 - core index']
  #allocation1 [shape = 'u32[72,128]{1,0:T(1,128)}', space=vmem, size = 0x9000, scoped, tag = 'internal scratch']
  %s0 = inlined_call_operand.vmem [shape: bf16[16,24], index: 0, kind: input, shape index: {}]
  %s1 = inlined_call_operand.vmem [shape: bf16[1,24,400], index: 1, kind: input, shape index: {}]
  %s2 = inlined_call_operand.vmem [shape: bf16[1,16,400], index: 2, kind: output, shape index: {}]
  %s3 = sld [smem:[#allocation0]]
  $region18: #{forward.11} parent=0
    _
  %s5 = ssub.s32 1, %s3
  %s6 = scalar_select 0, %s5, %s3
  // Predicated region
  $region2: #{forward.11} parent=0 // pred_check
    _
  $region3: #{forward.11} parent=0 // pred_check_branch
    %8 = sbr.rel (0) target = $region5
  $region4: #{forward.11} parent=0 // pred_region
    _
  $region5: #{forward.11} parent=0 // pred_fallthru
    _
  // Predicated region
  $region6: #{forward.11} parent=0 // pred_check
    _
  $region7: #{forward.11} parent=0 // pred_check_branch
    %10 = sbr.rel (0) target = $region9
  $region8: #{forward.11} parent=0 // pred_region
    _
  $region9: #{forward.11} parent=0 // pred_fallthru
    _
  %v12 = vld [vmem:[%s0] sm:$0xf]
  %v13 = vld [vmem:[%s0 + $0x4] sm:$0xf]
  %v14 = vld [vmem:[%s1] sm:$0xff]
  %v15 = vld [vmem:[%s1 + $0x8] sm:$0xff]
  %v16 = vld [vmem:[%s1 + $0x10] sm:$0xff]
  %v17 = vld [vmem:[%s1 + $0x18] sm:$0xff]
  %v18 = vld [vmem:[%s1 + $0x20] sm:$0xff]
  %v19 = vld [vmem:[%s1 + $0x28] sm:$0xff]
  %v22 = vunpack.c.l.b16 %v12
  %v23 = vunpack.c.l.b16 %v13
  %v24 = vpack.c.b16 %v23, %v22
  %v31 = vunpack.c.l.b16 %v14
  %v32 = vunpack.c.h.b16 %v14
  %v33 = vunpack.c.l.b16 %v15
  %v34 = vunpack.c.h.b16 %v15
  %v35 = vunpack.c.l.b16 %v16
  %v36 = vunpack.c.h.b16 %v16
  %v37 = vunpack.c.l.b16 %v17
  %v38 = vunpack.c.h.b16 %v17
  %v39 = vunpack.c.l.b16 %v18
  %v40 = vunpack.c.h.b16 %v18
  %v41 = vunpack.c.l.b16 %v19
  %v42 = vunpack.c.h.b16 %v19
  %v43 = vpack.c.b16 %v35, %v31
  %v44 = vpack.c.b16 %v36, %v32
  %v45 = vpack.c.b16 %v37, %v33
  %v46 = vpack.c.b16 %v38, %v34
  %v47 = vpack.c.b16 %v39, %v39
  %v48 = vpack.c.b16 %v40, %v40
  %v49 = vpack.c.b16 %v41, %v41
  %v50 = vpack.c.b16 %v42, %v42
  %vm55 = vcmask 195584
  %v57 = vsel %vm55, %v24, 0
  %vm59 = vcmask 1043456
  %v61 = vsel %vm59, %v47, 0
  %v64 = vsel %vm59, %v48, 0
  %v67 = vsel %vm59, %v49, 0
  %v70 = vsel %vm59, %v50, 0
  %72 = vmatpush.bf16.msra.mxu0 0
  %73 = vmatpush.bf16.msra.mxu0 0
  %74 = vmatpush.bf16.msra.mxu0 0
  %75 = vmatpush.bf16.msra.mxu0 0
  %76 = vmatpush.bf16.msra.mxu0 0
  %77 = vmatpush.bf16.msra.mxu0 0
  %78 = vmatpush.bf16.msra.mxu0 %v61
  %79 = vmatpush.bf16.msra.mxu0 %v43
  %80 = vmatmul.bf16.gmra.mxu0 %v57
  %v81 = vpop.f32.mrf.mxu0
  %v82 = vadd.f32 0.0, %v81
  %v83 = vpop.f32.mrf.mxu0
  %v84 = vadd.f32 0.0, %v83
  %85 = vdwg.mxu0
  %86 = vmatpush.bf16.msra.mxu0 0
  %87 = vmatpush.bf16.msra.mxu0 0
  %88 = vmatpush.bf16.msra.mxu0 0
  %89 = vmatpush.bf16.msra.mxu0 0
  %90 = vmatpush.bf16.msra.mxu0 0
  %91 = vmatpush.bf16.msra.mxu0 0
  %92 = vmatpush.bf16.msra.mxu0 %v64
  %93 = vmatpush.bf16.msra.mxu0 %v44
  %94 = vmatmul.bf16.gmra.mxu0 %v57
  %v95 = vpop.f32.mrf.mxu0
  %v96 = vadd.f32 0.0, %v95
  %v97 = vpop.f32.mrf.mxu0
  %v98 = vadd.f32 0.0, %v97
  %99 = vdwg.mxu0
  %100 = vmatpush.bf16.msra.mxu0 0
  %101 = vmatpush.bf16.msra.mxu0 0
  %102 = vmatpush.bf16.msra.mxu0 0
  %103 = vmatpush.bf16.msra.mxu0 0
  %104 = vmatpush.bf16.msra.mxu0 0
  %105 = vmatpush.bf16.msra.mxu0 0
  %106 = vmatpush.bf16.msra.mxu0 %v67
  %107 = vmatpush.bf16.msra.mxu0 %v45
  %108 = vmatmul.bf16.gmra.mxu0 %v57
  %v109 = vpop.f32.mrf.mxu0
  %v110 = vadd.f32 0.0, %v109
  %v111 = vpop.f32.mrf.mxu0
  %v112 = vadd.f32 0.0, %v111
  %113 = vdwg.mxu0
  %114 = vmatpush.bf16.msra.mxu0 0
  %115 = vmatpush.bf16.msra.mxu0 0
  %116 = vmatpush.bf16.msra.mxu0 0
  %117 = vmatpush.bf16.msra.mxu0 0
  %118 = vmatpush.bf16.msra.mxu0 0
  %119 = vmatpush.bf16.msra.mxu0 0
  %120 = vmatpush.bf16.msra.mxu0 %v70
  %121 = vmatpush.bf16.msra.mxu0 %v46
  %122 = vmatmul.bf16.gmra.mxu0 %v57
  %v123 = vpop.f32.mrf.mxu0
  %v124 = vadd.f32 0.0, %v123
  %v125 = vpop.f32.mrf.mxu0
  %v126 = vadd.f32 0.0, %v125
  %127 = vdwg.mxu0
  %v128 = vpack.c.bf16 %v96, %v82
  %v129 = vpack.c.bf16 %v124, %v110
  %v130 = vpack.c.bf16 %v98, %v84
  %v131 = vpack.c.bf16 %v126, %v112
  %132 = vst [vmem:[%s2] sm:$0xff] %v128
  %vm133 = vcmask 130052
  %vm134 = vmor %vm133, %vm59
  %135 = vst.msk [vmem:[%s2 + $0x8] sm:$0xff] %vm134, %v129
  %136 = vst [vmem:[%s2 + $0x10] sm:$0xff] %v130
  %137 = vst.msk [vmem:[%s2 + $0x18] sm:$0xff] %vm134, %v131
  // Predicated region
  $region10: #{forward.11} parent=0 // pred_check
    _
  $region11: #{forward.11} parent=0 // pred_check_branch
    %139 = sbr.rel (0) target = $region13
  $region12: #{forward.11} parent=0 // pred_region
    _
  $region13: #{forward.11} parent=0 // pred_fallthru
    _
  // Predicated region
  $region14: #{forward.11} parent=0 // pred_check
    _
  $region15: #{forward.11} parent=0 // pred_check_branch
    %141 = sbr.rel (0) target = $region17
  $region16: #{forward.11} parent=0 // pred_region
    _
  $region17: #{forward.11} parent=0 // pred_fallthru
    _

// kernel: forward.12
$region0: #{forward.12}
  #allocation0 [shape = 'u32[]', space=smem, size = 0x4, offset = 0x4, fixed_abs, tag = 'smem constant byte address 0x4 - core index']
  #allocation1 [shape = 'u32[72,128]{1,0:T(1,128)}', space=vmem, size = 0x9000, scoped, tag = 'internal scratch']
  #allocation2 [shape = 'f32[16,256]{1,0:T(8,128)}', space=vmem, size = 0x4000, scoped, tag = 'scratch operand']
  %s0 = inlined_call_operand.vmem [shape: bf16[16,400], index: 0, kind: input, shape index: {}]
  %s1 = inlined_call_operand.vmem [shape: bf16[400,256], index: 1, kind: input, shape index: {}]
  %s2 = inlined_call_operand.vmem [shape: f32[16,256], index: 2, kind: output, shape index: {}]
  %s3 = sld [smem:[#allocation0]]
  $region26: #{forward.12} parent=0
    _
  %s5 = ssub.s32 1, %s3
  %s6 = scalar_select 0, %s5, %s3
  // Predicated region
  $region2: #{forward.12} parent=0 // pred_check
    _
  $region3: #{forward.12} parent=0 // pred_check_branch
    %8 = sbr.rel (0) target = $region5
  $region4: #{forward.12} parent=0 // pred_region
    _
  $region5: #{forward.12} parent=0 // pred_fallthru
    _
  // Predicated region
  $region6: #{forward.12} parent=0 // pred_check
    _
  $region7: #{forward.12} parent=0 // pred_check_branch
    %10 = sbr.rel (0) target = $region9
  $region8: #{forward.12} parent=0 // pred_region
    _
  $region9: #{forward.12} parent=0 // pred_fallthru
    _
  %p12 = scmp.eq.s32.totalorder 0, 0
  // Predicated region
  $region10: #{forward.12} parent=0 // pred_check
    %p13 = pneg %p12
  $region11: #{forward.12} parent=0 // pred_check_branch
    %15 = sbr.rel (%p13) target = $region13
  $region12: #{forward.12} parent=0 // pred_region
    %16 = vst [vmem:[#allocation2] sm:$0xff] 0.0
    %17 = vst [vmem:[#allocation2 + $0x8] sm:$0xff] 0.0
    %18 = vst [vmem:[#allocation2 + $0x10] sm:$0xff] 0.0
    %19 = vst [vmem:[#allocation2 + $0x18] sm:$0xff] 0.0
  $region13: #{forward.12} parent=0 // pred_fallthru
    _
  %v20 = vld [vmem:[#allocation2] sm:$0xff]
  %v21 = vld [vmem:[#allocation2 + $0x8] sm:$0xff]
  %v22 = vld [vmem:[#allocation2 + $0x10] sm:$0xff]
  %v23 = vld [vmem:[#allocation2 + $0x18] sm:$0xff]
  %v24 = vld [vmem:[%s0] sm:$0xff]
  %v25 = vld [vmem:[%s0 + $0x8] sm:$0xff]
  %v26 = vld [vmem:[%s0 + $0x10] sm:$0xff]
  %v27 = vld [vmem:[%s0 + $0x18] sm:$0xff]
  %v28 = vld [vmem:[%s1] sm:$0xff]
  %v29 = vld [vmem:[%s1 + $0x8] sm:$0xff]
  %v30 = vld [vmem:[%s1 + $0x10] sm:$0xff]
  %v31 = vld [vmem:[%s1 + $0x18] sm:$0xff]
  %v32 = vld [vmem:[%s1 + $0x20] sm:$0xff]
  %v33 = vld [vmem:[%s1 + $0x28] sm:$0xff]
  %v34 = vld [vmem:[%s1 + $0x30] sm:$0xff]
  %v35 = vld [vmem:[%s1 + $0x38] sm:$0xff]
  %v36 = vld [vmem:[%s1 + $0x40] sm:$0xff]
  %v37 = vld [vmem:[%s1 + $0x48] sm:$0xff]
  %v38 = vld [vmem:[%s1 + $0x50] sm:$0xff]
  %v39 = vld [vmem:[%s1 + $0x58] sm:$0xff]
  %v40 = vld [vmem:[%s1 + $0x60] sm:$0xff]
  %v41 = vld [vmem:[%s1 + $0x68] sm:$0xff]
  %v42 = vld [vmem:[%s1 + $0x70] sm:$0xff]
  %v43 = vld [vmem:[%s1 + $0x78] sm:$0xff]
  %v44 = vld [vmem:[%s1 + $0x80] sm:$0xff]
  %v45 = vld [vmem:[%s1 + $0x88] sm:$0xff]
  %v46 = vld [vmem:[%s1 + $0x90] sm:$0xff]
  %v47 = vld [vmem:[%s1 + $0x98] sm:$0xff]
  %v48 = vld [vmem:[%s1 + $0xa0] sm:$0xff]
  %v49 = vld [vmem:[%s1 + $0xa8] sm:$0xff]
  %v50 = vld [vmem:[%s1 + $0xb0] sm:$0xff]
  %v51 = vld [vmem:[%s1 + $0xb8] sm:$0xff]
  %v52 = vld [vmem:[%s1 + $0xc0] sm:$0xff]
  %v53 = vld [vmem:[%s1 + $0xc8] sm:$0xff]
  %v54 = vld [vmem:[%s1 + $0xd0] sm:$0xff]
  %v55 = vld [vmem:[%s1 + $0xd8] sm:$0xff]
  %v56 = vld [vmem:[%s1 + $0xe0] sm:$0xff]
  %v57 = vld [vmem:[%s1 + $0xe8] sm:$0xff]
  %v58 = vld [vmem:[%s1 + $0xf0] sm:$0xff]
  %v59 = vld [vmem:[%s1 + $0xf8] sm:$0xff]
  %v60 = vld [vmem:[%s1 + $0x100] sm:$0xff]
  %v61 = vld [vmem:[%s1 + $0x108] sm:$0xff]
  %v62 = vld [vmem:[%s1 + $0x110] sm:$0xff]
  %v63 = vld [vmem:[%s1 + $0x118] sm:$0xff]
  %v64 = vld [vmem:[%s1 + $0x120] sm:$0xff]
  %v65 = vld [vmem:[%s1 + $0x128] sm:$0xff]
  %v66 = vld [vmem:[%s1 + $0x130] sm:$0xff]
  %v67 = vld [vmem:[%s1 + $0x138] sm:$0xff]
  %v68 = vld [vmem:[%s1 + $0x140] sm:$0xff]
  %v69 = vld [vmem:[%s1 + $0x148] sm:$0xff]
  %v70 = vld [vmem:[%s1 + $0x150] sm:$0xff]
  %v71 = vld [vmem:[%s1 + $0x158] sm:$0xff]
  %v72 = vld [vmem:[%s1 + $0x160] sm:$0xff]
  %v73 = vld [vmem:[%s1 + $0x168] sm:$0xff]
  %v74 = vld [vmem:[%s1 + $0x170] sm:$0xff]
  %v75 = vld [vmem:[%s1 + $0x178] sm:$0xff]
  %v76 = vld [vmem:[%s1 + $0x180] sm:$0xff]
  %v77 = vld [vmem:[%s1 + $0x188] sm:$0xff]
  %v82 = vunpack.c.l.b16 %v24
  %v83 = vunpack.c.h.b16 %v24
  %v84 = vunpack.c.l.b16 %v25
  %v85 = vunpack.c.h.b16 %v25
  %v86 = vunpack.c.l.b16 %v26
  %v87 = vunpack.c.h.b16 %v26
  %v88 = vunpack.c.l.b16 %v27
  %v89 = vunpack.c.h.b16 %v27
  %v90 = vpack.c.b16 %v86, %v82
  %v91 = vpack.c.b16 %v87, %v83
  %v92 = vpack.c.b16 %v88, %v84
  %v93 = vpack.c.b16 %v89, %v85
  %v147 = vunpack.c.l.b16 %v28
  %v148 = vunpack.c.h.b16 %v28
  %v149 = vunpack.c.l.b16 %v29
  %v150 = vunpack.c.h.b16 %v29
  %v151 = vunpack.c.l.b16 %v30
  %v152 = vunpack.c.h.b16 %v30
  %v153 = vunpack.c.l.b16 %v31
  %v154 = vunpack.c.h.b16 %v31
  %v155 = vunpack.c.l.b16 %v32
  %v156 = vunpack.c.h.b16 %v32
  %v157 = vunpack.c.l.b16 %v33
  %v158 = vunpack.c.h.b16 %v33
  %v159 = vunpack.c.l.b16 %v34
  %v160 = vunpack.c.h.b16 %v34
  %v161 = vunpack.c.l.b16 %v35
  %v162 = vunpack.c.h.b16 %v35
  %v163 = vunpack.c.l.b16 %v36
  %v164 = vunpack.c.h.b16 %v36
  %v165 = vunpack.c.l.b16 %v37
  %v166 = vunpack.c.h.b16 %v37
  %v167 = vunpack.c.l.b16 %v38
  %v168 = vunpack.c.h.b16 %v38
  %v169 = vunpack.c.l.b16 %v39
  %v170 = vunpack.c.h.b16 %v39
  %v171 = vunpack.c.l.b16 %v40
  %v172 = vunpack.c.h.b16 %v40
  %v173 = vunpack.c.l.b16 %v41
  %v174 = vunpack.c.h.b16 %v41
  %v175 = vunpack.c.l.b16 %v42
  %v176 = vunpack.c.h.b16 %v42
  %v177 = vunpack.c.l.b16 %v43
  %v178 = vunpack.c.h.b16 %v43
  %v179 = vunpack.c.l.b16 %v44
  %v180 = vunpack.c.h.b16 %v44
  %v181 = vunpack.c.l.b16 %v45
  %v182 = vunpack.c.h.b16 %v45
  %v183 = vunpack.c.l.b16 %v46
  %v184 = vunpack.c.h.b16 %v46
  %v185 = vunpack.c.l.b16 %v47
  %v186 = vunpack.c.h.b16 %v47
  %v187 = vunpack.c.l.b16 %v48
  %v188 = vunpack.c.h.b16 %v48
  %v189 = vunpack.c.l.b16 %v49
  %v190 = vunpack.c.h.b16 %v49
  %v191 = vunpack.c.l.b16 %v50
  %v192 = vunpack.c.h.b16 %v50
  %v193 = vunpack.c.l.b16 %v51
  %v194 = vunpack.c.h.b16 %v51
  %v195 = vunpack.c.l.b16 %v52
  %v196 = vunpack.c.h.b16 %v52
  %v197 = vunpack.c.l.b16 %v53
  %v198 = vunpack.c.h.b16 %v53
  %v199 = vunpack.c.l.b16 %v54
  %v200 = vunpack.c.h.b16 %v54
  %v201 = vunpack.c.l.b16 %v55
  %v202 = vunpack.c.h.b16 %v55
  %v203 = vunpack.c.l.b16 %v56
  %v204 = vunpack.c.h.b16 %v56
  %v205 = vunpack.c.l.b16 %v57
  %v206 = vunpack.c.h.b16 %v57
  %v207 = vunpack.c.l.b16 %v58
  %v208 = vunpack.c.h.b16 %v58
  %v209 = vunpack.c.l.b16 %v59
  %v210 = vunpack.c.h.b16 %v59
  %v211 = vunpack.c.l.b16 %v60
  %v212 = vunpack.c.h.b16 %v60
  %v213 = vunpack.c.l.b16 %v61
  %v214 = vunpack.c.h.b16 %v61
  %v215 = vunpack.c.l.b16 %v62
  %v216 = vunpack.c.h.b16 %v62
  %v217 = vunpack.c.l.b16 %v63
  %v218 = vunpack.c.h.b16 %v63
  %v219 = vunpack.c.l.b16 %v64
  %v220 = vunpack.c.h.b16 %v64
  %v221 = vunpack.c.l.b16 %v65
  %v222 = vunpack.c.h.b16 %v65
  %v223 = vunpack.c.l.b16 %v66
  %v224 = vunpack.c.h.b16 %v66
  %v225 = vunpack.c.l.b16 %v67
  %v226 = vunpack.c.h.b16 %v67
  %v227 = vunpack.c.l.b16 %v68
  %v228 = vunpack.c.h.b16 %v68
  %v229 = vunpack.c.l.b16 %v69
  %v230 = vunpack.c.h.b16 %v69
  %v231 = vunpack.c.l.b16 %v70
  %v232 = vunpack.c.h.b16 %v70
  %v233 = vunpack.c.l.b16 %v71
  %v234 = vunpack.c.h.b16 %v71
  %v235 = vunpack.c.l.b16 %v72
  %v236 = vunpack.c.h.b16 %v72
  %v237 = vunpack.c.l.b16 %v73
  %v238 = vunpack.c.h.b16 %v73
  %v239 = vunpack.c.l.b16 %v74
  %v240 = vunpack.c.h.b16 %v74
  %v241 = vunpack.c.l.b16 %v75
  %v242 = vunpack.c.h.b16 %v75
  %v243 = vunpack.c.l.b16 %v76
  %v244 = vunpack.c.h.b16 %v76
  %v245 = vunpack.c.l.b16 %v77
  %v246 = vunpack.c.h.b16 %v77
  %v247 = vpack.c.b16 %v149, %v147
  %v248 = vpack.c.b16 %v150, %v148
  %v249 = vpack.c.b16 %v153, %v151
  %v250 = vpack.c.b16 %v154, %v152
  %v251 = vpack.c.b16 %v157, %v155
  %v252 = vpack.c.b16 %v158, %v156
  %v253 = vpack.c.b16 %v161, %v159
  %v254 = vpack.c.b16 %v162, %v160
  %v255 = vpack.c.b16 %v165, %v163
  %v256 = vpack.c.b16 %v166, %v164
  %v257 = vpack.c.b16 %v169, %v167
  %v258 = vpack.c.b16 %v170, %v168
  %v259 = vpack.c.b16 %v173, %v171
  %v260 = vpack.c.b16 %v174, %v172
  %v261 = vpack.c.b16 %v177, %v175
  %v262 = vpack.c.b16 %v178, %v176
  %v263 = vpack.c.b16 %v181, %v179
  %v264 = vpack.c.b16 %v182, %v180
  %v265 = vpack.c.b16 %v185, %v183
  %v266 = vpack.c.b16 %v186, %v184
  %v267 = vpack.c.b16 %v189, %v187
  %v268 = vpack.c.b16 %v190, %v188
  %v269 = vpack.c.b16 %v193, %v191
  %v270 = vpack.c.b16 %v194, %v192
  %v271 = vpack.c.b16 %v197, %v195
  %v272 = vpack.c.b16 %v198, %v196
  %v273 = vpack.c.b16 %v201, %v199
  %v274 = vpack.c.b16 %v202, %v200
  %v275 = vpack.c.b16 %v205, %v203
  %v276 = vpack.c.b16 %v206, %v204
  %v277 = vpack.c.b16 %v209, %v207
  %v278 = vpack.c.b16 %v210, %v208
  %v279 = vpack.c.b16 %v213, %v211
  %v280 = vpack.c.b16 %v214, %v212
  %v281 = vpack.c.b16 %v217, %v215
  %v282 = vpack.c.b16 %v218, %v216
  %v283 = vpack.c.b16 %v221, %v219
  %v284 = vpack.c.b16 %v222, %v220
  %v285 = vpack.c.b16 %v225, %v223
  %v286 = vpack.c.b16 %v226, %v224
  %v287 = vpack.c.b16 %v229, %v227
  %v288 = vpack.c.b16 %v230, %v228
  %v289 = vpack.c.b16 %v233, %v231
  %v290 = vpack.c.b16 %v234, %v232
  %v291 = vpack.c.b16 %v237, %v235
  %v292 = vpack.c.b16 %v238, %v236
  %v293 = vpack.c.b16 %v241, %v239
  %v294 = vpack.c.b16 %v242, %v240
  %v295 = vpack.c.b16 %v245, %v243
  %v296 = vpack.c.b16 %v246, %v244
  %vm347 = vcmask 130048
  %v349 = vsel %vm347, %v93, 0
  %351 = vmatpush.bf16.msra.mxu0 %v261
  %352 = vmatpush.bf16.msra.mxu0 %v259
  %353 = vmatpush.bf16.msra.mxu0 %v257
  %354 = vmatpush.bf16.msra.mxu0 %v255
  %355 = vmatpush.bf16.msra.mxu0 %v253
  %356 = vmatpush.bf16.msra.mxu0 %v251
  %357 = vmatpush.bf16.msra.mxu0 %v249
  %358 = vmatpush.bf16.msra.mxu0 %v247
  %359 = vmatmul.bf16.gmra.mxu0 %v90
  %v360 = vpop.f32.mrf.mxu0
  %v361 = vadd.f32 0.0, %v360
  %v362 = vpop.f32.mrf.mxu0
  %v363 = vadd.f32 0.0, %v362
  %364 = vdwg.mxu0
  %365 = vmatpush.bf16.msra.mxu0 %v277
  %366 = vmatpush.bf16.msra.mxu0 %v275
  %367 = vmatpush.bf16.msra.mxu0 %v273
  %368 = vmatpush.bf16.msra.mxu0 %v271
  %369 = vmatpush.bf16.msra.mxu0 %v269
  %370 = vmatpush.bf16.msra.mxu0 %v267
  %371 = vmatpush.bf16.msra.mxu0 %v265
  %372 = vmatpush.bf16.msra.mxu0 %v263
  %373 = vmatmul.bf16.gmra.mxu0 %v91
  %v374 = vpop.f32.mrf.mxu0
  %v375 = vadd.f32 %v361, %v374
  %v376 = vpop.f32.mrf.mxu0
  %v377 = vadd.f32 %v363, %v376
  %378 = vdwg.mxu0
  %379 = vmatpush.bf16.msra.mxu0 %v293
  %380 = vmatpush.bf16.msra.mxu0 %v291
  %381 = vmatpush.bf16.msra.mxu0 %v289
  %382 = vmatpush.bf16.msra.mxu0 %v287
  %383 = vmatpush.bf16.msra.mxu0 %v285
  %384 = vmatpush.bf16.msra.mxu0 %v283
  %385 = vmatpush.bf16.msra.mxu0 %v281
  %386 = vmatpush.bf16.msra.mxu0 %v279
  %387 = vmatmul.bf16.gmra.mxu0 %v92
  %v388 = vpop.f32.mrf.mxu0
  %v389 = vadd.f32 %v375, %v388
  %v390 = vpop.f32.mrf.mxu0
  %v391 = vadd.f32 %v377, %v390
  %392 = vdwg.mxu0
  %393 = vmatpush.bf16.msra.mxu0 0
  %394 = vmatpush.bf16.msra.mxu0 0
  %395 = vmatpush.bf16.msra.mxu0 0
  %396 = vmatpush.bf16.msra.mxu0 0
  %397 = vmatpush.bf16.msra.mxu0 0
  %398 = vmatpush.bf16.msra.mxu0 0
  %399 = vmatpush.bf16.msra.mxu0 0
  %400 = vmatpush.bf16.msra.mxu0 %v295
  %401 = vmatmul.bf16.gmra.mxu0 %v349
  %v402 = vpop.f32.mrf.mxu0
  %v403 = vadd.f32 %v389, %v402
  %v404 = vpop.f32.mrf.mxu0
  %v405 = vadd.f32 %v391, %v404
  %406 = vdwg.mxu0
  %407 = vmatpush.bf16.msra.mxu0 %v262
  %408 = vmatpush.bf16.msra.mxu0 %v260
  %409 = vmatpush.bf16.msra.mxu0 %v258
  %410 = vmatpush.bf16.msra.mxu0 %v256
  %411 = vmatpush.bf16.msra.mxu0 %v254
  %412 = vmatpush.bf16.msra.mxu0 %v252
  %413 = vmatpush.bf16.msra.mxu0 %v250
  %414 = vmatpush.bf16.msra.mxu0 %v248
  %415 = vmatmul.bf16.gmra.mxu0 %v90
  %v416 = vpop.f32.mrf.mxu0
  %v417 = vadd.f32 0.0, %v416
  %v418 = vpop.f32.mrf.mxu0
  %v419 = vadd.f32 0.0, %v418
  %420 = vdwg.mxu0
  %421 = vmatpush.bf16.msra.mxu0 %v278
  %422 = vmatpush.bf16.msra.mxu0 %v276
  %423 = vmatpush.bf16.msra.mxu0 %v274
  %424 = vmatpush.bf16.msra.mxu0 %v272
  %425 = vmatpush.bf16.msra.mxu0 %v270
  %426 = vmatpush.bf16.msra.mxu0 %v268
  %427 = vmatpush.bf16.msra.mxu0 %v266
  %428 = vmatpush.bf16.msra.mxu0 %v264
  %429 = vmatmul.bf16.gmra.mxu0 %v91
  %v430 = vpop.f32.mrf.mxu0
  %v431 = vadd.f32 %v417, %v430
  %v432 = vpop.f32.mrf.mxu0
  %v433 = vadd.f32 %v419, %v432
  %434 = vdwg.mxu0
  %435 = vmatpush.bf16.msra.mxu0 %v294
  %436 = vmatpush.bf16.msra.mxu0 %v292
  %437 = vmatpush.bf16.msra.mxu0 %v290
  %438 = vmatpush.bf16.msra.mxu0 %v288
  %439 = vmatpush.bf16.msra.mxu0 %v286
  %440 = vmatpush.bf16.msra.mxu0 %v284
  %441 = vmatpush.bf16.msra.mxu0 %v282
  %442 = vmatpush.bf16.msra.mxu0 %v280
  %443 = vmatmul.bf16.gmra.mxu0 %v92
  %v444 = vpop.f32.mrf.mxu0
  %v445 = vadd.f32 %v431, %v444
  %v446 = vpop.f32.mrf.mxu0
  %v447 = vadd.f32 %v433, %v446
  %448 = vdwg.mxu0
  %449 = vmatpush.bf16.msra.mxu0 0
  %450 = vmatpush.bf16.msra.mxu0 0
  %451 = vmatpush.bf16.msra.mxu0 0
  %452 = vmatpush.bf16.msra.mxu0 0
  %453 = vmatpush.bf16.msra.mxu0 0
  %454 = vmatpush.bf16.msra.mxu0 0
  %455 = vmatpush.bf16.msra.mxu0 0
  %456 = vmatpush.bf16.msra.mxu0 %v296
  %457 = vmatmul.bf16.gmra.mxu0 %v349
  %v458 = vpop.f32.mrf.mxu0
  %v459 = vadd.f32 %v445, %v458
  %v460 = vpop.f32.mrf.mxu0
  %v461 = vadd.f32 %v447, %v460
  %462 = vdwg.mxu0
  %v463 = vadd.f32 %v20, %v403
  %v464 = vadd.f32 %v21, %v459
  %v465 = vadd.f32 %v22, %v405
  %v466 = vadd.f32 %v23, %v461
  %467 = vst [vmem:[#allocation2] sm:$0xff] %v463
  %468 = vst [vmem:[#allocation2 + $0x8] sm:$0xff] %v464
  %469 = vst [vmem:[#allocation2 + $0x10] sm:$0xff] %v465
  %470 = vst [vmem:[#allocation2 + $0x18] sm:$0xff] %v466
  // Predicated region
  $region14: #{forward.12} parent=0 // pred_check
    %p471 = pneg %p12
  $region15: #{forward.12} parent=0 // pred_check_branch
    %473 = sbr.rel (%p471) target = $region17
  $region16: #{forward.12} parent=0 // pred_region
    %v474 = vld [vmem:[#allocation2] sm:$0xff]
    %v475 = vld [vmem:[#allocation2 + $0x8] sm:$0xff]
    %v476 = vld [vmem:[#allocation2 + $0x10] sm:$0xff]
    %v477 = vld [vmem:[#allocation2 + $0x18] sm:$0xff]
    %478 = vst [vmem:[%s2] sm:$0xff] %v474
    %479 = vst [vmem:[%s2 + $0x8] sm:$0xff] %v475
    %480 = vst [vmem:[%s2 + $0x10] sm:$0xff] %v476
    %481 = vst [vmem:[%s2 + $0x18] sm:$0xff] %v477
  $region17: #{forward.12} parent=0 // pred_fallthru
    _
  // Predicated region
  $region18: #{forward.12} parent=0 // pred_check
    _
  $region19: #{forward.12} parent=0 // pred_check_branch
    %483 = sbr.rel (0) target = $region21
  $region20: #{forward.12} parent=0 // pred_region
    _
  $region21: #{forward.12} parent=0 // pred_fallthru
    _
  // Predicated region
  $region22: #{forward.12} parent=0 // pred_check
    _
  $region23: #{forward.12} parent=0 // pred_check_branch
    %485 = sbr.rel (0) target = $region25
  $region24: #{forward.12} parent=0 // pred_region
    _
  $region25: #{forward.12} parent=0 // pred_fallthru
    _

// kernel: forward.17
$region0: #{forward.17}
  #allocation0 [shape = 'u32[]', space=smem, size = 0x4, offset = 0x4, fixed_abs, tag = 'smem constant byte address 0x4 - core index']
  #allocation1 [shape = 'u32[72,128]{1,0:T(1,128)}', space=vmem, size = 0x9000, scoped, tag = 'internal scratch']
  %s0 = inlined_call_operand.vmem [shape: f32[1,16,256], index: 0, kind: input, shape index: {}]
  %s1 = inlined_call_operand.vmem [shape: f32[1,16,256], index: 1, kind: input, shape index: {}]
  %s2 = inlined_call_operand.vmem [shape: f32[2,256], index: 2, kind: input, shape index: {}]
  %s3 = inlined_call_operand.vmem [shape: f32[2,3], index: 3, kind: input, shape index: {}]
  %s4 = inlined_call_operand.vmem [shape: f32[3], index: 4, kind: input, shape index: {}]
  %s5 = inlined_call_operand.vmem [shape: f32[1,3,16,256], index: 5, kind: output, shape index: {0}]
  %s6 = inlined_call_operand.vmem [shape: f32[1,1,8,128], index: 6, kind: output, shape index: {1}]
  %7 = xla_tuple %s5, %s6
  %s8 = sld [smem:[#allocation0]]
  $region46: #{forward.17} parent=0
    _
  %s10 = ssub.s32 1, %s8
  %s11 = scalar_select 0, %s10, %s8
  $region1: #{forward.17} parent=0
    #allocation2 [shape = 'u8[1024]{0}', space=smem, size = 0x400, scoped, tag = 'input window, operand 3, single buffered']
    #allocation3 [shape = 's32[1]{0}', space=sflag, size = 0x4, scoped, tag = 'scoped memory for forward.17']
    #allocation4 [shape = 'u8[512]{0}', space=smem, size = 0x200, scoped, tag = 'input window, operand 4, single buffered']
    #allocation5 [shape = 's32[1]{0}', space=sflag, size = 0x4, scoped, tag = 'scoped memory for forward.17']
    %12 = vsyncpa [#allocation3], 0
    %13 = vsyncpa [#allocation5], 0
    // Predicated region
    $region2: #{forward.17} parent=1 // pred_check
      _
    $region3: #{forward.17} parent=1 // pred_check_branch
      %15 = sbr.rel (0) target = $region5
    $region4: #{forward.17} parent=1 // pred_region
      _
    $region5: #{forward.17} parent=1 // pred_fallthru
      _
    // Predicated region
    $region6: #{forward.17} parent=1 // pred_check
      _
    $region7: #{forward.17} parent=1 // pred_check_branch
      %17 = sbr.rel (0) target = $region9
    $region8: #{forward.17} parent=1 // pred_region
      _
    $region9: #{forward.17} parent=1 // pred_fallthru
      _
    // Predicated region
    $region10: #{forward.17} parent=1 // pred_check
      _
    $region11: #{forward.17} parent=1 // pred_check_branch
      %19 = sbr.rel (0) target = $region13
    $region12: #{forward.17} parent=1 // pred_region
      _
    $region13: #{forward.17} parent=1 // pred_fallthru
      _
    // Predicated region
    $region14: #{forward.17} parent=1 // pred_check
      _
    $region15: #{forward.17} parent=1 // pred_check_branch
      %21 = sbr.rel (0) target = $region17
    $region16: #{forward.17} parent=1 // pred_region
      %23 = vsyncadd [#allocation3], 0
      %s25 = sshll.u32 %s3, 4
      %s26 = int_to_ptr.vmem [resolvable:$true] %s25
      %28 = dma.vmem_to_smem %s26, 32, [#allocation2], [#allocation3]
    $region17: #{forward.17} parent=1 // pred_fallthru
      _
    // Predicated region
    $region18: #{forward.17} parent=1 // pred_check
      _
    $region19: #{forward.17} parent=1 // pred_check_branch
      %30 = sbr.rel (0) target = $region21
    $region20: #{forward.17} parent=1 // pred_region
      %32 = vsyncadd [#allocation5], 0
      %s34 = sshll.u32 %s4, 4
      %s35 = int_to_ptr.vmem [resolvable:$true] %s34
      %37 = dma.vmem_to_smem %s35, 16, [#allocation4], [#allocation5]
    $region21: #{forward.17} parent=1 // pred_fallthru
      _
    // Predicated region
    $region22: #{forward.17} parent=1 // pred_check
      _
    $region23: #{forward.17} parent=1 // pred_check_branch
      %39 = sbr.rel (0) target = $region25
    $region24: #{forward.17} parent=1 // pred_region
      %41 = dma.done [#allocation3], 32
    $region25: #{forward.17} parent=1 // pred_fallthru
      _
    // Predicated region
    $region26: #{forward.17} parent=1 // pred_check
      _
    $region27: #{forward.17} parent=1 // pred_check_branch
      %43 = sbr.rel (0) target = $region29
    $region28: #{forward.17} parent=1 // pred_region
      %45 = dma.done [#allocation5], 16
    $region29: #{forward.17} parent=1 // pred_fallthru
      _
    %46 = sfence
    %v47 = vld [vmem:[%s0] sm:$0xff]
    %v48 = vld [vmem:[%s0 + $0x8] sm:$0xff]
    %v49 = vld [vmem:[%s0 + $0x10] sm:$0xff]
    %v50 = vld [vmem:[%s0 + $0x18] sm:$0xff]
    %v51 = vld [vmem:[%s1] sm:$0xff]
    %v52 = vld [vmem:[%s1 + $0x8] sm:$0xff]
    %v53 = vld [vmem:[%s1 + $0x10] sm:$0xff]
    %v54 = vld [vmem:[%s1 + $0x18] sm:$0xff]
    %v55 = vsub.f32 %v47, %v51
    %v56 = vsub.f32 %v48, %v52
    %v57 = vsub.f32 %v49, %v53
    %v58 = vsub.f32 %v50, %v54
    %v59 = vmul.f32 %v55, %v55
    %v60 = vmul.f32 %v56, %v56
    %v61 = vmul.f32 %v57, %v57
    %v62 = vmul.f32 %v58, %v58
    %v63 = vadd.f32 %v59, %v60
    %v64 = vadd.f32 %v63, %v61
    %v65 = vadd.f32 %v64, %v62
    %66 = vadd.xlane.f32.xlu0 %v65
    %v67 = vpop.xlane.xlu0 %66
    %v68 = vrot.slane %v67, 4
    %v69 = vadd.f32 %v67, %v68
    %v70 = vrot.slane %v69, 2
    %v71 = vadd.f32 %v69, %v70
    %v72 = vrot.slane %v71, 1
    %v73 = vadd.f32 %v71, %v72
    %s74 = vtos %v73
    %v75 = vstv %s74
    %v76 = vadd.f32 %v75, 0.0
    %77 = vst [vmem:[%s6] sm:$0xff] %v76
    %v78 = vlaneseq
    %v79 = vshrl.u32 %v78, 7
    %v80 = vadd.s32 %v79, 8
    %s81 = smul.u32 0, 16
    %v82 = vstv %s81
    %v83 = vadd.s32 %v79, %v82
    %v84 = vadd.s32 %v80, %v82
    %v85 = vcvt.s32.f32 %v83
    %v86 = vcvt.s32.f32 %v84
    %v87 = vld [vmem:[%s2] ss:$2 sm:$0x3]
    %s88 = scalar_lea.vmem %s2, 1
    %v89 = vld [vmem:[%s88] ss:$2 sm:$0x3]
    %s90 = sld [smem:[#allocation2]]
    %v91 = vstv %s90
    %v92 = vmul.f32 %v91, %v47
    %v93 = vmul.f32 %v91, %v48
    %v94 = vmul.f32 %v91, %v49
    %v95 = vmul.f32 %v91, %v50
    %s96 = sld [smem:[#allocation2 + $0x80]]
    %v97 = vstv %s96
    %v98 = vmul.f32 %v97, %v51
    %v99 = vmul.f32 %v97, %v52
    %v100 = vmul.f32 %v97, %v53
    %v101 = vmul.f32 %v97, %v54
    %v102 = vadd.f32 %v92, %v98
    %v103 = vadd.f32 %v93, %v99
    %v104 = vadd.f32 %v94, %v100
    %v105 = vadd.f32 %v95, %v101
    %s106 = sld [smem:[#allocation4]]
    %v107 = vstv %s106
    %v108 = vadd.f32 %v102, %v107
    %v109 = vadd.f32 %v103, %v107
    %v110 = vadd.f32 %v104, %v107
    %v111 = vadd.f32 %v105, %v107
    %v112 = vtanh.pop %v108
    %v113 = vtanh.pop %v109
    %v114 = vtanh.pop %v110
    %v115 = vtanh.pop %v111
    %v116 = vmul.f32 %v112, 2.0
    %v117 = vmul.f32 %v113, 2.0
    %v118 = vmul.f32 %v114, 2.0
    %v119 = vmul.f32 %v115, 2.0
    %v120 = vadd.f32 %v85, %v116
    %v121 = vadd.f32 %v85, %v117
    %v122 = vadd.f32 %v86, %v118
    %v123 = vadd.f32 %v86, %v119
    %124 = vst [vmem:[%s5] sm:$0xff] %v120
    %125 = vst [vmem:[%s5 + $0x8] sm:$0xff] %v121
    %126 = vst [vmem:[%s5 + $0x10] sm:$0xff] %v122
    %127 = vst [vmem:[%s5 + $0x18] sm:$0xff] %v123
    %s128 = sld [smem:[#allocation2 + $0x1]]
    %v129 = vstv %s128
    %v130 = vmul.f32 %v129, %v47
    %v131 = vmul.f32 %v129, %v48
    %v132 = vmul.f32 %v129, %v49
    %v133 = vmul.f32 %v129, %v50
    %s134 = sld [smem:[#allocation2 + $0x81]]
    %v135 = vstv %s134
    %v136 = vmul.f32 %v135, %v51
    %v137 = vmul.f32 %v135, %v52
    %v138 = vmul.f32 %v135, %v53
    %v139 = vmul.f32 %v135, %v54
    %v140 = vadd.f32 %v130, %v136
    %v141 = vadd.f32 %v131, %v137
    %v142 = vadd.f32 %v132, %v138
    %v143 = vadd.f32 %v133, %v139
    %s144 = sld [smem:[#allocation4 + $0x1]]
    %v145 = vstv %s144
    %v146 = vadd.f32 %v140, %v145
    %v147 = vadd.f32 %v141, %v145
    %v148 = vadd.f32 %v142, %v145
    %v149 = vadd.f32 %v143, %v145
    %v150 = vtanh.pop %v146
    %v151 = vtanh.pop %v147
    %v152 = vtanh.pop %v148
    %v153 = vtanh.pop %v149
    %v154 = vmul.f32 %v150, 2.0
    %v155 = vmul.f32 %v151, 2.0
    %v156 = vmul.f32 %v152, 2.0
    %v157 = vmul.f32 %v153, 2.0
    %v159 = vperm.slane %v87, 0
    %v160 = vperm.slane %v87, 1
    %v163 = vadd.f32 %v159, %v154
    %v164 = vadd.f32 %v160, %v155
    %v165 = vadd.f32 %v159, %v156
    %v166 = vadd.f32 %v160, %v157
    %s167 = scalar_lea.vmem %s5, 32
    %168 = vst [vmem:[%s167] sm:$0xff] %v163
    %169 = vst [vmem:[%s167 + $0x8] sm:$0xff] %v164
    %170 = vst [vmem:[%s167 + $0x10] sm:$0xff] %v165
    %171 = vst [vmem:[%s167 + $0x18] sm:$0xff] %v166
    %s172 = sld [smem:[#allocation2 + $0x2]]
    %v173 = vstv %s172
    %v174 = vmul.f32 %v173, %v47
    %v175 = vmul.f32 %v173, %v48
    %v176 = vmul.f32 %v173, %v49
    %v177 = vmul.f32 %v173, %v50
    %s178 = sld [smem:[#allocation2 + $0x82]]
    %v179 = vstv %s178
    %v180 = vmul.f32 %v179, %v51
    %v181 = vmul.f32 %v179, %v52
    %v182 = vmul.f32 %v179, %v53
    %v183 = vmul.f32 %v179, %v54
    %v184 = vadd.f32 %v174, %v180
    %v185 = vadd.f32 %v175, %v181
    %v186 = vadd.f32 %v176, %v182
    %v187 = vadd.f32 %v177, %v183
    %s188 = sld [smem:[#allocation4 + $0x2]]
    %v189 = vstv %s188
    %v190 = vadd.f32 %v184, %v189
    %v191 = vadd.f32 %v185, %v189
    %v192 = vadd.f32 %v186, %v189
    %v193 = vadd.f32 %v187, %v189
    %v194 = vtanh.pop %v190
    %v195 = vtanh.pop %v191
    %v196 = vtanh.pop %v192
    %v197 = vtanh.pop %v193
    %v198 = vmul.f32 %v194, 2.0
    %v199 = vmul.f32 %v195, 2.0
    %v200 = vmul.f32 %v196, 2.0
    %v201 = vmul.f32 %v197, 2.0
    %v203 = vperm.slane %v89, 0
    %v204 = vperm.slane %v89, 1
    %v207 = vadd.f32 %v203, %v198
    %v208 = vadd.f32 %v204, %v199
    %v209 = vadd.f32 %v203, %v200
    %v210 = vadd.f32 %v204, %v201
    %s211 = scalar_lea.vmem %s5, 64
    %212 = vst [vmem:[%s211] sm:$0xff] %v207
    %213 = vst [vmem:[%s211 + $0x8] sm:$0xff] %v208
    %214 = vst [vmem:[%s211 + $0x10] sm:$0xff] %v209
    %215 = vst [vmem:[%s211 + $0x18] sm:$0xff] %v210
    // Predicated region
    $region30: #{forward.17} parent=1 // pred_check
      _
    $region31: #{forward.17} parent=1 // pred_check_branch
      %217 = sbr.rel (0) target = $region33
    $region32: #{forward.17} parent=1 // pred_region
      _
    $region33: #{forward.17} parent=1 // pred_fallthru
      _
    // Predicated region
    $region34: #{forward.17} parent=1 // pred_check
      _
    $region35: #{forward.17} parent=1 // pred_check_branch
      %219 = sbr.rel (0) target = $region37
    $region36: #{forward.17} parent=1 // pred_region
      _
    $region37: #{forward.17} parent=1 // pred_fallthru
      _
    // Predicated region
    $region38: #{forward.17} parent=1 // pred_check
      _
    $region39: #{forward.17} parent=1 // pred_check_branch
      %221 = sbr.rel (0) target = $region41
    $region40: #{forward.17} parent=1 // pred_region
      _
    $region41: #{forward.17} parent=1 // pred_fallthru
      _
    // Predicated region
    $region42: #{forward.17} parent=1 // pred_check
      _
    $region43: #{forward.17} parent=1 // pred_check_branch
      %223 = sbr.rel (0) target = $region45
    $region44: #{forward.17} parent=1 // pred_region
      _
    $region45: #{forward.17} parent=1 // pred_fallthru
      _
    %224 = vsyncpa [#allocation3], 1
    %225 = vsyncpa [#allocation5], 1

// kernel: forward.18
$region0: #{forward.18}
  #allocation0 [shape = 'u32[]', space=smem, size = 0x4, offset = 0x4, fixed_abs, tag = 'smem constant byte address 0x4 - core index']
  #allocation1 [shape = 'u32[72,128]{1,0:T(1,128)}', space=vmem, size = 0x9000, scoped, tag = 'internal scratch']
  #allocation2 [shape = 'f32[16,400]{1,0:T(8,128)}', space=vmem, size = 0x8000, scoped, tag = 'scratch operand']
  %s0 = inlined_call_operand.vmem [shape: bf16[16,256], index: 0, kind: input, shape index: {}]
  %s1 = inlined_call_operand.vmem [shape: bf16[256,400], index: 1, kind: input, shape index: {}]
  %s2 = inlined_call_operand.vmem [shape: bf16[16,400], index: 2, kind: output, shape index: {}]
  %s3 = sld [smem:[#allocation0]]
  $region26: #{forward.18} parent=0
    _
  %s5 = ssub.s32 1, %s3
  %s6 = scalar_select 0, %s5, %s3
  // Predicated region
  $region2: #{forward.18} parent=0 // pred_check
    _
  $region3: #{forward.18} parent=0 // pred_check_branch
    %8 = sbr.rel (0) target = $region5
  $region4: #{forward.18} parent=0 // pred_region
    _
  $region5: #{forward.18} parent=0 // pred_fallthru
    _
  // Predicated region
  $region6: #{forward.18} parent=0 // pred_check
    _
  $region7: #{forward.18} parent=0 // pred_check_branch
    %10 = sbr.rel (0) target = $region9
  $region8: #{forward.18} parent=0 // pred_region
    _
  $region9: #{forward.18} parent=0 // pred_fallthru
    _
  %p11 = scmp.eq.s32.totalorder 0, 0
  // Predicated region
  $region10: #{forward.18} parent=0 // pred_check
    %p12 = pneg %p11
  $region11: #{forward.18} parent=0 // pred_check_branch
    %14 = sbr.rel (%p12) target = $region13
  $region12: #{forward.18} parent=0 // pred_region
    %15 = vst [vmem:[#allocation2] sm:$0xff] 0.0
    %16 = vst [vmem:[#allocation2 + $0x8] sm:$0xff] 0.0
    %17 = vst [vmem:[#allocation2 + $0x10] sm:$0xff] 0.0
    %vm18 = vcmask 130048
    %19 = vst.msk [vmem:[#allocation2 + $0x18] sm:$0xff] %vm18, 0.0
    %20 = vst [vmem:[#allocation2 + $0x20] sm:$0xff] 0.0
    %21 = vst [vmem:[#allocation2 + $0x28] sm:$0xff] 0.0
    %22 = vst [vmem:[#allocation2 + $0x30] sm:$0xff] 0.0
    %23 = vst.msk [vmem:[#allocation2 + $0x38] sm:$0xff] %vm18, 0.0
  $region13: #{forward.18} parent=0 // pred_fallthru
    _
  %v24 = vld [vmem:[#allocation2] sm:$0xff]
  %v25 = vld [vmem:[#allocation2 + $0x8] sm:$0xff]
  %v26 = vld [vmem:[#allocation2 + $0x10] sm:$0xff]
  %v27 = vld [vmem:[#allocation2 + $0x18] sm:$0xff]
  %v28 = vld [vmem:[#allocation2 + $0x20] sm:$0xff]
  %v29 = vld [vmem:[#allocation2 + $0x28] sm:$0xff]
  %v30 = vld [vmem:[#allocation2 + $0x30] sm:$0xff]
  %v31 = vld [vmem:[#allocation2 + $0x38] sm:$0xff]
  %v32 = vld [vmem:[%s0] sm:$0xff]
  %v33 = vld [vmem:[%s0 + $0x8] sm:$0xff]
  %v34 = vld [vmem:[%s1] sm:$0xff]
  %v35 = vld [vmem:[%s1 + $0x8] sm:$0xff]
  %v36 = vld [vmem:[%s1 + $0x10] sm:$0xff]
  %v37 = vld [vmem:[%s1 + $0x18] sm:$0xff]
  %v38 = vld [vmem:[%s1 + $0x20] sm:$0xff]
  %v39 = vld [vmem:[%s1 + $0x28] sm:$0xff]
  %v40 = vld [vmem:[%s1 + $0x30] sm:$0xff]
  %v41 = vld [vmem:[%s1 + $0x38] sm:$0xff]
  %v42 = vld [vmem:[%s1 + $0x40] sm:$0xff]
  %v43 = vld [vmem:[%s1 + $0x48] sm:$0xff]
  %v44 = vld [vmem:[%s1 + $0x50] sm:$0xff]
  %v45 = vld [vmem:[%s1 + $0x58] sm:$0xff]
  %v46 = vld [vmem:[%s1 + $0x60] sm:$0xff]
  %v47 = vld [vmem:[%s1 + $0x68] sm:$0xff]
  %v48 = vld [vmem:[%s1 + $0x70] sm:$0xff]
  %v49 = vld [vmem:[%s1 + $0x78] sm:$0xff]
  %v50 = vld [vmem:[%s1 + $0x80] sm:$0xff]
  %v51 = vld [vmem:[%s1 + $0x88] sm:$0xff]
  %v52 = vld [vmem:[%s1 + $0x90] sm:$0xff]
  %v53 = vld [vmem:[%s1 + $0x98] sm:$0xff]
  %v54 = vld [vmem:[%s1 + $0xa0] sm:$0xff]
  %v55 = vld [vmem:[%s1 + $0xa8] sm:$0xff]
  %v56 = vld [vmem:[%s1 + $0xb0] sm:$0xff]
  %v57 = vld [vmem:[%s1 + $0xb8] sm:$0xff]
  %v58 = vld [vmem:[%s1 + $0xc0] sm:$0xff]
  %v59 = vld [vmem:[%s1 + $0xc8] sm:$0xff]
  %v60 = vld [vmem:[%s1 + $0xd0] sm:$0xff]
  %v61 = vld [vmem:[%s1 + $0xd8] sm:$0xff]
  %v62 = vld [vmem:[%s1 + $0xe0] sm:$0xff]
  %v63 = vld [vmem:[%s1 + $0xe8] sm:$0xff]
  %v64 = vld [vmem:[%s1 + $0xf0] sm:$0xff]
  %v65 = vld [vmem:[%s1 + $0xf8] sm:$0xff]
  %v66 = vld [vmem:[%s1 + $0x100] sm:$0xff]
  %v67 = vld [vmem:[%s1 + $0x108] sm:$0xff]
  %v68 = vld [vmem:[%s1 + $0x110] sm:$0xff]
  %v69 = vld [vmem:[%s1 + $0x118] sm:$0xff]
  %v70 = vld [vmem:[%s1 + $0x120] sm:$0xff]
  %v71 = vld [vmem:[%s1 + $0x128] sm:$0xff]
  %v72 = vld [vmem:[%s1 + $0x130] sm:$0xff]
  %v73 = vld [vmem:[%s1 + $0x138] sm:$0xff]
  %v74 = vld [vmem:[%s1 + $0x140] sm:$0xff]
  %v75 = vld [vmem:[%s1 + $0x148] sm:$0xff]
  %v76 = vld [vmem:[%s1 + $0x150] sm:$0xff]
  %v77 = vld [vmem:[%s1 + $0x158] sm:$0xff]
  %v78 = vld [vmem:[%s1 + $0x160] sm:$0xff]
  %v79 = vld [vmem:[%s1 + $0x168] sm:$0xff]
  %v80 = vld [vmem:[%s1 + $0x170] sm:$0xff]
  %v81 = vld [vmem:[%s1 + $0x178] sm:$0xff]
  %v82 = vld [vmem:[%s1 + $0x180] sm:$0xff]
  %v83 = vld [vmem:[%s1 + $0x188] sm:$0xff]
  %v84 = vld [vmem:[%s1 + $0x190] sm:$0xff]
  %v85 = vld [vmem:[%s1 + $0x198] sm:$0xff]
  %v86 = vld [vmem:[%s1 + $0x1a0] sm:$0xff]
  %v87 = vld [vmem:[%s1 + $0x1a8] sm:$0xff]
  %v88 = vld [vmem:[%s1 + $0x1b0] sm:$0xff]
  %v89 = vld [vmem:[%s1 + $0x1b8] sm:$0xff]
  %v90 = vld [vmem:[%s1 + $0x1c0] sm:$0xff]
  %v91 = vld [vmem:[%s1 + $0x1c8] sm:$0xff]
  %v92 = vld [vmem:[%s1 + $0x1d0] sm:$0xff]
  %v93 = vld [vmem:[%s1 + $0x1d8] sm:$0xff]
  %v94 = vld [vmem:[%s1 + $0x1e0] sm:$0xff]
  %v95 = vld [vmem:[%s1 + $0x1e8] sm:$0xff]
  %v96 = vld [vmem:[%s1 + $0x1f0] sm:$0xff]
  %v97 = vld [vmem:[%s1 + $0x1f8] sm:$0xff]
  %v100 = vunpack.c.l.b16 %v32
  %v101 = vunpack.c.h.b16 %v32
  %v102 = vunpack.c.l.b16 %v33
  %v103 = vunpack.c.h.b16 %v33
  %v104 = vpack.c.b16 %v102, %v100
  %v105 = vpack.c.b16 %v103, %v101
  %v172 = vunpack.c.l.b16 %v34
  %v173 = vunpack.c.h.b16 %v34
  %v174 = vunpack.c.l.b16 %v35
  %v175 = vunpack.c.h.b16 %v35
  %v176 = vunpack.c.l.b16 %v36
  %v177 = vunpack.c.h.b16 %v36
  %v178 = vunpack.c.l.b16 %v37
  %v179 = vunpack.c.h.b16 %v37
  %v180 = vunpack.c.l.b16 %v38
  %v181 = vunpack.c.h.b16 %v38
  %v182 = vunpack.c.l.b16 %v39
  %v183 = vunpack.c.h.b16 %v39
  %v184 = vunpack.c.l.b16 %v40
  %v185 = vunpack.c.h.b16 %v40
  %v186 = vunpack.c.l.b16 %v41
  %v187 = vunpack.c.h.b16 %v41
  %v188 = vunpack.c.l.b16 %v42
  %v189 = vunpack.c.h.b16 %v42
  %v190 = vunpack.c.l.b16 %v43
  %v191 = vunpack.c.h.b16 %v43
  %v192 = vunpack.c.l.b16 %v44
  %v193 = vunpack.c.h.b16 %v44
  %v194 = vunpack.c.l.b16 %v45
  %v195 = vunpack.c.h.b16 %v45
  %v196 = vunpack.c.l.b16 %v46
  %v197 = vunpack.c.h.b16 %v46
  %v198 = vunpack.c.l.b16 %v47
  %v199 = vunpack.c.h.b16 %v47
  %v200 = vunpack.c.l.b16 %v48
  %v201 = vunpack.c.h.b16 %v48
  %v202 = vunpack.c.l.b16 %v49
  %v203 = vunpack.c.h.b16 %v49
  %v204 = vunpack.c.l.b16 %v50
  %v205 = vunpack.c.h.b16 %v50
  %v206 = vunpack.c.l.b16 %v51
  %v207 = vunpack.c.h.b16 %v51
  %v208 = vunpack.c.l.b16 %v52
  %v209 = vunpack.c.h.b16 %v52
  %v210 = vunpack.c.l.b16 %v53
  %v211 = vunpack.c.h.b16 %v53
  %v212 = vunpack.c.l.b16 %v54
  %v213 = vunpack.c.h.b16 %v54
  %v214 = vunpack.c.l.b16 %v55
  %v215 = vunpack.c.h.b16 %v55
  %v216 = vunpack.c.l.b16 %v56
  %v217 = vunpack.c.h.b16 %v56
  %v218 = vunpack.c.l.b16 %v57
  %v219 = vunpack.c.h.b16 %v57
  %v220 = vunpack.c.l.b16 %v58
  %v221 = vunpack.c.h.b16 %v58
  %v222 = vunpack.c.l.b16 %v59
  %v223 = vunpack.c.h.b16 %v59
  %v224 = vunpack.c.l.b16 %v60
  %v225 = vunpack.c.h.b16 %v60
  %v226 = vunpack.c.l.b16 %v61
  %v227 = vunpack.c.h.b16 %v61
  %v228 = vunpack.c.l.b16 %v62
  %v229 = vunpack.c.h.b16 %v62
  %v230 = vunpack.c.l.b16 %v63
  %v231 = vunpack.c.h.b16 %v63
  %v232 = vunpack.c.l.b16 %v64
  %v233 = vunpack.c.h.b16 %v64
  %v234 = vunpack.c.l.b16 %v65
  %v235 = vunpack.c.h.b16 %v65
  %v236 = vunpack.c.l.b16 %v66
  %v237 = vunpack.c.h.b16 %v66
  %v238 = vunpack.c.l.b16 %v67
  %v239 = vunpack.c.h.b16 %v67
  %v240 = vunpack.c.l.b16 %v68
  %v241 = vunpack.c.h.b16 %v68
  %v242 = vunpack.c.l.b16 %v69
  %v243 = vunpack.c.h.b16 %v69
  %v244 = vunpack.c.l.b16 %v70
  %v245 = vunpack.c.h.b16 %v70
  %v246 = vunpack.c.l.b16 %v71
  %v247 = vunpack.c.h.b16 %v71
  %v248 = vunpack.c.l.b16 %v72
  %v249 = vunpack.c.h.b16 %v72
  %v250 = vunpack.c.l.b16 %v73
  %v251 = vunpack.c.h.b16 %v73
  %v252 = vunpack.c.l.b16 %v74
  %v253 = vunpack.c.h.b16 %v74
  %v254 = vunpack.c.l.b16 %v75
  %v255 = vunpack.c.h.b16 %v75
  %v256 = vunpack.c.l.b16 %v76
  %v257 = vunpack.c.h.b16 %v76
  %v258 = vunpack.c.l.b16 %v77
  %v259 = vunpack.c.h.b16 %v77
  %v260 = vunpack.c.l.b16 %v78
  %v261 = vunpack.c.h.b16 %v78
  %v262 = vunpack.c.l.b16 %v79
  %v263 = vunpack.c.h.b16 %v79
  %v264 = vunpack.c.l.b16 %v80
  %v265 = vunpack.c.h.b16 %v80
  %v266 = vunpack.c.l.b16 %v81
  %v267 = vunpack.c.h.b16 %v81
  %v268 = vunpack.c.l.b16 %v82
  %v269 = vunpack.c.h.b16 %v82
  %v270 = vunpack.c.l.b16 %v83
  %v271 = vunpack.c.h.b16 %v83
  %v272 = vunpack.c.l.b16 %v84
  %v273 = vunpack.c.h.b16 %v84
  %v274 = vunpack.c.l.b16 %v85
  %v275 = vunpack.c.h.b16 %v85
  %v276 = vunpack.c.l.b16 %v86
  %v277 = vunpack.c.h.b16 %v86
  %v278 = vunpack.c.l.b16 %v87
  %v279 = vunpack.c.h.b16 %v87
  %v280 = vunpack.c.l.b16 %v88
  %v281 = vunpack.c.h.b16 %v88
  %v282 = vunpack.c.l.b16 %v89
  %v283 = vunpack.c.h.b16 %v89
  %v284 = vunpack.c.l.b16 %v90
  %v285 = vunpack.c.h.b16 %v90
  %v286 = vunpack.c.l.b16 %v91
  %v287 = vunpack.c.h.b16 %v91
  %v288 = vunpack.c.l.b16 %v92
  %v289 = vunpack.c.h.b16 %v92
  %v290 = vunpack.c.l.b16 %v93
  %v291 = vunpack.c.h.b16 %v93
  %v292 = vunpack.c.l.b16 %v94
  %v293 = vunpack.c.h.b16 %v94
  %v294 = vunpack.c.l.b16 %v95
  %v295 = vunpack.c.h.b16 %v95
  %v296 = vunpack.c.l.b16 %v96
  %v297 = vunpack.c.h.b16 %v96
  %v298 = vunpack.c.l.b16 %v97
  %v299 = vunpack.c.h.b16 %v97
  %v300 = vpack.c.b16 %v176, %v172
  %v301 = vpack.c.b16 %v177, %v173
  %v302 = vpack.c.b16 %v178, %v174
  %v303 = vpack.c.b16 %v179, %v175
  %v304 = vpack.c.b16 %v184, %v180
  %v305 = vpack.c.b16 %v185, %v181
  %v306 = vpack.c.b16 %v186, %v182
  %v307 = vpack.c.b16 %v187, %v183
  %v308 = vpack.c.b16 %v192, %v188
  %v309 = vpack.c.b16 %v193, %v189
  %v310 = vpack.c.b16 %v194, %v190
  %v311 = vpack.c.b16 %v195, %v191
  %v312 = vpack.c.b16 %v200, %v196
  %v313 = vpack.c.b16 %v201, %v197
  %v314 = vpack.c.b16 %v202, %v198
  %v315 = vpack.c.b16 %v203, %v199
  %v316 = vpack.c.b16 %v208, %v204
  %v317 = vpack.c.b16 %v209, %v205
  %v318 = vpack.c.b16 %v210, %v206
  %v319 = vpack.c.b16 %v211, %v207
  %v320 = vpack.c.b16 %v216, %v212
  %v321 = vpack.c.b16 %v217, %v213
  %v322 = vpack.c.b16 %v218, %v214
  %v323 = vpack.c.b16 %v219, %v215
  %v324 = vpack.c.b16 %v224, %v220
  %v325 = vpack.c.b16 %v225, %v221
  %v326 = vpack.c.b16 %v226, %v222
  %v327 = vpack.c.b16 %v227, %v223
  %v328 = vpack.c.b16 %v232, %v228
  %v329 = vpack.c.b16 %v233, %v229
  %v330 = vpack.c.b16 %v234, %v230
  %v331 = vpack.c.b16 %v235, %v231
  %v332 = vpack.c.b16 %v240, %v236
  %v333 = vpack.c.b16 %v241, %v237
  %v334 = vpack.c.b16 %v242, %v238
  %v335 = vpack.c.b16 %v243, %v239
  %v336 = vpack.c.b16 %v248, %v244
  %v337 = vpack.c.b16 %v249, %v245
  %v338 = vpack.c.b16 %v250, %v246
  %v339 = vpack.c.b16 %v251, %v247
  %v340 = vpack.c.b16 %v256, %v252
  %v341 = vpack.c.b16 %v257, %v253
  %v342 = vpack.c.b16 %v258, %v254
  %v343 = vpack.c.b16 %v259, %v255
  %v344 = vpack.c.b16 %v264, %v260
  %v345 = vpack.c.b16 %v265, %v261
  %v346 = vpack.c.b16 %v266, %v262
  %v347 = vpack.c.b16 %v267, %v263
  %v348 = vpack.c.b16 %v272, %v268
  %v349 = vpack.c.b16 %v273, %v269
  %v350 = vpack.c.b16 %v274, %v270
  %v351 = vpack.c.b16 %v275, %v271
  %v352 = vpack.c.b16 %v280, %v276
  %v353 = vpack.c.b16 %v281, %v277
  %v354 = vpack.c.b16 %v282, %v278
  %v355 = vpack.c.b16 %v283, %v279
  %v356 = vpack.c.b16 %v288, %v284
  %v357 = vpack.c.b16 %v289, %v285
  %v358 = vpack.c.b16 %v290, %v286
  %v359 = vpack.c.b16 %v291, %v287
  %v360 = vpack.c.b16 %v296, %v292
  %v361 = vpack.c.b16 %v297, %v293
  %v362 = vpack.c.b16 %v298, %v294
  %v363 = vpack.c.b16 %v299, %v295
  %428 = vmatpush.bf16.msra.mxu0 %v328
  %429 = vmatpush.bf16.msra.mxu0 %v324
  %430 = vmatpush.bf16.msra.mxu0 %v320
  %431 = vmatpush.bf16.msra.mxu0 %v316
  %432 = vmatpush.bf16.msra.mxu0 %v312
  %433 = vmatpush.bf16.msra.mxu0 %v308
  %434 = vmatpush.bf16.msra.mxu0 %v304
  %435 = vmatpush.bf16.msra.mxu0 %v300
  %436 = vmatmul.bf16.gmra.mxu0 %v104
  %v437 = vpop.f32.mrf.mxu0
  %v438 = vadd.f32 0.0, %v437
  %v439 = vpop.f32.mrf.mxu0
  %v440 = vadd.f32 0.0, %v439
  %441 = vdwg.mxu0
  %442 = vmatpush.bf16.msra.mxu0 %v360
  %443 = vmatpush.bf16.msra.mxu0 %v356
  %444 = vmatpush.bf16.msra.mxu0 %v352
  %445 = vmatpush.bf16.msra.mxu0 %v348
  %446 = vmatpush.bf16.msra.mxu0 %v344
  %447 = vmatpush.bf16.msra.mxu0 %v340
  %448 = vmatpush.bf16.msra.mxu0 %v336
  %449 = vmatpush.bf16.msra.mxu0 %v332
  %450 = vmatmul.bf16.gmra.mxu0 %v105
  %v451 = vpop.f32.mrf.mxu0
  %v452 = vadd.f32 %v438, %v451
  %v453 = vpop.f32.mrf.mxu0
  %v454 = vadd.f32 %v440, %v453
  %455 = vdwg.mxu0
  %456 = vmatpush.bf16.msra.mxu0 %v329
  %457 = vmatpush.bf16.msra.mxu0 %v325
  %458 = vmatpush.bf16.msra.mxu0 %v321
  %459 = vmatpush.bf16.msra.mxu0 %v317
  %460 = vmatpush.bf16.msra.mxu0 %v313
  %461 = vmatpush.bf16.msra.mxu0 %v309
  %462 = vmatpush.bf16.msra.mxu0 %v305
  %463 = vmatpush.bf16.msra.mxu0 %v301
  %464 = vmatmul.bf16.gmra.mxu0 %v104
  %v465 = vpop.f32.mrf.mxu0
  %v466 = vadd.f32 0.0, %v465
  %v467 = vpop.f32.mrf.mxu0
  %v468 = vadd.f32 0.0, %v467
  %469 = vdwg.mxu0
  %470 = vmatpush.bf16.msra.mxu0 %v361
  %471 = vmatpush.bf16.msra.mxu0 %v357
  %472 = vmatpush.bf16.msra.mxu0 %v353
  %473 = vmatpush.bf16.msra.mxu0 %v349
  %474 = vmatpush.bf16.msra.mxu0 %v345
  %475 = vmatpush.bf16.msra.mxu0 %v341
  %476 = vmatpush.bf16.msra.mxu0 %v337
  %477 = vmatpush.bf16.msra.mxu0 %v333
  %478 = vmatmul.bf16.gmra.mxu0 %v105
  %v479 = vpop.f32.mrf.mxu0
  %v480 = vadd.f32 %v466, %v479
  %v481 = vpop.f32.mrf.mxu0
  %v482 = vadd.f32 %v468, %v481
  %483 = vdwg.mxu0
  %484 = vmatpush.bf16.msra.mxu0 %v330
  %485 = vmatpush.bf16.msra.mxu0 %v326
  %486 = vmatpush.bf16.msra.mxu0 %v322
  %487 = vmatpush.bf16.msra.mxu0 %v318
  %488 = vmatpush.bf16.msra.mxu0 %v314
  %489 = vmatpush.bf16.msra.mxu0 %v310
  %490 = vmatpush.bf16.msra.mxu0 %v306
  %491 = vmatpush.bf16.msra.mxu0 %v302
  %492 = vmatmul.bf16.gmra.mxu0 %v104
  %v493 = vpop.f32.mrf.mxu0
  %v494 = vadd.f32 0.0, %v493
  %v495 = vpop.f32.mrf.mxu0
  %v496 = vadd.f32 0.0, %v495
  %497 = vdwg.mxu0
  %498 = vmatpush.bf16.msra.mxu0 %v362
  %499 = vmatpush.bf16.msra.mxu0 %v358
  %500 = vmatpush.bf16.msra.mxu0 %v354
  %501 = vmatpush.bf16.msra.mxu0 %v350
  %502 = vmatpush.bf16.msra.mxu0 %v346
  %503 = vmatpush.bf16.msra.mxu0 %v342
  %504 = vmatpush.bf16.msra.mxu0 %v338
  %505 = vmatpush.bf16.msra.mxu0 %v334
  %506 = vmatmul.bf16.gmra.mxu0 %v105
  %v507 = vpop.f32.mrf.mxu0
  %v508 = vadd.f32 %v494, %v507
  %v509 = vpop.f32.mrf.mxu0
  %v510 = vadd.f32 %v496, %v509
  %511 = vdwg.mxu0
  %512 = vmatpush.bf16.msra.mxu0 %v331
  %513 = vmatpush.bf16.msra.mxu0 %v327
  %514 = vmatpush.bf16.msra.mxu0 %v323
  %515 = vmatpush.bf16.msra.mxu0 %v319
  %516 = vmatpush.bf16.msra.mxu0 %v315
  %517 = vmatpush.bf16.msra.mxu0 %v311
  %518 = vmatpush.bf16.msra.mxu0 %v307
  %519 = vmatpush.bf16.msra.mxu0 %v303
  %520 = vmatmul.bf16.gmra.mxu0 %v104
  %v521 = vpop.f32.mrf.mxu0
  %v522 = vadd.f32 0.0, %v521
  %v523 = vpop.f32.mrf.mxu0
  %v524 = vadd.f32 0.0, %v523
  %525 = vdwg.mxu0
  %526 = vmatpush.bf16.msra.mxu0 %v363
  %527 = vmatpush.bf16.msra.mxu0 %v359
  %528 = vmatpush.bf16.msra.mxu0 %v355
  %529 = vmatpush.bf16.msra.mxu0 %v351
  %530 = vmatpush.bf16.msra.mxu0 %v347
  %531 = vmatpush.bf16.msra.mxu0 %v343
  %532 = vmatpush.bf16.msra.mxu0 %v339
  %533 = vmatpush.bf16.msra.mxu0 %v335
  %534 = vmatmul.bf16.gmra.mxu0 %v105
  %v535 = vpop.f32.mrf.mxu0
  %v536 = vadd.f32 %v522, %v535
  %v537 = vpop.f32.mrf.mxu0
  %v538 = vadd.f32 %v524, %v537
  %539 = vdwg.mxu0
  %v540 = vadd.f32 %v24, %v452
  %v541 = vadd.f32 %v25, %v480
  %v542 = vadd.f32 %v26, %v508
  %v543 = vadd.f32 %v27, %v536
  %v544 = vadd.f32 %v28, %v454
  %v545 = vadd.f32 %v29, %v482
  %v546 = vadd.f32 %v30, %v510
  %v547 = vadd.f32 %v31, %v538
  %548 = vst [vmem:[#allocation2] sm:$0xff] %v540
  %549 = vst [vmem:[#allocation2 + $0x8] sm:$0xff] %v541
  %550 = vst [vmem:[#allocation2 + $0x10] sm:$0xff] %v542
  %vm551 = vcmask 130048
  %552 = vst.msk [vmem:[#allocation2 + $0x18] sm:$0xff] %vm551, %v543
  %553 = vst [vmem:[#allocation2 + $0x20] sm:$0xff] %v544
  %554 = vst [vmem:[#allocation2 + $0x28] sm:$0xff] %v545
  %555 = vst [vmem:[#allocation2 + $0x30] sm:$0xff] %v546
  %556 = vst.msk [vmem:[#allocation2 + $0x38] sm:$0xff] %vm551, %v547
  // Predicated region
  $region14: #{forward.18} parent=0 // pred_check
    %p557 = pneg %p11
  $region15: #{forward.18} parent=0 // pred_check_branch
    %559 = sbr.rel (%p557) target = $region17
  $region16: #{forward.18} parent=0 // pred_region
    %v560 = vld [vmem:[#allocation2] sm:$0xff]
    %v561 = vld [vmem:[#allocation2 + $0x8] sm:$0xff]
    %v562 = vld [vmem:[#allocation2 + $0x10] sm:$0xff]
    %v563 = vld [vmem:[#allocation2 + $0x18] sm:$0xff]
    %v564 = vld [vmem:[#allocation2 + $0x20] sm:$0xff]
    %v565 = vld [vmem:[#allocation2 + $0x28] sm:$0xff]
    %v566 = vld [vmem:[#allocation2 + $0x30] sm:$0xff]
    %v567 = vld [vmem:[#allocation2 + $0x38] sm:$0xff]
    %v568 = vpack.c.bf16 %v561, %v560
    %v569 = vpack.c.bf16 %v563, %v562
    %v570 = vpack.c.bf16 %v565, %v564
    %v571 = vpack.c.bf16 %v567, %v566
    %572 = vst [vmem:[%s2] sm:$0xff] %v568
    %vm573 = vcmask 1043456
    %vm574 = vcmask 130052
    %vm575 = vmor %vm574, %vm573
    %576 = vst.msk [vmem:[%s2 + $0x8] sm:$0xff] %vm575, %v569
    %577 = vst [vmem:[%s2 + $0x10] sm:$0xff] %v570
    %578 = vst.msk [vmem:[%s2 + $0x18] sm:$0xff] %vm575, %v571
  $region17: #{forward.18} parent=0 // pred_fallthru
    _
  // Predicated region
  $region18: #{forward.18} parent=0 // pred_check
    _
  $region19: #{forward.18} parent=0 // pred_check_branch
    %580 = sbr.rel (0) target = $region21
  $region20: #{forward.18} parent=0 // pred_region
    _
  $region21: #{forward.18} parent=0 // pred_fallthru
    _
  // Predicated region
  $region22: #{forward.18} parent=0 // pred_check
    _
  $region23: #{forward.18} parent=0 // pred_check_branch
    %582 = sbr.rel (0) target = $region25
  $region24: #{forward.18} parent=0 // pred_region
    _
  $region25: #{forward.18} parent=0 // pred_fallthru
    _

// kernel: forward.19
$region0: #{forward.19}
  #allocation0 [shape = 'u32[]', space=smem, size = 0x4, offset = 0x4, fixed_abs, tag = 'smem constant byte address 0x4 - core index']
  #allocation1 [shape = 'u32[72,128]{1,0:T(1,128)}', space=vmem, size = 0x9000, scoped, tag = 'internal scratch']
  %s0 = inlined_call_operand.vmem [shape: bf16[24,16], index: 0, kind: input, shape index: {}]
  %s1 = inlined_call_operand.vmem [shape: bf16[1,16,400], index: 1, kind: input, shape index: {}]
  %s2 = inlined_call_operand.vmem [shape: f32[1,24,400], index: 2, kind: output, shape index: {}]
  %s3 = sld [smem:[#allocation0]]
  $region18: #{forward.19} parent=0
    _
  %s5 = ssub.s32 1, %s3
  %s6 = scalar_select 0, %s5, %s3
  // Predicated region
  $region2: #{forward.19} parent=0 // pred_check
    _
  $region3: #{forward.19} parent=0 // pred_check_branch
    %8 = sbr.rel (0) target = $region5
  $region4: #{forward.19} parent=0 // pred_region
    _
  $region5: #{forward.19} parent=0 // pred_fallthru
    _
  // Predicated region
  $region6: #{forward.19} parent=0 // pred_check
    _
  $region7: #{forward.19} parent=0 // pred_check_branch
    %10 = sbr.rel (0) target = $region9
  $region8: #{forward.19} parent=0 // pred_region
    _
  $region9: #{forward.19} parent=0 // pred_fallthru
    _
  %v12 = vld [vmem:[%s0] sm:$0xf]
  %v13 = vld [vmem:[%s0 + $0x4] sm:$0xf]
  %v14 = vld [vmem:[%s0 + $0x8] sm:$0xf]
  %v15 = vld [vmem:[%s1] sm:$0xff]
  %v16 = vld [vmem:[%s1 + $0x8] sm:$0xff]
  %v17 = vld [vmem:[%s1 + $0x10] sm:$0xff]
  %v18 = vld [vmem:[%s1 + $0x18] sm:$0xff]
  %v22 = vunpack.c.l.b16 %v12
  %v23 = vunpack.c.l.b16 %v13
  %v24 = vunpack.c.l.b16 %v14
  %v25 = vpack.c.b16 %v23, %v22
  %v26 = vpack.c.b16 %v24, %v24
  %v31 = vunpack.c.l.b16 %v15
  %v32 = vunpack.c.h.b16 %v15
  %v33 = vunpack.c.l.b16 %v16
  %v34 = vunpack.c.h.b16 %v16
  %v35 = vunpack.c.l.b16 %v17
  %v36 = vunpack.c.h.b16 %v17
  %v37 = vunpack.c.l.b16 %v18
  %v38 = vunpack.c.h.b16 %v18
  %v39 = vpack.c.b16 %v35, %v31
  %v40 = vpack.c.b16 %v36, %v32
  %v41 = vpack.c.b16 %v37, %v33
  %v42 = vpack.c.b16 %v38, %v34
  %vm47 = vcmask 130048
  %v49 = vsel %vm47, %v25, 0
  %v52 = vsel %vm47, %v26, 0
  %54 = vmatpush.bf16.msra.mxu0 0
  %55 = vmatpush.bf16.msra.mxu0 0
  %56 = vmatpush.bf16.msra.mxu0 0
  %57 = vmatpush.bf16.msra.mxu0 0
  %58 = vmatpush.bf16.msra.mxu0 0
  %59 = vmatpush.bf16.msra.mxu0 0
  %60 = vmatpush.bf16.msra.mxu0 0
  %61 = vmatpush.bf16.msra.mxu0 %v39
  %62 = vmatmul.bf16.gmra.mxu0 %v49
  %v63 = vpop.f32.mrf.mxu0
  %v64 = vadd.f32 0.0, %v63
  %v65 = vpop.f32.mrf.mxu0
  %v66 = vadd.f32 0.0, %v65
  %67 = vmatmul.bf16.gmra.mxu0 %v52
  %v68 = vpop.f32.mrf.mxu0
  %v69 = vadd.f32 0.0, %v68
  %v70 = vpop.f32.mrf.mxu0
  %71 = vdwg.mxu0
  %72 = vmatpush.bf16.msra.mxu0 0
  %73 = vmatpush.bf16.msra.mxu0 0
  %74 = vmatpush.bf16.msra.mxu0 0
  %75 = vmatpush.bf16.msra.mxu0 0
  %76 = vmatpush.bf16.msra.mxu0 0
  %77 = vmatpush.bf16.msra.mxu0 0
  %78 = vmatpush.bf16.msra.mxu0 0
  %79 = vmatpush.bf16.msra.mxu0 %v40
  %80 = vmatmul.bf16.gmra.mxu0 %v49
  %v81 = vpop.f32.mrf.mxu0
  %v82 = vadd.f32 0.0, %v81
  %v83 = vpop.f32.mrf.mxu0
  %v84 = vadd.f32 0.0, %v83
  %85 = vmatmul.bf16.gmra.mxu0 %v52
  %v86 = vpop.f32.mrf.mxu0
  %v87 = vadd.f32 0.0, %v86
  %v88 = vpop.f32.mrf.mxu0
  %89 = vdwg.mxu0
  %90 = vmatpush.bf16.msra.mxu0 0
  %91 = vmatpush.bf16.msra.mxu0 0
  %92 = vmatpush.bf16.msra.mxu0 0
  %93 = vmatpush.bf16.msra.mxu0 0
  %94 = vmatpush.bf16.msra.mxu0 0
  %95 = vmatpush.bf16.msra.mxu0 0
  %96 = vmatpush.bf16.msra.mxu0 0
  %97 = vmatpush.bf16.msra.mxu0 %v41
  %98 = vmatmul.bf16.gmra.mxu0 %v49
  %v99 = vpop.f32.mrf.mxu0
  %v100 = vadd.f32 0.0, %v99
  %v101 = vpop.f32.mrf.mxu0
  %v102 = vadd.f32 0.0, %v101
  %103 = vmatmul.bf16.gmra.mxu0 %v52
  %v104 = vpop.f32.mrf.mxu0
  %v105 = vadd.f32 0.0, %v104
  %v106 = vpop.f32.mrf.mxu0
  %107 = vdwg.mxu0
  %108 = vmatpush.bf16.msra.mxu0 0
  %109 = vmatpush.bf16.msra.mxu0 0
  %110 = vmatpush.bf16.msra.mxu0 0
  %111 = vmatpush.bf16.msra.mxu0 0
  %112 = vmatpush.bf16.msra.mxu0 0
  %113 = vmatpush.bf16.msra.mxu0 0
  %114 = vmatpush.bf16.msra.mxu0 0
  %115 = vmatpush.bf16.msra.mxu0 %v42
  %116 = vmatmul.bf16.gmra.mxu0 %v49
  %v117 = vpop.f32.mrf.mxu0
  %v118 = vadd.f32 0.0, %v117
  %v119 = vpop.f32.mrf.mxu0
  %v120 = vadd.f32 0.0, %v119
  %121 = vmatmul.bf16.gmra.mxu0 %v52
  %v122 = vpop.f32.mrf.mxu0
  %v123 = vadd.f32 0.0, %v122
  %v124 = vpop.f32.mrf.mxu0
  %125 = vdwg.mxu0
  %126 = vst [vmem:[%s2] sm:$0xff] %v64
  %127 = vst [vmem:[%s2 + $0x8] sm:$0xff] %v82
  %128 = vst [vmem:[%s2 + $0x10] sm:$0xff] %v100
  %129 = vst.msk [vmem:[%s2 + $0x18] sm:$0xff] %vm47, %v118
  %130 = vst [vmem:[%s2 + $0x20] sm:$0xff] %v66
  %131 = vst [vmem:[%s2 + $0x28] sm:$0xff] %v84
  %132 = vst [vmem:[%s2 + $0x30] sm:$0xff] %v102
  %133 = vst.msk [vmem:[%s2 + $0x38] sm:$0xff] %vm47, %v120
  %134 = vst [vmem:[%s2 + $0x40] sm:$0xff] %v69
  %135 = vst [vmem:[%s2 + $0x48] sm:$0xff] %v87
  %136 = vst [vmem:[%s2 + $0x50] sm:$0xff] %v105
  %137 = vst.msk [vmem:[%s2 + $0x58] sm:$0xff] %vm47, %v123
  // Predicated region
  $region10: #{forward.19} parent=0 // pred_check
    _
  $region11: #{forward.19} parent=0 // pred_check_branch
    %139 = sbr.rel (0) target = $region13
  $region12: #{forward.19} parent=0 // pred_region
    _
  $region13: #{forward.19} parent=0 // pred_fallthru
    _
  // Predicated region
  $region14: #{forward.19} parent=0 // pred_check
    _
  $region15: #{forward.19} parent=0 // pred_check_branch
    %141 = sbr.rel (0) target = $region17
  $region16: #{forward.19} parent=0 // pred_region
    _
  $region17: #{forward.19} parent=0 // pred_fallthru
    _

// kernel: squeeze.24
$region0: #{squeeze.24}
  %s0 = inlined_call_operand.vmem [shape: f32[1,8,8,8], index: 0, kind: input, shape index: {}]
  %s1 = inlined_call_operand.vmem [shape: f32[1,4,128], index: 1, kind: output, shape index: {}]
  $region1: #{squeeze.24} parent=0
    #allocation0 [shape = 'u8[4096]{0}', space=vmem, size = 0x1000, scoped, tag = 'scoped mem for output reshape']
    %s2 = smov 3
    %v3 = vld [vmem:[%s0] ss:$16 sm:%s2]
    %s4 = smov 12
    %v5 = vld [vmem:[%s0] ss:$16 sm:%s4]
    %vm6 = vcmask 1043458
    %v7 = vsel %vm6, %v5, %v3
    %vm8 = vcmask 64512
    %9 = vst.msk [vmem:[#allocation0] sm:$0xf] %vm8, %v7
    %s10 = scalar_lea.vmem %s0, 15
    %s11 = smov 3
    %v12 = vld [vmem:[%s10] ss:$16 sm:%s11]
    %s13 = scalar_lea.vmem %s0, 15
    %s14 = smov 12
    %v15 = vld [vmem:[%s13] ss:$16 sm:%s14]
    %vm16 = vcmask 1043458
    %v17 = vsel %vm16, %v15, %v12
    %18 = vrot.lane.b32.xlu0 %v17, 120
    %v19 = vpop.permute.xlu0 %18
    %vm20 = vcmask 1048512
    %21 = vst.msk [vmem:[#allocation0] sm:$0xf] %vm20, %v19
    %s22 = scalar_lea.vmem %s0, 14
    %s23 = smov 3
    %v24 = vld [vmem:[%s22] ss:$16 sm:%s23]
    %s25 = scalar_lea.vmem %s0, 14
    %s26 = smov 12
    %v27 = vld [vmem:[%s25] ss:$16 sm:%s26]
    %vm28 = vcmask 1043458
    %v29 = vsel %vm28, %v27, %v24
    %30 = vrot.lane.b32.xlu0 %v29, 112
    %v31 = vpop.permute.xlu0 %30
    %vm32 = vcmask 982912
    %33 = vst.msk [vmem:[#allocation0] sm:$0xf] %vm32, %v31
    %s34 = scalar_lea.vmem %s0, 13
    %s35 = smov 3
    %v36 = vld [vmem:[%s34] ss:$16 sm:%s35]
    %s37 = scalar_lea.vmem %s0, 13
    %s38 = smov 12
    %v39 = vld [vmem:[%s37] ss:$16 sm:%s38]
    %vm40 = vcmask 1043458
    %v41 = vsel %vm40, %v39, %v36
    %42 = vrot.lane.b32.xlu0 %v41, 104
    %v43 = vpop.permute.xlu0 %42
    %vm44 = vcmask 917312
    %45 = vst.msk [vmem:[#allocation0] sm:$0xf] %vm44, %v43
    %s46 = scalar_lea.vmem %s0, 12
    %s47 = smov 3
    %v48 = vld [vmem:[%s46] ss:$16 sm:%s47]
    %s49 = scalar_lea.vmem %s0, 12
    %s50 = smov 12
    %v51 = vld [vmem:[%s49] ss:$16 sm:%s50]
    %vm52 = vcmask 1043458
    %v53 = vsel %vm52, %v51, %v48
    %54 = vrot.lane.b32.xlu0 %v53, 96
    %v55 = vpop.permute.xlu0 %54
    %vm56 = vcmask 851712
    %57 = vst.msk [vmem:[#allocation0] sm:$0xf] %vm56, %v55
    %s58 = scalar_lea.vmem %s0, 11
    %s59 = smov 3
    %v60 = vld [vmem:[%s58] ss:$16 sm:%s59]
    %s61 = scalar_lea.vmem %s0, 11
    %s62 = smov 12
    %v63 = vld [vmem:[%s61] ss:$16 sm:%s62]
    %vm64 = vcmask 1043458
    %v65 = vsel %vm64, %v63, %v60
    %66 = vrot.lane.b32.xlu0 %v65, 88
    %v67 = vpop.permute.xlu0 %66
    %vm68 = vcmask 786112
    %69 = vst.msk [vmem:[#allocation0] sm:$0xf] %vm68, %v67
    %s70 = scalar_lea.vmem %s0, 10
    %s71 = smov 3
    %v72 = vld [vmem:[%s70] ss:$16 sm:%s71]
    %s73 = scalar_lea.vmem %s0, 10
    %s74 = smov 12
    %v75 = vld [vmem:[%s73] ss:$16 sm:%s74]
    %vm76 = vcmask 1043458
    %v77 = vsel %vm76, %v75, %v72
    %78 = vrot.lane.b32.xlu0 %v77, 80
    %v79 = vpop.permute.xlu0 %78
    %vm80 = vcmask 720512
    %81 = vst.msk [vmem:[#allocation0] sm:$0xf] %vm80, %v79
    %s82 = scalar_lea.vmem %s0, 9
    %s83 = smov 3
    %v84 = vld [vmem:[%s82] ss:$16 sm:%s83]
    %s85 = scalar_lea.vmem %s0, 9
    %s86 = smov 12
    %v87 = vld [vmem:[%s85] ss:$16 sm:%s86]
    %vm88 = vcmask 1043458
    %v89 = vsel %vm88, %v87, %v84
    %90 = vrot.lane.b32.xlu0 %v89, 72
    %v91 = vpop.permute.xlu0 %90
    %vm92 = vcmask 654912
    %93 = vst.msk [vmem:[#allocation0] sm:$0xf] %vm92, %v91
    %s94 = scalar_lea.vmem %s0, 8
    %s95 = smov 3
    %v96 = vld [vmem:[%s94] ss:$16 sm:%s95]
    %s97 = scalar_lea.vmem %s0, 8
    %s98 = smov 12
    %v99 = vld [vmem:[%s97] ss:$16 sm:%s98]
    %vm100 = vcmask 1043458
    %v101 = vsel %vm100, %v99, %v96
    %102 = vrot.lane.b32.xlu0 %v101, 64
    %v103 = vpop.permute.xlu0 %102
    %vm104 = vcmask 589312
    %105 = vst.msk [vmem:[#allocation0] sm:$0xf] %vm104, %v103
    %s106 = scalar_lea.vmem %s0, 7
    %s107 = smov 3
    %v108 = vld [vmem:[%s106] ss:$16 sm:%s107]
    %s109 = scalar_lea.vmem %s0, 7
    %s110 = smov 12
    %v111 = vld [vmem:[%s109] ss:$16 sm:%s110]
    %vm112 = vcmask 1043458
    %v113 = vsel %vm112, %v111, %v108
    %114 = vrot.lane.b32.xlu0 %v113, 56
    %v115 = vpop.permute.xlu0 %114
    %vm116 = vcmask 523712
    %117 = vst.msk [vmem:[#allocation0] sm:$0xf] %vm116, %v115
    %s118 = scalar_lea.vmem %s0, 6
    %s119 = smov 3
    %v120 = vld [vmem:[%s118] ss:$16 sm:%s119]
    %s121 = scalar_lea.vmem %s0, 6
    %s122 = smov 12
    %v123 = vld [vmem:[%s121] ss:$16 sm:%s122]
    %vm124 = vcmask 1043458
    %v125 = vsel %vm124, %v123, %v120
    %126 = vrot.lane.b32.xlu0 %v125, 48
    %v127 = vpop.permute.xlu0 %126
    %vm128 = vcmask 458112
    %129 = vst.msk [vmem:[#allocation0] sm:$0xf] %vm128, %v127
    %s130 = scalar_lea.vmem %s0, 5
    %s131 = smov 3
    %v132 = vld [vmem:[%s130] ss:$16 sm:%s131]
    %s133 = scalar_lea.vmem %s0, 5
    %s134 = smov 12
    %v135 = vld [vmem:[%s133] ss:$16 sm:%s134]
    %vm136 = vcmask 1043458
    %v137 = vsel %vm136, %v135, %v132
    %138 = vrot.lane.b32.xlu0 %v137, 40
    %v139 = vpop.permute.xlu0 %138
    %vm140 = vcmask 392512
    %141 = vst.msk [vmem:[#allocation0] sm:$0xf] %vm140, %v139
    %s142 = scalar_lea.vmem %s0, 4
    %s143 = smov 3
    %v144 = vld [vmem:[%s142] ss:$16 sm:%s143]
    %s145 = scalar_lea.vmem %s0, 4
    %s146 = smov 12
    %v147 = vld [vmem:[%s145] ss:$16 sm:%s146]
    %vm148 = vcmask 1043458
    %v149 = vsel %vm148, %v147, %v144
    %150 = vrot.lane.b32.xlu0 %v149, 32
    %v151 = vpop.permute.xlu0 %150
    %vm152 = vcmask 326912
    %153 = vst.msk [vmem:[#allocation0] sm:$0xf] %vm152, %v151
    %s154 = scalar_lea.vmem %s0, 3
    %s155 = smov 3
    %v156 = vld [vmem:[%s154] ss:$16 sm:%s155]
    %s157 = scalar_lea.vmem %s0, 3
    %s158 = smov 12
    %v159 = vld [vmem:[%s157] ss:$16 sm:%s158]
    %vm160 = vcmask 1043458
    %v161 = vsel %vm160, %v159, %v156
    %162 = vrot.lane.b32.xlu0 %v161, 24
    %v163 = vpop.permute.xlu0 %162
    %vm164 = vcmask 261312
    %165 = vst.msk [vmem:[#allocation0] sm:$0xf] %vm164, %v163
    %s166 = scalar_lea.vmem %s0, 2
    %s167 = smov 3
    %v168 = vld [vmem:[%s166] ss:$16 sm:%s167]
    %s169 = scalar_lea.vmem %s0, 2
    %s170 = smov 12
    %v171 = vld [vmem:[%s169] ss:$16 sm:%s170]
    %vm172 = vcmask 1043458
    %v173 = vsel %vm172, %v171, %v168
    %174 = vrot.lane.b32.xlu0 %v173, 16
    %v175 = vpop.permute.xlu0 %174
    %vm176 = vcmask 195712
    %177 = vst.msk [vmem:[#allocation0] sm:$0xf] %vm176, %v175
    %s178 = scalar_lea.vmem %s0, 1
    %s179 = smov 3
    %v180 = vld [vmem:[%s178] ss:$16 sm:%s179]
    %s181 = scalar_lea.vmem %s0, 1
    %s182 = smov 12
    %v183 = vld [vmem:[%s181] ss:$16 sm:%s182]
    %vm184 = vcmask 1043458
    %v185 = vsel %vm184, %v183, %v180
    %186 = vrot.lane.b32.xlu0 %v185, 8
    %v187 = vpop.permute.xlu0 %186
    %vm188 = vcmask 130112
    %189 = vst.msk [vmem:[#allocation0] sm:$0xf] %vm188, %v187
    %s191 = ssub.s32 16, 1
    %v192 = vld [vmem:[#allocation0] sm:%s191]
    %s194 = ssub.s32 16, 1
    %195 = vst [vmem:[%s1] sm:%s194] %v192

// kernel: squeeze.23
$region0: #{squeeze.23}
  %s0 = inlined_call_operand.vmem [shape: f32[1,1,8,8,8], index: 0, kind: input, shape index: {}]
  %s1 = inlined_call_operand.vmem [shape: f32[1,4,128], index: 1, kind: output, shape index: {}]
  $region1: #{squeeze.23} parent=0
    #allocation0 [shape = 'u8[4096]{0}', space=vmem, size = 0x1000, scoped, tag = 'scoped mem for output reshape']
    %s2 = smov 3
    %v3 = vld [vmem:[%s0] ss:$16 sm:%s2]
    %s4 = smov 12
    %v5 = vld [vmem:[%s0] ss:$16 sm:%s4]
    %vm6 = vcmask 1043458
    %v7 = vsel %vm6, %v5, %v3
    %vm8 = vcmask 64512
    %9 = vst.msk [vmem:[#allocation0] sm:$0xf] %vm8, %v7
    %s10 = scalar_lea.vmem %s0, 15
    %s11 = smov 3
    %v12 = vld [vmem:[%s10] ss:$16 sm:%s11]
    %s13 = scalar_lea.vmem %s0, 15
    %s14 = smov 12
    %v15 = vld [vmem:[%s13] ss:$16 sm:%s14]
    %vm16 = vcmask 1043458
    %v17 = vsel %vm16, %v15, %v12
    %18 = vrot.lane.b32.xlu0 %v17, 120
    %v19 = vpop.permute.xlu0 %18
    %vm20 = vcmask 1048512
    %21 = vst.msk [vmem:[#allocation0] sm:$0xf] %vm20, %v19
    %s22 = scalar_lea.vmem %s0, 14
    %s23 = smov 3
    %v24 = vld [vmem:[%s22] ss:$16 sm:%s23]
    %s25 = scalar_lea.vmem %s0, 14
    %s26 = smov 12
    %v27 = vld [vmem:[%s25] ss:$16 sm:%s26]
    %vm28 = vcmask 1043458
    %v29 = vsel %vm28, %v27, %v24
    %30 = vrot.lane.b32.xlu0 %v29, 112
    %v31 = vpop.permute.xlu0 %30
    %vm32 = vcmask 982912
    %33 = vst.msk [vmem:[#allocation0] sm:$0xf] %vm32, %v31
    %s34 = scalar_lea.vmem %s0, 13
    %s35 = smov 3
    %v36 = vld [vmem:[%s34] ss:$16 sm:%s35]
    %s37 = scalar_lea.vmem %s0, 13
    %s38 = smov 12
    %v39 = vld [vmem:[%s37] ss:$16 sm:%s38]
    %vm40 = vcmask 1043458
    %v41 = vsel %vm40, %v39, %v36
    %42 = vrot.lane.b32.xlu0 %v41, 104
    %v43 = vpop.permute.xlu0 %42
    %vm44 = vcmask 917312
    %45 = vst.msk [vmem:[#allocation0] sm:$0xf] %vm44, %v43
    %s46 = scalar_lea.vmem %s0, 12
    %s47 = smov 3
    %v48 = vld [vmem:[%s46] ss:$16 sm:%s47]
    %s49 = scalar_lea.vmem %s0, 12
    %s50 = smov 12
    %v51 = vld [vmem:[%s49] ss:$16 sm:%s50]
    %vm52 = vcmask 1043458
    %v53 = vsel %vm52, %v51, %v48
    %54 = vrot.lane.b32.xlu0 %v53, 96
    %v55 = vpop.permute.xlu0 %54
    %vm56 = vcmask 851712
    %57 = vst.msk [vmem:[#allocation0] sm:$0xf] %vm56, %v55
    %s58 = scalar_lea.vmem %s0, 11
    %s59 = smov 3
    %v60 = vld [vmem:[%s58] ss:$16 sm:%s59]
    %s61 = scalar_lea.vmem %s0, 11
    %s62 = smov 12
    %v63 = vld [vmem:[%s61] ss:$16 sm:%s62]
    %vm64 = vcmask 1043458
    %v65 = vsel %vm64, %v63, %v60
    %66 = vrot.lane.b32.xlu0 %v65, 88
    %v67 = vpop.permute.xlu0 %66
    %vm68 = vcmask 786112
    %69 = vst.msk [vmem:[#allocation0] sm:$0xf] %vm68, %v67
    %s70 = scalar_lea.vmem %s0, 10
    %s71 = smov 3
    %v72 = vld [vmem:[%s70] ss:$16 sm:%s71]
    %s73 = scalar_lea.vmem %s0, 10
    %s74 = smov 12
    %v75 = vld [vmem:[%s73] ss:$16 sm:%s74]
    %vm76 = vcmask 1043458
    %v77 = vsel %vm76, %v75, %v72
    %78 = vrot.lane.b32.xlu0 %v77, 80
    %v79 = vpop.permute.xlu0 %78
    %vm80 = vcmask 720512
    %81 = vst.msk [vmem:[#allocation0] sm:$0xf] %vm80, %v79
    %s82 = scalar_lea.vmem %s0, 9
    %s83 = smov 3
    %v84 = vld [vmem:[%s82] ss:$16 sm:%s83]
    %s85 = scalar_lea.vmem %s0, 9
    %s86 = smov 12
    %v87 = vld [vmem:[%s85] ss:$16 sm:%s86]
    %vm88 = vcmask 1043458
    %v89 = vsel %vm88, %v87, %v84
    %90 = vrot.lane.b32.xlu0 %v89, 72
    %v91 = vpop.permute.xlu0 %90
    %vm92 = vcmask 654912
    %93 = vst.msk [vmem:[#allocation0] sm:$0xf] %vm92, %v91
    %s94 = scalar_lea.vmem %s0, 8
    %s95 = smov 3
    %v96 = vld [vmem:[%s94] ss:$16 sm:%s95]
    %s97 = scalar_lea.vmem %s0, 8
    %s98 = smov 12
    %v99 = vld [vmem:[%s97] ss:$16 sm:%s98]
    %vm100 = vcmask 1043458
    %v101 = vsel %vm100, %v99, %v96
    %102 = vrot.lane.b32.xlu0 %v101, 64
    %v103 = vpop.permute.xlu0 %102
    %vm104 = vcmask 589312
    %105 = vst.msk [vmem:[#allocation0] sm:$0xf] %vm104, %v103
    %s106 = scalar_lea.vmem %s0, 7
    %s107 = smov 3
    %v108 = vld [vmem:[%s106] ss:$16 sm:%s107]
    %s109 = scalar_lea.vmem %s0, 7
    %s110 = smov 12
    %v111 = vld [vmem:[%s109] ss:$16 sm:%s110]
    %vm112 = vcmask 1043458
    %v113 = vsel %vm112, %v111, %v108
    %114 = vrot.lane.b32.xlu0 %v113, 56
    %v115 = vpop.permute.xlu0 %114
    %vm116 = vcmask 523712
    %117 = vst.msk [vmem:[#allocation0] sm:$0xf] %vm116, %v115
    %s118 = scalar_lea.vmem %s0, 6
    %s119 = smov 3
    %v120 = vld [vmem:[%s118] ss:$16 sm:%s119]
    %s121 = scalar_lea.vmem %s0, 6
    %s122 = smov 12
    %v123 = vld [vmem:[%s121] ss:$16 sm:%s122]
    %vm124 = vcmask 1043458
    %v125 = vsel %vm124, %v123, %v120
    %126 = vrot.lane.b32.xlu0 %v125, 48
    %v127 = vpop.permute.xlu0 %126
    %vm128 = vcmask 458112
    %129 = vst.msk [vmem:[#allocation0] sm:$0xf] %vm128, %v127
    %s130 = scalar_lea.vmem %s0, 5
    %s131 = smov 3
    %v132 = vld [vmem:[%s130] ss:$16 sm:%s131]
    %s133 = scalar_lea.vmem %s0, 5
    %s134 = smov 12
    %v135 = vld [vmem:[%s133] ss:$16 sm:%s134]
    %vm136 = vcmask 1043458
    %v137 = vsel %vm136, %v135, %v132
    %138 = vrot.lane.b32.xlu0 %v137, 40
    %v139 = vpop.permute.xlu0 %138
    %vm140 = vcmask 392512
    %141 = vst.msk [vmem:[#allocation0] sm:$0xf] %vm140, %v139
    %s142 = scalar_lea.vmem %s0, 4
    %s143 = smov 3
    %v144 = vld [vmem:[%s142] ss:$16 sm:%s143]
    %s145 = scalar_lea.vmem %s0, 4
    %s146 = smov 12
    %v147 = vld [vmem:[%s145] ss:$16 sm:%s146]
    %vm148 = vcmask 1043458
    %v149 = vsel %vm148, %v147, %v144
    %150 = vrot.lane.b32.xlu0 %v149, 32
    %v151 = vpop.permute.xlu0 %150
    %vm152 = vcmask 326912
    %153 = vst.msk [vmem:[#allocation0] sm:$0xf] %vm152, %v151
    %s154 = scalar_lea.vmem %s0, 3
    %s155 = smov 3
    %v156 = vld [vmem:[%s154] ss:$16 sm:%s155]
    %s157 = scalar_lea.vmem %s0, 3
    %s158 = smov 12
    %v159 = vld [vmem:[%s157] ss:$16 sm:%s158]
    %vm160 = vcmask 1043458
    %v161 = vsel %vm160, %v159, %v156
    %162 = vrot.lane.b32.xlu0 %v161, 24
    %v163 = vpop.permute.xlu0 %162
    %vm164 = vcmask 261312
    %165 = vst.msk [vmem:[#allocation0] sm:$0xf] %vm164, %v163
    %s166 = scalar_lea.vmem %s0, 2
    %s167 = smov 3
    %v168 = vld [vmem:[%s166] ss:$16 sm:%s167]
    %s169 = scalar_lea.vmem %s0, 2
    %s170 = smov 12
    %v171 = vld [vmem:[%s169] ss:$16 sm:%s170]
    %vm172 = vcmask 1043458
    %v173 = vsel %vm172, %v171, %v168
    %174 = vrot.lane.b32.xlu0 %v173, 16
    %v175 = vpop.permute.xlu0 %174
    %vm176 = vcmask 195712
    %177 = vst.msk [vmem:[#allocation0] sm:$0xf] %vm176, %v175
    %s178 = scalar_lea.vmem %s0, 1
    %s179 = smov 3
    %v180 = vld [vmem:[%s178] ss:$16 sm:%s179]
    %s181 = scalar_lea.vmem %s0, 1
    %s182 = smov 12
    %v183 = vld [vmem:[%s181] ss:$16 sm:%s182]
    %vm184 = vcmask 1043458
    %v185 = vsel %vm184, %v183, %v180
    %186 = vrot.lane.b32.xlu0 %v185, 8
    %v187 = vpop.permute.xlu0 %186
    %vm188 = vcmask 130112
    %189 = vst.msk [vmem:[#allocation0] sm:$0xf] %vm188, %v187
    %s191 = ssub.s32 16, 1
    %v192 = vld [vmem:[#allocation0] sm:%s191]
    %s194 = ssub.s32 16, 1
    %195 = vst [vmem:[%s1] sm:%s194] %v192

// kernel: forward.20
$region0: #{forward.20}
  #allocation0 [shape = 'u32[]', space=smem, size = 0x4, offset = 0x4, fixed_abs, tag = 'smem constant byte address 0x4 - core index']
  #allocation1 [shape = 'u32[72,128]{1,0:T(1,128)}', space=vmem, size = 0x9000, scoped, tag = 'internal scratch']
  %s0 = inlined_call_operand.vmem [shape: f32[1,24,400], index: 0, kind: input, shape index: {}]
  %s1 = inlined_call_operand.vmem [shape: f32[2,400], index: 1, kind: input, shape index: {}]
  %s2 = inlined_call_operand.vmem [shape: f32[1,1,8,128], index: 2, kind: output, shape index: {}]
  %s3 = sld [smem:[#allocation0]]
  $region18: #{forward.20} parent=0
    _
  %s5 = ssub.s32 1, %s3
  %s6 = scalar_select 0, %s5, %s3
  // Predicated region
  $region2: #{forward.20} parent=0 // pred_check
    _
  $region3: #{forward.20} parent=0 // pred_check_branch
    %8 = sbr.rel (0) target = $region5
  $region4: #{forward.20} parent=0 // pred_region
    _
  $region5: #{forward.20} parent=0 // pred_fallthru
    _
  // Predicated region
  $region6: #{forward.20} parent=0 // pred_check
    _
  $region7: #{forward.20} parent=0 // pred_check_branch
    %10 = sbr.rel (0) target = $region9
  $region8: #{forward.20} parent=0 // pred_region
    _
  $region9: #{forward.20} parent=0 // pred_fallthru
    _
  %v11 = vld [vmem:[%s0] sm:$0xff]
  %v12 = vld [vmem:[%s0 + $0x8] sm:$0xff]
  %v13 = vld [vmem:[%s0 + $0x10] sm:$0xff]
  %v14 = vld [vmem:[%s0 + $0x18] sm:$0xff]
  %v15 = vld [vmem:[%s0 + $0x20] sm:$0xff]
  %v16 = vld [vmem:[%s0 + $0x28] sm:$0xff]
  %v17 = vld [vmem:[%s0 + $0x30] sm:$0xff]
  %v18 = vld [vmem:[%s0 + $0x38] sm:$0xff]
  %v19 = vld [vmem:[%s0 + $0x40] sm:$0xff]
  %v20 = vld [vmem:[%s0 + $0x48] sm:$0xff]
  %v21 = vld [vmem:[%s0 + $0x50] sm:$0xff]
  %v22 = vld [vmem:[%s0 + $0x58] sm:$0xff]
  %vm23 = vcmp.ne.f32.partialorder %v11, 0.0
  %vm24 = vcmp.ne.f32.partialorder %v12, 0.0
  %vm25 = vcmp.ne.f32.partialorder %v13, 0.0
  %vm26 = vcmp.ne.f32.partialorder %v14, 0.0
  %vm27 = vcmp.ne.f32.partialorder %v15, 0.0
  %vm28 = vcmp.ne.f32.partialorder %v16, 0.0
  %vm29 = vcmp.ne.f32.partialorder %v17, 0.0
  %vm30 = vcmp.ne.f32.partialorder %v18, 0.0
  %vm31 = vcmp.ne.f32.partialorder %v19, 0.0
  %vm32 = vcmp.ne.f32.partialorder %v20, 0.0
  %vm33 = vcmp.ne.f32.partialorder %v21, 0.0
  %vm34 = vcmp.ne.f32.partialorder %v22, 0.0
  %v35 = vsel %vm23, 1, 0
  %v36 = vsel %vm24, 1, 0
  %v37 = vsel %vm25, 1, 0
  %v38 = vsel %vm26, 1, 0
  %v39 = vsel %vm27, 1, 0
  %v40 = vsel %vm28, 1, 0
  %v41 = vsel %vm29, 1, 0
  %v42 = vsel %vm30, 1, 0
  %v43 = vsel %vm31, 1, 0
  %v44 = vsel %vm32, 1, 0
  %v45 = vsel %vm33, 1, 0
  %v46 = vsel %vm34, 1, 0
  %v47 = vcvt.s32.f32 %v35
  %v48 = vcvt.s32.f32 %v36
  %v49 = vcvt.s32.f32 %v37
  %v50 = vcvt.s32.f32 %v38
  %v51 = vcvt.s32.f32 %v39
  %v52 = vcvt.s32.f32 %v40
  %v53 = vcvt.s32.f32 %v41
  %v54 = vcvt.s32.f32 %v42
  %v55 = vcvt.s32.f32 %v43
  %v56 = vcvt.s32.f32 %v44
  %v57 = vcvt.s32.f32 %v45
  %v58 = vcvt.s32.f32 %v46
  %v59 = vlaneseq
  %v60 = vshrl.u32 %v59, 7
  %v61 = vadd.s32 %v60, 8
  %v62 = vadd.s32 %v60, 16
  %s63 = smul.u32 0, 24
  %v64 = vstv %s63
  %v65 = vadd.s32 %v60, %v64
  %v66 = vadd.s32 %v61, %v64
  %v67 = vadd.s32 %v62, %v64
  %v68 = vcvt.s32.f32 %v65
  %v69 = vcvt.s32.f32 %v66
  %v70 = vcvt.s32.f32 %v67
  %v71 = vmul.f32 %v47, %v68
  %v72 = vmul.f32 %v48, %v68
  %v73 = vmul.f32 %v49, %v68
  %v74 = vmul.f32 %v50, %v68
  %v75 = vmul.f32 %v51, %v69
  %v76 = vmul.f32 %v52, %v69
  %v77 = vmul.f32 %v53, %v69
  %v78 = vmul.f32 %v54, %v69
  %v79 = vmul.f32 %v55, %v70
  %v80 = vmul.f32 %v56, %v70
  %v81 = vmul.f32 %v57, %v70
  %v82 = vmul.f32 %v58, %v70
  %v83 = vadd.f32 %v71, %v72
  %v84 = vadd.f32 %v83, %v73
  %vm85 = vcmask 130048
  %v86 = vsel %vm85, %v74, 0.0
  %v87 = vadd.f32 %v84, %v86
  %v88 = vadd.f32 %v87, %v75
  %v89 = vadd.f32 %v88, %v76
  %v90 = vadd.f32 %v89, %v77
  %v91 = vsel %vm85, %v78, 0.0
  %v92 = vadd.f32 %v90, %v91
  %v93 = vadd.f32 %v92, %v79
  %v94 = vadd.f32 %v93, %v80
  %v95 = vadd.f32 %v94, %v81
  %v96 = vsel %vm85, %v82, 0.0
  %v97 = vadd.f32 %v95, %v96
  %98 = vadd.xlane.f32.xlu0 %v97
  %v99 = vpop.xlane.xlu0 %98
  %v100 = vrot.slane %v99, 4
  %v101 = vadd.f32 %v99, %v100
  %v102 = vrot.slane %v101, 2
  %v103 = vadd.f32 %v101, %v102
  %v104 = vrot.slane %v103, 1
  %v105 = vadd.f32 %v103, %v104
  %s106 = vtos %v105
  %v107 = vld [vmem:[%s1] ss:$2 sm:$0xf]
  %v109 = vperm.slane %v107, 0
  %v110 = vperm.slane %v107, 1
  %v111 = vperm.slane %v107, 2
  %v112 = vperm.slane %v107, 3
  %v117 = vmul.f32 %v47, %v109
  %v118 = vmul.f32 %v48, %v110
  %v119 = vmul.f32 %v49, %v111
  %v120 = vmul.f32 %v50, %v112
  %v121 = vmul.f32 %v51, %v109
  %v122 = vmul.f32 %v52, %v110
  %v123 = vmul.f32 %v53, %v111
  %v124 = vmul.f32 %v54, %v112
  %v125 = vmul.f32 %v55, %v109
  %v126 = vmul.f32 %v56, %v110
  %v127 = vmul.f32 %v57, %v111
  %v128 = vmul.f32 %v58, %v112
  %v129 = vadd.f32 %v117, %v118
  %v130 = vadd.f32 %v129, %v119
  %v131 = vsel %vm85, %v120, 0.0
  %v132 = vadd.f32 %v130, %v131
  %v133 = vadd.f32 %v132, %v121
  %v134 = vadd.f32 %v133, %v122
  %v135 = vadd.f32 %v134, %v123
  %v136 = vsel %vm85, %v124, 0.0
  %v137 = vadd.f32 %v135, %v136
  %v138 = vadd.f32 %v137, %v125
  %v139 = vadd.f32 %v138, %v126
  %v140 = vadd.f32 %v139, %v127
  %v141 = vsel %vm85, %v128, 0.0
  %v142 = vadd.f32 %v140, %v141
  %143 = vadd.xlane.f32.xlu0 %v142
  %v144 = vpop.xlane.xlu0 %143
  %v145 = vrot.slane %v144, 4
  %v146 = vadd.f32 %v144, %v145
  %v147 = vrot.slane %v146, 2
  %v148 = vadd.f32 %v146, %v147
  %v149 = vrot.slane %v148, 1
  %v150 = vadd.f32 %v148, %v149
  %s151 = vtos %v150
  %s152 = scalar_lea.vmem %s1, 1
  %v153 = vld [vmem:[%s152] ss:$2 sm:$0xf]
  %v155 = vperm.slane %v153, 0
  %v156 = vperm.slane %v153, 1
  %v157 = vperm.slane %v153, 2
  %v158 = vperm.slane %v153, 3
  %v163 = vmul.f32 %v47, %v155
  %v164 = vmul.f32 %v48, %v156
  %v165 = vmul.f32 %v49, %v157
  %v166 = vmul.f32 %v50, %v158
  %v167 = vmul.f32 %v51, %v155
  %v168 = vmul.f32 %v52, %v156
  %v169 = vmul.f32 %v53, %v157
  %v170 = vmul.f32 %v54, %v158
  %v171 = vmul.f32 %v55, %v155
  %v172 = vmul.f32 %v56, %v156
  %v173 = vmul.f32 %v57, %v157
  %v174 = vmul.f32 %v58, %v158
  %v175 = vadd.f32 %v163, %v164
  %v176 = vadd.f32 %v175, %v165
  %v177 = vsel %vm85, %v166, 0.0
  %v178 = vadd.f32 %v176, %v177
  %v179 = vadd.f32 %v178, %v167
  %v180 = vadd.f32 %v179, %v168
  %v181 = vadd.f32 %v180, %v169
  %v182 = vsel %vm85, %v170, 0.0
  %v183 = vadd.f32 %v181, %v182
  %v184 = vadd.f32 %v183, %v171
  %v185 = vadd.f32 %v184, %v172
  %v186 = vadd.f32 %v185, %v173
  %v187 = vsel %vm85, %v174, 0.0
  %v188 = vadd.f32 %v186, %v187
  %189 = vadd.xlane.f32.xlu0 %v188
  %v190 = vpop.xlane.xlu0 %189
  %v191 = vrot.slane %v190, 4
  %v192 = vadd.f32 %v190, %v191
  %v193 = vrot.slane %v192, 2
  %v194 = vadd.f32 %v192, %v193
  %v195 = vrot.slane %v194, 1
  %v196 = vadd.f32 %v194, %v195
  %s197 = vtos %v196
  %v198 = vadd.f32 %v47, %v48
  %v199 = vadd.f32 %v198, %v49
  %v200 = vsel %vm85, %v50, 0.0
  %v201 = vadd.f32 %v199, %v200
  %v202 = vadd.f32 %v201, %v51
  %v203 = vadd.f32 %v202, %v52
  %v204 = vadd.f32 %v203, %v53
  %v205 = vsel %vm85, %v54, 0.0
  %v206 = vadd.f32 %v204, %v205
  %v207 = vadd.f32 %v206, %v55
  %v208 = vadd.f32 %v207, %v56
  %v209 = vadd.f32 %v208, %v57
  %v210 = vsel %vm85, %v58, 0.0
  %v211 = vadd.f32 %v209, %v210
  %212 = vadd.xlane.f32.xlu0 %v211
  %v213 = vpop.xlane.xlu0 %212
  %v214 = vrot.slane %v213, 4
  %v215 = vadd.f32 %v213, %v214
  %v216 = vrot.slane %v215, 2
  %v217 = vadd.f32 %v215, %v216
  %v218 = vrot.slane %v217, 1
  %v219 = vadd.f32 %v217, %v218
  %s220 = vtos %v219
  %v221 = vlaneseq
  %v222 = vand.u32 %v221, 127
  %vm223 = vcmp.eq.s32.totalorder %v222, 0
  %v224 = vstv %s106
  %v225 = vsel %vm223, %v224, 0.0
  %vm226 = vcmp.eq.s32.totalorder %v222, 1
  %v227 = vstv %s151
  %v228 = vsel %vm226, %v227, 0.0
  %v229 = vadd.f32 %v225, %v228
  %vm230 = vcmp.eq.s32.totalorder %v222, 2
  %v231 = vstv %s197
  %v232 = vsel %vm230, %v231, 0.0
  %v233 = vadd.f32 %v229, %v232
  %vm234 = vcmp.eq.s32.totalorder %v222, 3
  %v235 = vstv %s220
  %v236 = vsel %vm234, %v235, 0.0
  %v237 = vadd.f32 %v233, %v236
  %238 = vst [vmem:[%s2] sm:$0xff] %v237
  // Predicated region
  $region10: #{forward.20} parent=0 // pred_check
    _
  $region11: #{forward.20} parent=0 // pred_check_branch
    %240 = sbr.rel (0) target = $region13
  $region12: #{forward.20} parent=0 // pred_region
    _
  $region13: #{forward.20} parent=0 // pred_fallthru
    _
  // Predicated region
  $region14: #{forward.20} parent=0 // pred_check
    _
  $region15: #{forward.20} parent=0 // pred_check_branch
    %242 = sbr.rel (0) target = $region17
  $region16: #{forward.20} parent=0 // pred_region
    _
  $region17: #{forward.20} parent=0 // pred_fallthru
    _

// kernel: forward.21
$region0: #{forward.21}
  #allocation0 [shape = 'u32[]', space=smem, size = 0x4, offset = 0x4, fixed_abs, tag = 'smem constant byte address 0x4 - core index']
  #allocation1 [shape = 'u32[72,128]{1,0:T(1,128)}', space=vmem, size = 0x9000, scoped, tag = 'internal scratch']
  %s0 = inlined_call_operand.vmem [shape: f32[1,4,128], index: 0, kind: input, shape index: {}]
  %s1 = inlined_call_operand.vmem [shape: f32[1,4,128], index: 1, kind: input, shape index: {}]
  %s2 = inlined_call_operand.vmem [shape: f32[2,32], index: 2, kind: input, shape index: {}]
  %s3 = inlined_call_operand.vmem [shape: f32[32], index: 3, kind: input, shape index: {}]
  %s4 = inlined_call_operand.vmem [shape: f32[32,2], index: 4, kind: input, shape index: {}]
  %s5 = inlined_call_operand.vmem [shape: f32[2], index: 5, kind: input, shape index: {}]
  %s6 = inlined_call_operand.vmem [shape: f32[1,2,4,128], index: 6, kind: output, shape index: {}]
  %s7 = sld [smem:[#allocation0]]
  $region50: #{forward.21} parent=0
    _
  %s9 = ssub.s32 1, %s7
  %s10 = scalar_select 0, %s9, %s7
  $region1: #{forward.21} parent=0
    #allocation2 [shape = 'u8[1024]{0}', space=smem, size = 0x400, scoped, tag = 'input window, operand 2, single buffered']
    #allocation3 [shape = 's32[1]{0}', space=sflag, size = 0x4, scoped, tag = 'scoped memory for forward.21']
    #allocation4 [shape = 'u8[512]{0}', space=smem, size = 0x200, scoped, tag = 'input window, operand 3, single buffered']
    #allocation5 [shape = 's32[1]{0}', space=sflag, size = 0x4, scoped, tag = 'scoped memory for forward.21']
    #allocation6 [shape = 'u8[16384]{0}', space=smem, size = 0x4000, scoped, tag = 'input window, operand 4, single buffered']
    #allocation7 [shape = 'u8[512]{0}', space=smem, size = 0x200, scoped, tag = 'input window, operand 5, single buffered']
    #allocation8 [shape = 's32[1]{0}', space=sflag, size = 0x4, scoped, tag = 'scoped memory for forward.21']
    %11 = vsyncpa [#allocation3], 0
    %12 = vsyncpa [#allocation5], 0
    %13 = vsyncpa [#allocation8], 0
    // Predicated region
    $region2: #{forward.21} parent=1 // pred_check
      _
    $region3: #{forward.21} parent=1 // pred_check_branch
      %15 = sbr.rel (0) target = $region5
    $region4: #{forward.21} parent=1 // pred_region
      _
    $region5: #{forward.21} parent=1 // pred_fallthru
      _
    // Predicated region
    $region6: #{forward.21} parent=1 // pred_check
      _
    $region7: #{forward.21} parent=1 // pred_check_branch
      %17 = sbr.rel (0) target = $region9
    $region8: #{forward.21} parent=1 // pred_region
      _
    $region9: #{forward.21} parent=1 // pred_fallthru
      _
    // Predicated region
    $region10: #{forward.21} parent=1 // pred_check
      _
    $region11: #{forward.21} parent=1 // pred_check_branch
      %19 = sbr.rel (0) target = $region13
    $region12: #{forward.21} parent=1 // pred_region
      %21 = vsyncadd [#allocation3], 0
      %s23 = sshll.u32 %s2, 4
      %s24 = int_to_ptr.vmem [resolvable:$true] %s23
      %26 = dma.vmem_to_smem %s24, 32, [#allocation2], [#allocation3]
    $region13: #{forward.21} parent=1 // pred_fallthru
      _
    // Predicated region
    $region14: #{forward.21} parent=1 // pred_check
      _
    $region15: #{forward.21} parent=1 // pred_check_branch
      %28 = sbr.rel (0) target = $region17
    $region16: #{forward.21} parent=1 // pred_region
      %30 = vsyncadd [#allocation5], 0
      %s32 = sshll.u32 %s3, 4
      %s33 = int_to_ptr.vmem [resolvable:$true] %s32
      %35 = dma.vmem_to_smem %s33, 16, [#allocation4], [#allocation5]
    $region17: #{forward.21} parent=1 // pred_fallthru
      _
    // Predicated region
    $region18: #{forward.21} parent=1 // pred_check
      _
    $region19: #{forward.21} parent=1 // pred_check_branch
      %37 = sbr.rel (0) target = $region21
    $region20: #{forward.21} parent=1 // pred_region
      %39 = vsyncadd [#allocation5], 0
      %s40 = sshll.u32 %s4, 4
      %s41 = int_to_ptr.vmem [resolvable:$true] %s40
      %46 = dma.vmem_to_smem %s41, 512, [#allocation6], [#allocation5], 128, 128, 8
    $region21: #{forward.21} parent=1 // pred_fallthru
      _
    // Predicated region
    $region22: #{forward.21} parent=1 // pred_check
      _
    $region23: #{forward.21} parent=1 // pred_check_branch
      %48 = sbr.rel (0) target = $region25
    $region24: #{forward.21} parent=1 // pred_region
      %50 = vsyncadd [#allocation8], 0
      %s52 = sshll.u32 %s5, 4
      %s53 = int_to_ptr.vmem [resolvable:$true] %s52
      %55 = dma.vmem_to_smem %s53, 16, [#allocation7], [#allocation8]
    $region25: #{forward.21} parent=1 // pred_fallthru
      _
    // Predicated region
    $region26: #{forward.21} parent=1 // pred_check
      _
    $region27: #{forward.21} parent=1 // pred_check_branch
      %57 = sbr.rel (0) target = $region29
    $region28: #{forward.21} parent=1 // pred_region
      %59 = dma.done [#allocation3], 32
    $region29: #{forward.21} parent=1 // pred_fallthru
      _
    // Predicated region
    $region30: #{forward.21} parent=1 // pred_check
      _
    $region31: #{forward.21} parent=1 // pred_check_branch
      %61 = sbr.rel (0) target = $region33
    $region32: #{forward.21} parent=1 // pred_region
      %63 = dma.done [#allocation5], 16
    $region33: #{forward.21} parent=1 // pred_fallthru
      _
    // Predicated region
    $region34: #{forward.21} parent=1 // pred_check
      _
    $region35: #{forward.21} parent=1 // pred_check_branch
      %65 = sbr.rel (0) target = $region37
    $region36: #{forward.21} parent=1 // pred_region
      %67 = dma.done [#allocation5], 512
    $region37: #{forward.21} parent=1 // pred_fallthru
      _
    // Predicated region
    $region38: #{forward.21} parent=1 // pred_check
      _
    $region39: #{forward.21} parent=1 // pred_check_branch
      %69 = sbr.rel (0) target = $region41
    $region40: #{forward.21} parent=1 // pred_region
      %71 = dma.done [#allocation8], 16
    $region41: #{forward.21} parent=1 // pred_fallthru
      _
    %72 = sfence
    %v73 = vld [vmem:[%s0] sm:$0xf]
    %v74 = vld [vmem:[%s1] sm:$0xf]
    %s75 = sld [smem:[#allocation7]]
    %v76 = vstv %s75
    %v77 = vadd.f32 %v76, 0.0
    %s78 = sld [smem:[#allocation7 + $0x1]]
    %v79 = vstv %s78
    %v80 = vadd.f32 %v79, 0.0
    %s81 = sld [smem:[#allocation2]]
    %v82 = vstv %s81
    %v83 = vmul.f32 %v82, %v73
    %s84 = sld [smem:[#allocation2 + $0x80]]
    %v85 = vstv %s84
    %v86 = vmul.f32 %v85, %v74
    %v87 = vadd.f32 %v83, %v86
    %s88 = sld [smem:[#allocation4]]
    %v89 = vstv %s88
    %v90 = vadd.f32 %v87, %v89
    %v91 = vmax.f32 %v90, 0.0
    %s92 = sld [smem:[#allocation6]]
    %v93 = vstv %s92
    %v94 = vmul.f32 %v93, %v91
    %v95 = vadd.f32 %v77, %v94
    %s96 = sld [smem:[#allocation6 + $0x1]]
    %v97 = vstv %s96
    %v98 = vmul.f32 %v97, %v91
    %v99 = vadd.f32 %v80, %v98
    %s100 = sld [smem:[#allocation2 + $0x1]]
    %v101 = vstv %s100
    %v102 = vmul.f32 %v101, %v73
    %s103 = sld [smem:[#allocation2 + $0x81]]
    %v104 = vstv %s103
    %v105 = vmul.f32 %v104, %v74
    %v106 = vadd.f32 %v102, %v105
    %s107 = sld [smem:[#allocation4 + $0x1]]
    %v108 = vstv %s107
    %v109 = vadd.f32 %v106, %v108
    %v110 = vmax.f32 %v109, 0.0
    %s111 = sld [smem:[#allocation6 + $0x80]]
    %v112 = vstv %s111
    %v113 = vmul.f32 %v112, %v110
    %v114 = vadd.f32 %v95, %v113
    %s115 = sld [smem:[#allocation6 + $0x81]]
    %v116 = vstv %s115
    %v117 = vmul.f32 %v116, %v110
    %v118 = vadd.f32 %v99, %v117
    %s119 = sld [smem:[#allocation2 + $0x2]]
    %v120 = vstv %s119
    %v121 = vmul.f32 %v120, %v73
    %s122 = sld [smem:[#allocation2 + $0x82]]
    %v123 = vstv %s122
    %v124 = vmul.f32 %v123, %v74
    %v125 = vadd.f32 %v121, %v124
    %s126 = sld [smem:[#allocation4 + $0x2]]
    %v127 = vstv %s126
    %v128 = vadd.f32 %v125, %v127
    %v129 = vmax.f32 %v128, 0.0
    %s130 = sld [smem:[#allocation6 + $0x100]]
    %v131 = vstv %s130
    %v132 = vmul.f32 %v131, %v129
    %v133 = vadd.f32 %v114, %v132
    %s134 = sld [smem:[#allocation6 + $0x101]]
    %v135 = vstv %s134
    %v136 = vmul.f32 %v135, %v129
    %v137 = vadd.f32 %v118, %v136
    %s138 = sld [smem:[#allocation2 + $0x3]]
    %v139 = vstv %s138
    %v140 = vmul.f32 %v139, %v73
    %s141 = sld [smem:[#allocation2 + $0x83]]
    %v142 = vstv %s141
    %v143 = vmul.f32 %v142, %v74
    %v144 = vadd.f32 %v140, %v143
    %s145 = sld [smem:[#allocation4 + $0x3]]
    %v146 = vstv %s145
    %v147 = vadd.f32 %v144, %v146
    %v148 = vmax.f32 %v147, 0.0
    %s149 = sld [smem:[#allocation6 + $0x180]]
    %v150 = vstv %s149
    %v151 = vmul.f32 %v150, %v148
    %v152 = vadd.f32 %v133, %v151
    %s153 = sld [smem:[#allocation6 + $0x181]]
    %v154 = vstv %s153
    %v155 = vmul.f32 %v154, %v148
    %v156 = vadd.f32 %v137, %v155
    %s157 = sld [smem:[#allocation2 + $0x4]]
    %v158 = vstv %s157
    %v159 = vmul.f32 %v158, %v73
    %s160 = sld [smem:[#allocation2 + $0x84]]
    %v161 = vstv %s160
    %v162 = vmul.f32 %v161, %v74
    %v163 = vadd.f32 %v159, %v162
    %s164 = sld [smem:[#allocation4 + $0x4]]
    %v165 = vstv %s164
    %v166 = vadd.f32 %v163, %v165
    %v167 = vmax.f32 %v166, 0.0
    %s168 = sld [smem:[#allocation6 + $0x200]]
    %v169 = vstv %s168
    %v170 = vmul.f32 %v169, %v167
    %v171 = vadd.f32 %v152, %v170
    %s172 = sld [smem:[#allocation6 + $0x201]]
    %v173 = vstv %s172
    %v174 = vmul.f32 %v173, %v167
    %v175 = vadd.f32 %v156, %v174
    %s176 = sld [smem:[#allocation2 + $0x5]]
    %v177 = vstv %s176
    %v178 = vmul.f32 %v177, %v73
    %s179 = sld [smem:[#allocation2 + $0x85]]
    %v180 = vstv %s179
    %v181 = vmul.f32 %v180, %v74
    %v182 = vadd.f32 %v178, %v181
    %s183 = sld [smem:[#allocation4 + $0x5]]
    %v184 = vstv %s183
    %v185 = vadd.f32 %v182, %v184
    %v186 = vmax.f32 %v185, 0.0
    %s187 = sld [smem:[#allocation6 + $0x280]]
    %v188 = vstv %s187
    %v189 = vmul.f32 %v188, %v186
    %v190 = vadd.f32 %v171, %v189
    %s191 = sld [smem:[#allocation6 + $0x281]]
    %v192 = vstv %s191
    %v193 = vmul.f32 %v192, %v186
    %v194 = vadd.f32 %v175, %v193
    %s195 = sld [smem:[#allocation2 + $0x6]]
    %v196 = vstv %s195
    %v197 = vmul.f32 %v196, %v73
    %s198 = sld [smem:[#allocation2 + $0x86]]
    %v199 = vstv %s198
    %v200 = vmul.f32 %v199, %v74
    %v201 = vadd.f32 %v197, %v200
    %s202 = sld [smem:[#allocation4 + $0x6]]
    %v203 = vstv %s202
    %v204 = vadd.f32 %v201, %v203
    %v205 = vmax.f32 %v204, 0.0
    %s206 = sld [smem:[#allocation6 + $0x300]]
    %v207 = vstv %s206
    %v208 = vmul.f32 %v207, %v205
    %v209 = vadd.f32 %v190, %v208
    %s210 = sld [smem:[#allocation6 + $0x301]]
    %v211 = vstv %s210
    %v212 = vmul.f32 %v211, %v205
    %v213 = vadd.f32 %v194, %v212
    %s214 = sld [smem:[#allocation2 + $0x7]]
    %v215 = vstv %s214
    %v216 = vmul.f32 %v215, %v73
    %s217 = sld [smem:[#allocation2 + $0x87]]
    %v218 = vstv %s217
    %v219 = vmul.f32 %v218, %v74
    %v220 = vadd.f32 %v216, %v219
    %s221 = sld [smem:[#allocation4 + $0x7]]
    %v222 = vstv %s221
    %v223 = vadd.f32 %v220, %v222
    %v224 = vmax.f32 %v223, 0.0
    %s225 = sld [smem:[#allocation6 + $0x380]]
    %v226 = vstv %s225
    %v227 = vmul.f32 %v226, %v224
    %v228 = vadd.f32 %v209, %v227
    %s229 = sld [smem:[#allocation6 + $0x381]]
    %v230 = vstv %s229
    %v231 = vmul.f32 %v230, %v224
    %v232 = vadd.f32 %v213, %v231
    %s233 = sld [smem:[#allocation2 + $0x8]]
    %v234 = vstv %s233
    %v235 = vmul.f32 %v234, %v73
    %s236 = sld [smem:[#allocation2 + $0x88]]
    %v237 = vstv %s236
    %v238 = vmul.f32 %v237, %v74
    %v239 = vadd.f32 %v235, %v238
    %s240 = sld [smem:[#allocation4 + $0x8]]
    %v241 = vstv %s240
    %v242 = vadd.f32 %v239, %v241
    %v243 = vmax.f32 %v242, 0.0
    %s244 = sld [smem:[#allocation6 + $0x400]]
    %v245 = vstv %s244
    %v246 = vmul.f32 %v245, %v243
    %v247 = vadd.f32 %v228, %v246
    %s248 = sld [smem:[#allocation6 + $0x401]]
    %v249 = vstv %s248
    %v250 = vmul.f32 %v249, %v243
    %v251 = vadd.f32 %v232, %v250
    %s252 = sld [smem:[#allocation2 + $0x9]]
    %v253 = vstv %s252
    %v254 = vmul.f32 %v253, %v73
    %s255 = sld [smem:[#allocation2 + $0x89]]
    %v256 = vstv %s255
    %v257 = vmul.f32 %v256, %v74
    %v258 = vadd.f32 %v254, %v257
    %s259 = sld [smem:[#allocation4 + $0x9]]
    %v260 = vstv %s259
    %v261 = vadd.f32 %v258, %v260
    %v262 = vmax.f32 %v261, 0.0
    %s263 = sld [smem:[#allocation6 + $0x480]]
    %v264 = vstv %s263
    %v265 = vmul.f32 %v264, %v262
    %v266 = vadd.f32 %v247, %v265
    %s267 = sld [smem:[#allocation6 + $0x481]]
    %v268 = vstv %s267
    %v269 = vmul.f32 %v268, %v262
    %v270 = vadd.f32 %v251, %v269
    %s271 = sld [smem:[#allocation2 + $0xa]]
    %v272 = vstv %s271
    %v273 = vmul.f32 %v272, %v73
    %s274 = sld [smem:[#allocation2 + $0x8a]]
    %v275 = vstv %s274
    %v276 = vmul.f32 %v275, %v74
    %v277 = vadd.f32 %v273, %v276
    %s278 = sld [smem:[#allocation4 + $0xa]]
    %v279 = vstv %s278
    %v280 = vadd.f32 %v277, %v279
    %v281 = vmax.f32 %v280, 0.0
    %s282 = sld [smem:[#allocation6 + $0x500]]
    %v283 = vstv %s282
    %v284 = vmul.f32 %v283, %v281
    %v285 = vadd.f32 %v266, %v284
    %s286 = sld [smem:[#allocation6 + $0x501]]
    %v287 = vstv %s286
    %v288 = vmul.f32 %v287, %v281
    %v289 = vadd.f32 %v270, %v288
    %s290 = sld [smem:[#allocation2 + $0xb]]
    %v291 = vstv %s290
    %v292 = vmul.f32 %v291, %v73
    %s293 = sld [smem:[#allocation2 + $0x8b]]
    %v294 = vstv %s293
    %v295 = vmul.f32 %v294, %v74
    %v296 = vadd.f32 %v292, %v295
    %s297 = sld [smem:[#allocation4 + $0xb]]
    %v298 = vstv %s297
    %v299 = vadd.f32 %v296, %v298
    %v300 = vmax.f32 %v299, 0.0
    %s301 = sld [smem:[#allocation6 + $0x580]]
    %v302 = vstv %s301
    %v303 = vmul.f32 %v302, %v300
    %v304 = vadd.f32 %v285, %v303
    %s305 = sld [smem:[#allocation6 + $0x581]]
    %v306 = vstv %s305
    %v307 = vmul.f32 %v306, %v300
    %v308 = vadd.f32 %v289, %v307
    %s309 = sld [smem:[#allocation2 + $0xc]]
    %v310 = vstv %s309
    %v311 = vmul.f32 %v310, %v73
    %s312 = sld [smem:[#allocation2 + $0x8c]]
    %v313 = vstv %s312
    %v314 = vmul.f32 %v313, %v74
    %v315 = vadd.f32 %v311, %v314
    %s316 = sld [smem:[#allocation4 + $0xc]]
    %v317 = vstv %s316
    %v318 = vadd.f32 %v315, %v317
    %v319 = vmax.f32 %v318, 0.0
    %s320 = sld [smem:[#allocation6 + $0x600]]
    %v321 = vstv %s320
    %v322 = vmul.f32 %v321, %v319
    %v323 = vadd.f32 %v304, %v322
    %s324 = sld [smem:[#allocation6 + $0x601]]
    %v325 = vstv %s324
    %v326 = vmul.f32 %v325, %v319
    %v327 = vadd.f32 %v308, %v326
    %s328 = sld [smem:[#allocation2 + $0xd]]
    %v329 = vstv %s328
    %v330 = vmul.f32 %v329, %v73
    %s331 = sld [smem:[#allocation2 + $0x8d]]
    %v332 = vstv %s331
    %v333 = vmul.f32 %v332, %v74
    %v334 = vadd.f32 %v330, %v333
    %s335 = sld [smem:[#allocation4 + $0xd]]
    %v336 = vstv %s335
    %v337 = vadd.f32 %v334, %v336
    %v338 = vmax.f32 %v337, 0.0
    %s339 = sld [smem:[#allocation6 + $0x680]]
    %v340 = vstv %s339
    %v341 = vmul.f32 %v340, %v338
    %v342 = vadd.f32 %v323, %v341
    %s343 = sld [smem:[#allocation6 + $0x681]]
    %v344 = vstv %s343
    %v345 = vmul.f32 %v344, %v338
    %v346 = vadd.f32 %v327, %v345
    %s347 = sld [smem:[#allocation2 + $0xe]]
    %v348 = vstv %s347
    %v349 = vmul.f32 %v348, %v73
    %s350 = sld [smem:[#allocation2 + $0x8e]]
    %v351 = vstv %s350
    %v352 = vmul.f32 %v351, %v74
    %v353 = vadd.f32 %v349, %v352
    %s354 = sld [smem:[#allocation4 + $0xe]]
    %v355 = vstv %s354
    %v356 = vadd.f32 %v353, %v355
    %v357 = vmax.f32 %v356, 0.0
    %s358 = sld [smem:[#allocation6 + $0x700]]
    %v359 = vstv %s358
    %v360 = vmul.f32 %v359, %v357
    %v361 = vadd.f32 %v342, %v360
    %s362 = sld [smem:[#allocation6 + $0x701]]
    %v363 = vstv %s362
    %v364 = vmul.f32 %v363, %v357
    %v365 = vadd.f32 %v346, %v364
    %s366 = sld [smem:[#allocation2 + $0xf]]
    %v367 = vstv %s366
    %v368 = vmul.f32 %v367, %v73
    %s369 = sld [smem:[#allocation2 + $0x8f]]
    %v370 = vstv %s369
    %v371 = vmul.f32 %v370, %v74
    %v372 = vadd.f32 %v368, %v371
    %s373 = sld [smem:[#allocation4 + $0xf]]
    %v374 = vstv %s373
    %v375 = vadd.f32 %v372, %v374
    %v376 = vmax.f32 %v375, 0.0
    %s377 = sld [smem:[#allocation6 + $0x780]]
    %v378 = vstv %s377
    %v379 = vmul.f32 %v378, %v376
    %v380 = vadd.f32 %v361, %v379
    %s381 = sld [smem:[#allocation6 + $0x781]]
    %v382 = vstv %s381
    %v383 = vmul.f32 %v382, %v376
    %v384 = vadd.f32 %v365, %v383
    %s385 = sld [smem:[#allocation2 + $0x10]]
    %v386 = vstv %s385
    %v387 = vmul.f32 %v386, %v73
    %s388 = sld [smem:[#allocation2 + $0x90]]
    %v389 = vstv %s388
    %v390 = vmul.f32 %v389, %v74
    %v391 = vadd.f32 %v387, %v390
    %s392 = sld [smem:[#allocation4 + $0x10]]
    %v393 = vstv %s392
    %v394 = vadd.f32 %v391, %v393
    %v395 = vmax.f32 %v394, 0.0
    %s396 = sld [smem:[#allocation6 + $0x800]]
    %v397 = vstv %s396
    %v398 = vmul.f32 %v397, %v395
    %v399 = vadd.f32 %v380, %v398
    %s400 = sld [smem:[#allocation6 + $0x801]]
    %v401 = vstv %s400
    %v402 = vmul.f32 %v401, %v395
    %v403 = vadd.f32 %v384, %v402
    %s404 = sld [smem:[#allocation2 + $0x11]]
    %v405 = vstv %s404
    %v406 = vmul.f32 %v405, %v73
    %s407 = sld [smem:[#allocation2 + $0x91]]
    %v408 = vstv %s407
    %v409 = vmul.f32 %v408, %v74
    %v410 = vadd.f32 %v406, %v409
    %s411 = sld [smem:[#allocation4 + $0x11]]
    %v412 = vstv %s411
    %v413 = vadd.f32 %v410, %v412
    %v414 = vmax.f32 %v413, 0.0
    %s415 = sld [smem:[#allocation6 + $0x880]]
    %v416 = vstv %s415
    %v417 = vmul.f32 %v416, %v414
    %v418 = vadd.f32 %v399, %v417
    %s419 = sld [smem:[#allocation6 + $0x881]]
    %v420 = vstv %s419
    %v421 = vmul.f32 %v420, %v414
    %v422 = vadd.f32 %v403, %v421
    %s423 = sld [smem:[#allocation2 + $0x12]]
    %v424 = vstv %s423
    %v425 = vmul.f32 %v424, %v73
    %s426 = sld [smem:[#allocation2 + $0x92]]
    %v427 = vstv %s426
    %v428 = vmul.f32 %v427, %v74
    %v429 = vadd.f32 %v425, %v428
    %s430 = sld [smem:[#allocation4 + $0x12]]
    %v431 = vstv %s430
    %v432 = vadd.f32 %v429, %v431
    %v433 = vmax.f32 %v432, 0.0
    %s434 = sld [smem:[#allocation6 + $0x900]]
    %v435 = vstv %s434
    %v436 = vmul.f32 %v435, %v433
    %v437 = vadd.f32 %v418, %v436
    %s438 = sld [smem:[#allocation6 + $0x901]]
    %v439 = vstv %s438
    %v440 = vmul.f32 %v439, %v433
    %v441 = vadd.f32 %v422, %v440
    %s442 = sld [smem:[#allocation2 + $0x13]]
    %v443 = vstv %s442
    %v444 = vmul.f32 %v443, %v73
    %s445 = sld [smem:[#allocation2 + $0x93]]
    %v446 = vstv %s445
    %v447 = vmul.f32 %v446, %v74
    %v448 = vadd.f32 %v444, %v447
    %s449 = sld [smem:[#allocation4 + $0x13]]
    %v450 = vstv %s449
    %v451 = vadd.f32 %v448, %v450
    %v452 = vmax.f32 %v451, 0.0
    %s453 = sld [smem:[#allocation6 + $0x980]]
    %v454 = vstv %s453
    %v455 = vmul.f32 %v454, %v452
    %v456 = vadd.f32 %v437, %v455
    %s457 = sld [smem:[#allocation6 + $0x981]]
    %v458 = vstv %s457
    %v459 = vmul.f32 %v458, %v452
    %v460 = vadd.f32 %v441, %v459
    %s461 = sld [smem:[#allocation2 + $0x14]]
    %v462 = vstv %s461
    %v463 = vmul.f32 %v462, %v73
    %s464 = sld [smem:[#allocation2 + $0x94]]
    %v465 = vstv %s464
    %v466 = vmul.f32 %v465, %v74
    %v467 = vadd.f32 %v463, %v466
    %s468 = sld [smem:[#allocation4 + $0x14]]
    %v469 = vstv %s468
    %v470 = vadd.f32 %v467, %v469
    %v471 = vmax.f32 %v470, 0.0
    %s472 = sld [smem:[#allocation6 + $0xa00]]
    %v473 = vstv %s472
    %v474 = vmul.f32 %v473, %v471
    %v475 = vadd.f32 %v456, %v474
    %s476 = sld [smem:[#allocation6 + $0xa01]]
    %v477 = vstv %s476
    %v478 = vmul.f32 %v477, %v471
    %v479 = vadd.f32 %v460, %v478
    %s480 = sld [smem:[#allocation2 + $0x15]]
    %v481 = vstv %s480
    %v482 = vmul.f32 %v481, %v73
    %s483 = sld [smem:[#allocation2 + $0x95]]
    %v484 = vstv %s483
    %v485 = vmul.f32 %v484, %v74
    %v486 = vadd.f32 %v482, %v485
    %s487 = sld [smem:[#allocation4 + $0x15]]
    %v488 = vstv %s487
    %v489 = vadd.f32 %v486, %v488
    %v490 = vmax.f32 %v489, 0.0
    %s491 = sld [smem:[#allocation6 + $0xa80]]
    %v492 = vstv %s491
    %v493 = vmul.f32 %v492, %v490
    %v494 = vadd.f32 %v475, %v493
    %s495 = sld [smem:[#allocation6 + $0xa81]]
    %v496 = vstv %s495
    %v497 = vmul.f32 %v496, %v490
    %v498 = vadd.f32 %v479, %v497
    %s499 = sld [smem:[#allocation2 + $0x16]]
    %v500 = vstv %s499
    %v501 = vmul.f32 %v500, %v73
    %s502 = sld [smem:[#allocation2 + $0x96]]
    %v503 = vstv %s502
    %v504 = vmul.f32 %v503, %v74
    %v505 = vadd.f32 %v501, %v504
    %s506 = sld [smem:[#allocation4 + $0x16]]
    %v507 = vstv %s506
    %v508 = vadd.f32 %v505, %v507
    %v509 = vmax.f32 %v508, 0.0
    %s510 = sld [smem:[#allocation6 + $0xb00]]
    %v511 = vstv %s510
    %v512 = vmul.f32 %v511, %v509
    %v513 = vadd.f32 %v494, %v512
    %s514 = sld [smem:[#allocation6 + $0xb01]]
    %v515 = vstv %s514
    %v516 = vmul.f32 %v515, %v509
    %v517 = vadd.f32 %v498, %v516
    %s518 = sld [smem:[#allocation2 + $0x17]]
    %v519 = vstv %s518
    %v520 = vmul.f32 %v519, %v73
    %s521 = sld [smem:[#allocation2 + $0x97]]
    %v522 = vstv %s521
    %v523 = vmul.f32 %v522, %v74
    %v524 = vadd.f32 %v520, %v523
    %s525 = sld [smem:[#allocation4 + $0x17]]
    %v526 = vstv %s525
    %v527 = vadd.f32 %v524, %v526
    %v528 = vmax.f32 %v527, 0.0
    %s529 = sld [smem:[#allocation6 + $0xb80]]
    %v530 = vstv %s529
    %v531 = vmul.f32 %v530, %v528
    %v532 = vadd.f32 %v513, %v531
    %s533 = sld [smem:[#allocation6 + $0xb81]]
    %v534 = vstv %s533
    %v535 = vmul.f32 %v534, %v528
    %v536 = vadd.f32 %v517, %v535
    %s537 = sld [smem:[#allocation2 + $0x18]]
    %v538 = vstv %s537
    %v539 = vmul.f32 %v538, %v73
    %s540 = sld [smem:[#allocation2 + $0x98]]
    %v541 = vstv %s540
    %v542 = vmul.f32 %v541, %v74
    %v543 = vadd.f32 %v539, %v542
    %s544 = sld [smem:[#allocation4 + $0x18]]
    %v545 = vstv %s544
    %v546 = vadd.f32 %v543, %v545
    %v547 = vmax.f32 %v546, 0.0
    %s548 = sld [smem:[#allocation6 + $0xc00]]
    %v549 = vstv %s548
    %v550 = vmul.f32 %v549, %v547
    %v551 = vadd.f32 %v532, %v550
    %s552 = sld [smem:[#allocation6 + $0xc01]]
    %v553 = vstv %s552
    %v554 = vmul.f32 %v553, %v547
    %v555 = vadd.f32 %v536, %v554
    %s556 = sld [smem:[#allocation2 + $0x19]]
    %v557 = vstv %s556
    %v558 = vmul.f32 %v557, %v73
    %s559 = sld [smem:[#allocation2 + $0x99]]
    %v560 = vstv %s559
    %v561 = vmul.f32 %v560, %v74
    %v562 = vadd.f32 %v558, %v561
    %s563 = sld [smem:[#allocation4 + $0x19]]
    %v564 = vstv %s563
    %v565 = vadd.f32 %v562, %v564
    %v566 = vmax.f32 %v565, 0.0
    %s567 = sld [smem:[#allocation6 + $0xc80]]
    %v568 = vstv %s567
    %v569 = vmul.f32 %v568, %v566
    %v570 = vadd.f32 %v551, %v569
    %s571 = sld [smem:[#allocation6 + $0xc81]]
    %v572 = vstv %s571
    %v573 = vmul.f32 %v572, %v566
    %v574 = vadd.f32 %v555, %v573
    %s575 = sld [smem:[#allocation2 + $0x1a]]
    %v576 = vstv %s575
    %v577 = vmul.f32 %v576, %v73
    %s578 = sld [smem:[#allocation2 + $0x9a]]
    %v579 = vstv %s578
    %v580 = vmul.f32 %v579, %v74
    %v581 = vadd.f32 %v577, %v580
    %s582 = sld [smem:[#allocation4 + $0x1a]]
    %v583 = vstv %s582
    %v584 = vadd.f32 %v581, %v583
    %v585 = vmax.f32 %v584, 0.0
    %s586 = sld [smem:[#allocation6 + $0xd00]]
    %v587 = vstv %s586
    %v588 = vmul.f32 %v587, %v585
    %v589 = vadd.f32 %v570, %v588
    %s590 = sld [smem:[#allocation6 + $0xd01]]
    %v591 = vstv %s590
    %v592 = vmul.f32 %v591, %v585
    %v593 = vadd.f32 %v574, %v592
    %s594 = sld [smem:[#allocation2 + $0x1b]]
    %v595 = vstv %s594
    %v596 = vmul.f32 %v595, %v73
    %s597 = sld [smem:[#allocation2 + $0x9b]]
    %v598 = vstv %s597
    %v599 = vmul.f32 %v598, %v74
    %v600 = vadd.f32 %v596, %v599
    %s601 = sld [smem:[#allocation4 + $0x1b]]
    %v602 = vstv %s601
    %v603 = vadd.f32 %v600, %v602
    %v604 = vmax.f32 %v603, 0.0
    %s605 = sld [smem:[#allocation6 + $0xd80]]
    %v606 = vstv %s605
    %v607 = vmul.f32 %v606, %v604
    %v608 = vadd.f32 %v589, %v607
    %s609 = sld [smem:[#allocation6 + $0xd81]]
    %v610 = vstv %s609
    %v611 = vmul.f32 %v610, %v604
    %v612 = vadd.f32 %v593, %v611
    %s613 = sld [smem:[#allocation2 + $0x1c]]
    %v614 = vstv %s613
    %v615 = vmul.f32 %v614, %v73
    %s616 = sld [smem:[#allocation2 + $0x9c]]
    %v617 = vstv %s616
    %v618 = vmul.f32 %v617, %v74
    %v619 = vadd.f32 %v615, %v618
    %s620 = sld [smem:[#allocation4 + $0x1c]]
    %v621 = vstv %s620
    %v622 = vadd.f32 %v619, %v621
    %v623 = vmax.f32 %v622, 0.0
    %s624 = sld [smem:[#allocation6 + $0xe00]]
    %v625 = vstv %s624
    %v626 = vmul.f32 %v625, %v623
    %v627 = vadd.f32 %v608, %v626
    %s628 = sld [smem:[#allocation6 + $0xe01]]
    %v629 = vstv %s628
    %v630 = vmul.f32 %v629, %v623
    %v631 = vadd.f32 %v612, %v630
    %s632 = sld [smem:[#allocation2 + $0x1d]]
    %v633 = vstv %s632
    %v634 = vmul.f32 %v633, %v73
    %s635 = sld [smem:[#allocation2 + $0x9d]]
    %v636 = vstv %s635
    %v637 = vmul.f32 %v636, %v74
    %v638 = vadd.f32 %v634, %v637
    %s639 = sld [smem:[#allocation4 + $0x1d]]
    %v640 = vstv %s639
    %v641 = vadd.f32 %v638, %v640
    %v642 = vmax.f32 %v641, 0.0
    %s643 = sld [smem:[#allocation6 + $0xe80]]
    %v644 = vstv %s643
    %v645 = vmul.f32 %v644, %v642
    %v646 = vadd.f32 %v627, %v645
    %s647 = sld [smem:[#allocation6 + $0xe81]]
    %v648 = vstv %s647
    %v649 = vmul.f32 %v648, %v642
    %v650 = vadd.f32 %v631, %v649
    %s651 = sld [smem:[#allocation2 + $0x1e]]
    %v652 = vstv %s651
    %v653 = vmul.f32 %v652, %v73
    %s654 = sld [smem:[#allocation2 + $0x9e]]
    %v655 = vstv %s654
    %v656 = vmul.f32 %v655, %v74
    %v657 = vadd.f32 %v653, %v656
    %s658 = sld [smem:[#allocation4 + $0x1e]]
    %v659 = vstv %s658
    %v660 = vadd.f32 %v657, %v659
    %v661 = vmax.f32 %v660, 0.0
    %s662 = sld [smem:[#allocation6 + $0xf00]]
    %v663 = vstv %s662
    %v664 = vmul.f32 %v663, %v661
    %v665 = vadd.f32 %v646, %v664
    %s666 = sld [smem:[#allocation6 + $0xf01]]
    %v667 = vstv %s666
    %v668 = vmul.f32 %v667, %v661
    %v669 = vadd.f32 %v650, %v668
    %s670 = sld [smem:[#allocation2 + $0x1f]]
    %v671 = vstv %s670
    %v672 = vmul.f32 %v671, %v73
    %s673 = sld [smem:[#allocation2 + $0x9f]]
    %v674 = vstv %s673
    %v675 = vmul.f32 %v674, %v74
    %v676 = vadd.f32 %v672, %v675
    %s677 = sld [smem:[#allocation4 + $0x1f]]
    %v678 = vstv %s677
    %v679 = vadd.f32 %v676, %v678
    %v680 = vmax.f32 %v679, 0.0
    %s681 = sld [smem:[#allocation6 + $0xf80]]
    %v682 = vstv %s681
    %v683 = vmul.f32 %v682, %v680
    %v684 = vadd.f32 %v665, %v683
    %s685 = sld [smem:[#allocation6 + $0xf81]]
    %v686 = vstv %s685
    %v687 = vmul.f32 %v686, %v680
    %v688 = vadd.f32 %v669, %v687
    %689 = vst [vmem:[%s6] sm:$0xf] %v684
    %s690 = scalar_lea.vmem %s6, 4
    %691 = vst [vmem:[%s690] sm:$0xf] %v688
    // Predicated region
    $region42: #{forward.21} parent=1 // pred_check
      _
    $region43: #{forward.21} parent=1 // pred_check_branch
      %693 = sbr.rel (0) target = $region45
    $region44: #{forward.21} parent=1 // pred_region
      _
    $region45: #{forward.21} parent=1 // pred_fallthru
      _
    // Predicated region
    $region46: #{forward.21} parent=1 // pred_check
      _
    $region47: #{forward.21} parent=1 // pred_check_branch
      %695 = sbr.rel (0) target = $region49
    $region48: #{forward.21} parent=1 // pred_region
      _
    $region49: #{forward.21} parent=1 // pred_fallthru
      _
    %696 = vsyncpa [#allocation3], 1
    %697 = vsyncpa [#allocation5], 1
    %698 = vsyncpa [#allocation8], 1

</llo_original>
